<compile_context>
chip_gen: v6e
topology: v6e:2x2x1
jax: 0.10.0
libtpu: 0.0.40
codegen_flags: <defaults>
</compile_context>

<pallas_src>
import functools

import numpy as np
import jax
import jax.numpy as jnp
from jax.experimental import pallas as pl
from jax.experimental.pallas import tpu as pltpu


# ----------------------------- helpers ----------------------------------------

def _lane_roll(x, shift):
    """Circular roll along the last (lane) axis."""
    n = x.shape[-1]
    shift = shift % n
    if n % 128 == 0:
        # lane-dense width: single XLU vrot
        return pltpu.roll(x, shift, axis=x.ndim - 1)
    # sub-128 widths (toy test shapes): slice+concat lowering is the robust path
    return jnp.roll(x, shift, axis=-1)


# ----------------------------- Pallas kernel ---------------------------------

def mla_kernel(x_ref,
               wx_ref, wkv_ref, wq_ref,
               cosq_ref, sineq_ref, sinoq_ref,
               cosk_ref, sinek_ref, sinok_ref,
               qo_ref, ki_ref, vc_ref,
               *, dc, dhR, d):
    f32 = jnp.float32
    bf16 = jnp.bfloat16

    x = x_ref[0]                                                       # (TL, D) bf16

    # --- fused x down-projection: [c_kv | k_r_pre | c_q] ---
    xw = jnp.dot(x, wx_ref[...], preferred_element_type=f32)          # (TL, dc+dhR+dc')
    c_kv = xw[:, :dc].astype(bf16)                                    # (TL, dc)
    k_r_pre = xw[:, dc:dc + dhR]                                      # (TL, dhR) f32
    c_q = xw[:, dc + dhR:].astype(bf16)                               # (TL, dc')

    # --- fused up-projections ---
    kv_up = jnp.dot(c_kv, wkv_ref[...], preferred_element_type=f32)   # (TL, 2d) = [k_c | v_c]
    q_up = jnp.dot(c_q, wq_ref[...], preferred_element_type=f32)      # (TL, d+nh*dhR) = [q_c | q_r_pre]

    # --- interleaved-pair RoPE via two static lane rolls ---
    #   out[2i]   = x[2i]*cos_i - x[2i+1]*sin_i
    #   out[2i+1] = x[2i+1]*cos_i + x[2i]*sin_i
    # sin_e is -sin at even lanes / 0 at odd; sin_o is +sin at odd lanes / 0 at
    # even, so roll wrap-around (incl. across the q_c|q_r boundary and head
    # boundaries) is multiplied by zero. For the fused q slab the first d lanes
    # carry (cos=1, sin=0) -> q_c passes through untouched.
    def rope(pre, cos, sin_e, sin_o):
        return (pre * cos
                + _lane_roll(pre, -1) * sin_e
                + _lane_roll(pre, 1) * sin_o)

    q_o = rope(q_up, cosq_ref[...], sineq_ref[...], sinoq_ref[...])   # (TL, d+nh*dhR)
    k_r = rope(k_r_pre, cosk_ref[...], sinek_ref[...], sinok_ref[...])  # (TL, dhR)

    # --- fused output stores (no wrapper-side concatenate) ---
    qo_ref[0] = q_o.astype(qo_ref.dtype)
    ki_ref[0, :, :d] = kv_up[:, :d].astype(ki_ref.dtype)              # k_c
    ki_ref[0, :, d:] = k_r.astype(ki_ref.dtype)                       # k_r
    vc_ref[0] = kv_up[:, d:].astype(vc_ref.dtype)                     # v_c


# ----------------------------- Wrapper ----------------------------------------

def _pick_tl(L, tl):
    if tl is None:
        tl = L
        # ~512 rows is the measured sweet spot; keep halving while it divides L.
        while tl > 512 and tl % 2 == 0:
            tl //= 2
    assert L % tl == 0 and tl % 8 == 0, "sequence tile must divide L and be a multiple of 8"
    return tl


def _vmem_limit_bytes(tl, D, d, dc, dcp, dhR, n_qr):
    def nbytes(*shape, item=2):
        return int(np.prod(shape)) * item

    per_step = (
        nbytes(tl, D)                                                    # x tile (bf16)
        + nbytes(D, dc + dhR + dcp) + nbytes(dc, 2 * d) + nbytes(dcp, d + n_qr)  # weights (bf16)
        + 3 * nbytes(tl, d + n_qr, item=4) + 3 * nbytes(tl, dhR, item=4)         # RoPE tables (f32)
        + nbytes(tl, d + n_qr) + nbytes(tl, d + dhR) + nbytes(tl, d)             # outputs (bf16)
    )
    need = 2 * per_step + (8 << 20)          # double-buffering + relayout/compute headroom
    try:
        cap = pltpu.get_tpu_info().vmem_capacity_bytes
    except Exception:
        cap = 64 << 20                       # conservative: v7x per-TensorCore VMEM
    return int(max(32 << 20, min(need, int(cap * 0.9))))


def mla_forward(x, params, nh, *, tl=None, out_dtype=jnp.bfloat16, rope_base=10000.0):
    B, L, D = x.shape
    W_DKV, W_UK, W_UV, W_KR, W_DQ, W_UQ, W_QR = params

    d = W_UK.shape[1]
    dc = W_DKV.shape[1]
    dcp = W_DQ.shape[1]
    dhR = W_KR.shape[1]
    n_qr = nh * dhR

    tl = _pick_tl(L, tl)
    n_l = L // tl

    # bf16 matmul inputs at the call boundary; fused (shared-LHS) weights.
    xb = x.astype(jnp.bfloat16)
    w_x = jnp.concatenate([W_DKV, W_KR, W_DQ], axis=1).astype(jnp.bfloat16)   # (D, dc+dhR+dc')
    w_kv = jnp.concatenate([W_UK, W_UV], axis=1).astype(jnp.bfloat16)         # (dc, 2d)
    w_q = jnp.concatenate([W_UQ, W_QR], axis=1).astype(jnp.bfloat16)          # (dc', d+nh*dhR)

    # Host-side pre-replicated RoPE tables (f32): q tables cover the full fused
    # [q_c | q_r] width (identity on the first d lanes); k tables are (L, dhR).
    (cos_q, sin_e_q, sin_o_q), (cos_k, sin_e_k, sin_o_k) = make_kernel_rope_tables(
        L, d, nh, dhR, base=rope_base)

    wspec = lambda shape: pl.BlockSpec(shape, lambda b, l: (0, 0))   # weights: resident, DMA'd once
    qtab = pl.BlockSpec((tl, d + n_qr), lambda b, l: (l, 0))
    ktab = pl.BlockSpec((tl, dhR), lambda b, l: (l, 0))

    in_specs = [
        pl.BlockSpec((1, tl, D), lambda b, l: (b, l, 0)),   # x tile
        wspec((D, dc + dhR + dcp)),                         # [W_DKV | W_KR | W_DQ]
        wspec((dc, 2 * d)),                                 # [W_UK | W_UV]
        wspec((dcp, d + n_qr)),                             # [W_UQ | W_QR]
        qtab, qtab, qtab,                                   # cos_q, sin_e_q, sin_o_q
        ktab, ktab, ktab,                                   # cos_k, sin_e_k, sin_o_k
    ]
    out_block = lambda n: pl.BlockSpec((1, tl, n), lambda b, l: (b, l, 0))
    out_specs = [out_block(d + n_qr), out_block(d + dhR), out_block(d)]
    out_shape = tuple(jax.ShapeDtypeStruct((B, L, n), out_dtype)
                      for n in (d + n_qr, d + dhR, d))

    out_item = np.dtype(out_dtype).itemsize
    flops = 2 * B * L * (D * (dc + dhR + dcp) + dc * 2 * d + dcp * (d + n_qr))
    bytes_accessed = (
        B * L * D * 2
        + 2 * (D * (dc + dhR + dcp) + dc * 2 * d + dcp * (d + n_qr))
        + 4 * L * (3 * (d + n_qr) + 3 * dhR)
        + out_item * B * L * ((d + n_qr) + (d + dhR) + d))
    cost = pl.CostEstimate(flops=int(flops), transcendentals=0,
                           bytes_accessed=int(bytes_accessed))

    kernel = functools.partial(mla_kernel, dc=dc, dhR=dhR, d=d)

    q_o, k_i, v_c = pl.pallas_call(
        kernel,
        grid=(B, n_l),
        in_specs=in_specs,
        out_specs=out_specs,
        out_shape=out_shape,
        compiler_params=pltpu.CompilerParams(
            dimension_semantics=("parallel", "parallel"),
            vmem_limit_bytes=_vmem_limit_bytes(tl, D, d, dc, dcp, dhR, n_qr)),
        cost_estimate=cost,
    )(xb, w_x, w_kv, w_q, cos_q, sin_e_q, sin_o_q, cos_k, sin_e_k, sin_o_k)

    return q_o, k_i, v_c


# ----------------------------- Param / RoPE setup ------------------------------

def make_params(key, d, nh):
    dh = d // nh
    dc = d // 3
    dcp = d // 3
    dhR = dh // 2
    ks = jax.random.split(key, 7)

    def init(k, shape):
        return (jax.random.normal(k, shape) / np.sqrt(shape[0])).astype(jnp.float32)

    params = (
        init(ks[0], (d, dc)),           # W_DKV
        init(ks[1], (dc, d)),           # W_UK
        init(ks[2], (dc, d)),           # W_UV
        init(ks[3], (d, dhR)),          # W_KR
        init(ks[4], (d, dcp)),          # W_DQ
        init(ks[5], (dcp, d)),          # W_UQ  (interpreted dc' -> d, see header)
        init(ks[6], (dcp, nh * dhR)),   # W_QR
    )
    return params, dc, dcp, dhR


def make_rope_tables(L, dhR, base=10000.0):
    assert dhR % 2 == 0
    inv_freq = 1.0 / (base ** (np.arange(0, dhR, 2, dtype=np.float64) / dhR))   # (dhR/2,)
    ang = np.arange(L, dtype=np.float64)[:, None] * inv_freq[None, :]           # (L, dhR/2)
    cos_h = np.cos(ang).astype(np.float32)
    sin_h = np.sin(ang).astype(np.float32)
    # interleaved expansion: positions 2i and 2i+1 share angle i
    cos_full = np.repeat(cos_h, 2, axis=-1)                                     # (L, dhR)
    sin_full = np.repeat(sin_h, 2, axis=-1)
    even = (np.arange(dhR) % 2 == 0)[None, :]
    sin_e = np.where(even, -sin_full, 0.0).astype(np.float32)   # feeds roll(x, -1)
    sin_o = np.where(~even, sin_full, 0.0).astype(np.float32)   # feeds roll(x, +1)
    return cos_h, sin_h, cos_full, sin_e, sin_o


def make_kernel_rope_tables(L, d, nh, dhR, base=10000.0):
    """Kernel-side tables: per-head replication done host-side (not per grid step)."""
    _, _, cos_full, sin_e, sin_o = make_rope_tables(L, dhR, base)
    tile = lambda t: np.tile(t, (1, nh))                         # (L, nh*dhR)
    ones_d = np.ones((L, d), np.float32)
    zeros_d = np.zeros((L, d), np.float32)
    # q tables span the fused [q_c | q_r] width; identity on the q_c lanes.
    cos_q = np.concatenate([ones_d, tile(cos_full)], axis=-1)
    sin_e_q = np.concatenate([zeros_d, tile(sin_e)], axis=-1)
    sin_o_q = np.concatenate([zeros_d, tile(sin_o)], axis=-1)
    q_tabs = tuple(jnp.asarray(t) for t in (cos_q, sin_e_q, sin_o_q))
    k_tabs = tuple(jnp.asarray(t) for t in (cos_full, sin_e, sin_o))
    return q_tabs, k_tabs


# ----------------------------- Pure-JAX reference ------------------------------

def _rope_ref(x, cos_h, sin_h):
    # x: (B, L, n*dhR); interleaved-pair RoPE applied per dhR-sized head chunk.
    B, L, N = x.shape
    half = cos_h.shape[-1]
    dhR = 2 * half
    n = N // dhR
    xr = x.reshape(B, L, n, half, 2)
    x0, x1 = xr[..., 0], xr[..., 1]
    c = cos_h[None, :, None, :]
    s = sin_h[None, :, None, :]
    o0 = x0 * c - x1 * s
    o1 = x1 * c + x0 * s
    return jnp.stack([o0, o1], axis=-1).reshape(B, L, N)


def mla_reference(x, params, cos_h, sin_h):
    # Mirrors the kernel's bf16 quantization points so tolerances stay tight.
    bf = lambda a: a.astype(jnp.bfloat16).astype(jnp.float32)
    W_DKV, W_UK, W_UV, W_KR, W_DQ, W_UQ, W_QR = (bf(w) for w in params)
    xb = bf(x)
    c_kv = xb @ W_DKV
    c_kvb = bf(c_kv)
    k_c = c_kvb @ W_UK
    v_c = c_kvb @ W_UV
    k_r = _rope_ref(xb @ W_KR, cos_h, sin_h)
    c_q = xb @ W_DQ
    c_qb = bf(c_q)
    q_c = c_qb @ W_UQ
    q_r = _rope_ref(c_qb @ W_QR, cos_h, sin_h)
    q_o = jnp.concatenate([q_c, q_r], axis=-1)
    k_i = jnp.concatenate([k_c, k_r], axis=-1)
    return q_o, k_i, v_c


# ----------------------------- Main --------------------------------------------

if __name__ == "__main__":
    B, L = 2, 256
    d, nh = 48, 4          # dh = 12, dhR = 6, dc = dc' = 16

    key = jax.random.PRNGKey(0)
    kx, kp = jax.random.split(key)
    x = jax.random.normal(kx, (B, L, d), dtype=jnp.float32)

    params, dc, dcp, dhR = make_params(kp, d, nh)

    # Kernel (tl auto-picked: full L=256 here -> grid (B, 1), bf16 outputs).
    q_o, k_i, v_c = mla_forward(x, params, nh)
    jax.block_until_ready((q_o, k_i, v_c))

    # Reference check (kernel outputs are bf16; compare in f32 with bf16-aware tol).
    cos_h, sin_h, *_ = make_rope_tables(L, dhR)
    q_ref, k_ref, v_ref = mla_reference(x, params, jnp.asarray(cos_h), jnp.asarray(sin_h))
    to_np = lambda a: np.asarray(a.astype(jnp.float32))
    np.testing.assert_allclose(to_np(q_o), np.asarray(q_ref), rtol=2e-2, atol=2e-2)
    np.testing.assert_allclose(to_np(k_i), np.asarray(k_ref), rtol=2e-2, atol=2e-2)
    np.testing.assert_allclose(to_np(v_c), np.asarray(v_ref), rtol=2e-2, atol=2e-2)

    print("KERNEL_OK")
</pallas_src>

<mosaic_0001>
module attributes {stable_mosaic.version = 11 : i64} {
  func.func @mla_kernel(%arg0: i32, %arg1: i32, %arg2: memref<1x256x48xbf16, #tpu.memory_space<vmem>>, %arg3: memref<48x38xbf16, #tpu.memory_space<vmem>>, %arg4: memref<16x96xbf16, #tpu.memory_space<vmem>>, %arg5: memref<16x72xbf16, #tpu.memory_space<vmem>>, %arg6: memref<256x72xf32, #tpu.memory_space<vmem>>, %arg7: memref<256x72xf32, #tpu.memory_space<vmem>>, %arg8: memref<256x72xf32, #tpu.memory_space<vmem>>, %arg9: memref<256x6xf32, #tpu.memory_space<vmem>>, %arg10: memref<256x6xf32, #tpu.memory_space<vmem>>, %arg11: memref<256x6xf32, #tpu.memory_space<vmem>>, %arg12: memref<1x256x72xbf16, #tpu.memory_space<vmem>>, %arg13: memref<1x256x54xbf16, #tpu.memory_space<vmem>>, %arg14: memref<1x256x48xbf16, #tpu.memory_space<vmem>>) attributes {dimension_semantics = [#tpu.dimension_semantics<parallel>, #tpu.dimension_semantics<parallel>], iteration_bounds = array<i64: 2, 1>, scalar_prefetch = 0 : i64, scratch_operands = 0 : i64, tpu.core_type = #tpu.core_type<tc>, window_params = [{transform_indices = @transform_0, window_bounds = array<i64: 1, 256, 48>}, {pipeline_mode = #tpu.pipeline_mode<synchronous>, transform_indices = @transform_1, window_bounds = array<i64: 48, 38>}, {pipeline_mode = #tpu.pipeline_mode<synchronous>, transform_indices = @transform_2, window_bounds = array<i64: 16, 96>}, {pipeline_mode = #tpu.pipeline_mode<synchronous>, transform_indices = @transform_3, window_bounds = array<i64: 16, 72>}, {transform_indices = @transform_4, window_bounds = array<i64: 256, 72>}, {transform_indices = @transform_5, window_bounds = array<i64: 256, 72>}, {transform_indices = @transform_6, window_bounds = array<i64: 256, 72>}, {transform_indices = @transform_7, window_bounds = array<i64: 256, 6>}, {transform_indices = @transform_8, window_bounds = array<i64: 256, 6>}, {transform_indices = @transform_9, window_bounds = array<i64: 256, 6>}, {transform_indices = @transform_10, window_bounds = array<i64: 1, 256, 72>}, {transform_indices = @transform_11, window_bounds = array<i64: 1, 256, 54>}, {transform_indices = @transform_12, window_bounds = array<i64: 1, 256, 48>}]} {
    %c0 = arith.constant 0 : index
    %c0_0 = arith.constant 0 : index
    %c0_1 = arith.constant 0 : index
    %0 = vector.load %arg2[%c0, %c0_0, %c0_1] : memref<1x256x48xbf16, #tpu.memory_space<vmem>>, vector<1x256x48xbf16>
    %1 = vector.shape_cast %0 : vector<1x256x48xbf16> to vector<256x48xbf16>
    %c0_2 = arith.constant 0 : index
    %c0_3 = arith.constant 0 : index
    %2 = vector.load %arg3[%c0_2, %c0_3] : memref<48x38xbf16, #tpu.memory_space<vmem>>, vector<48x38xbf16>
    %cst = arith.constant dense<0.000000e+00> : vector<256x38xf32>
    %3 = tpu.matmul %1, %2, %cst {dimension_numbers = #tpu.dot_dimension_numbers<[1], [0], [0], [1], [0, 0, 1, 1], [], []>} : vector<256x48xbf16>, vector<48x38xbf16>, vector<256x38xf32> -> vector<256x38xf32>
    %4 = vector.extract_strided_slice %3 {offsets = [0, 0], sizes = [256, 16], strides = [1, 1]} : vector<256x38xf32> to vector<256x16xf32>
    %5 = arith.truncf %4 : vector<256x16xf32> to vector<256x16xbf16>
    %6 = vector.extract_strided_slice %3 {offsets = [0, 16], sizes = [256, 6], strides = [1, 1]} : vector<256x38xf32> to vector<256x6xf32>
    %7 = vector.extract_strided_slice %3 {offsets = [0, 22], sizes = [256, 16], strides = [1, 1]} : vector<256x38xf32> to vector<256x16xf32>
    %8 = arith.truncf %7 : vector<256x16xf32> to vector<256x16xbf16>
    %c0_4 = arith.constant 0 : index
    %c0_5 = arith.constant 0 : index
    %9 = vector.load %arg4[%c0_4, %c0_5] : memref<16x96xbf16, #tpu.memory_space<vmem>>, vector<16x96xbf16>
    %cst_6 = arith.constant dense<0.000000e+00> : vector<256x96xf32>
    %10 = tpu.matmul %5, %9, %cst_6 {dimension_numbers = #tpu.dot_dimension_numbers<[1], [0], [0], [1], [0, 0, 1, 1], [], []>} : vector<256x16xbf16>, vector<16x96xbf16>, vector<256x96xf32> -> vector<256x96xf32>
    %c0_7 = arith.constant 0 : index
    %c0_8 = arith.constant 0 : index
    %11 = vector.load %arg5[%c0_7, %c0_8] : memref<16x72xbf16, #tpu.memory_space<vmem>>, vector<16x72xbf16>
    %cst_9 = arith.constant dense<0.000000e+00> : vector<256x72xf32>
    %12 = tpu.matmul %8, %11, %cst_9 {dimension_numbers = #tpu.dot_dimension_numbers<[1], [0], [0], [1], [0, 0, 1, 1], [], []>} : vector<256x16xbf16>, vector<16x72xbf16>, vector<256x72xf32> -> vector<256x72xf32>
    %c0_10 = arith.constant 0 : index
    %c0_11 = arith.constant 0 : index
    %13 = vector.load %arg6[%c0_10, %c0_11] : memref<256x72xf32, #tpu.memory_space<vmem>>, vector<256x72xf32>
    %c0_12 = arith.constant 0 : index
    %c0_13 = arith.constant 0 : index
    %14 = vector.load %arg7[%c0_12, %c0_13] : memref<256x72xf32, #tpu.memory_space<vmem>>, vector<256x72xf32>
    %c0_14 = arith.constant 0 : index
    %c0_15 = arith.constant 0 : index
    %15 = vector.load %arg8[%c0_14, %c0_15] : memref<256x72xf32, #tpu.memory_space<vmem>>, vector<256x72xf32>
    %16 = arith.mulf %12, %13 : vector<256x72xf32>
    %17 = vector.extract_strided_slice %12 {offsets = [0, 1], sizes = [256, 71], strides = [1, 1]} : vector<256x72xf32> to vector<256x71xf32>
    %18 = vector.extract_strided_slice %12 {offsets = [0, 0], sizes = [256, 1], strides = [1, 1]} : vector<256x72xf32> to vector<256x1xf32>
    %19 = tpu.concatenate %17, %18 in 1 : vector<256x71xf32>, vector<256x1xf32> -> vector<256x72xf32>
    %20 = arith.mulf %19, %14 : vector<256x72xf32>
    %21 = arith.addf %16, %20 : vector<256x72xf32>
    %22 = vector.extract_strided_slice %12 {offsets = [0, 71], sizes = [256, 1], strides = [1, 1]} : vector<256x72xf32> to vector<256x1xf32>
    %23 = vector.extract_strided_slice %12 {offsets = [0, 0], sizes = [256, 71], strides = [1, 1]} : vector<256x72xf32> to vector<256x71xf32>
    %24 = tpu.concatenate %22, %23 in 1 : vector<256x1xf32>, vector<256x71xf32> -> vector<256x72xf32>
    %25 = arith.mulf %24, %15 : vector<256x72xf32>
    %26 = arith.addf %21, %25 : vector<256x72xf32>
    %c0_16 = arith.constant 0 : index
    %c0_17 = arith.constant 0 : index
    %27 = vector.load %arg9[%c0_16, %c0_17] : memref<256x6xf32, #tpu.memory_space<vmem>>, vector<256x6xf32>
    %c0_18 = arith.constant 0 : index
    %c0_19 = arith.constant 0 : index
    %28 = vector.load %arg10[%c0_18, %c0_19] : memref<256x6xf32, #tpu.memory_space<vmem>>, vector<256x6xf32>
    %c0_20 = arith.constant 0 : index
    %c0_21 = arith.constant 0 : index
    %29 = vector.load %arg11[%c0_20, %c0_21] : memref<256x6xf32, #tpu.memory_space<vmem>>, vector<256x6xf32>
    %30 = arith.mulf %6, %27 : vector<256x6xf32>
    %31 = vector.extract_strided_slice %6 {offsets = [0, 1], sizes = [256, 5], strides = [1, 1]} : vector<256x6xf32> to vector<256x5xf32>
    %32 = vector.extract_strided_slice %6 {offsets = [0, 0], sizes = [256, 1], strides = [1, 1]} : vector<256x6xf32> to vector<256x1xf32>
    %33 = tpu.concatenate %31, %32 in 1 : vector<256x5xf32>, vector<256x1xf32> -> vector<256x6xf32>
    %34 = arith.mulf %33, %28 : vector<256x6xf32>
    %35 = arith.addf %30, %34 : vector<256x6xf32>
    %36 = vector.extract_strided_slice %6 {offsets = [0, 5], sizes = [256, 1], strides = [1, 1]} : vector<256x6xf32> to vector<256x1xf32>
    %37 = vector.extract_strided_slice %6 {offsets = [0, 0], sizes = [256, 5], strides = [1, 1]} : vector<256x6xf32> to vector<256x5xf32>
    %38 = tpu.concatenate %36, %37 in 1 : vector<256x1xf32>, vector<256x5xf32> -> vector<256x6xf32>
    %39 = arith.mulf %38, %29 : vector<256x6xf32>
    %40 = arith.addf %35, %39 : vector<256x6xf32>
    %41 = arith.truncf %26 : vector<256x72xf32> to vector<256x72xbf16>
    %c0_22 = arith.constant 0 : index
    %c0_23 = arith.constant 0 : index
    %c0_24 = arith.constant 0 : index
    %42 = vector.load %arg12[%c0_22, %c0_23, %c0_24] : memref<1x256x72xbf16, #tpu.memory_space<vmem>>, vector<1x256x72xbf16>
    %43 = vector.shape_cast %42 : vector<1x256x72xbf16> to vector<256x72xbf16>
    %44 = vector.shape_cast %41 : vector<256x72xbf16> to vector<1x256x72xbf16>
    tpu.vector_store %arg12[%c0_22, %c0_23, %c0_24], %44 {strides = array<i32>} : memref<1x256x72xbf16, #tpu.memory_space<vmem>>, vector<1x256x72xbf16>,
    %45 = vector.extract_strided_slice %10 {offsets = [0, 0], sizes = [256, 48], strides = [1, 1]} : vector<256x96xf32> to vector<256x48xf32>
    %46 = arith.truncf %45 : vector<256x48xf32> to vector<256x48xbf16>
    %c0_25 = arith.constant 0 : index
    %c0_26 = arith.constant 0 : index
    %c0_27 = arith.constant 0 : index
    %47 = vector.load %arg13[%c0_25, %c0_26, %c0_27] : memref<1x256x54xbf16, #tpu.memory_space<vmem>>, vector<1x256x48xbf16>
    %48 = vector.shape_cast %47 : vector<1x256x48xbf16> to vector<256x48xbf16>
    %49 = vector.shape_cast %46 : vector<256x48xbf16> to vector<1x256x48xbf16>
    tpu.vector_store %arg13[%c0_25, %c0_26, %c0_27], %49 {strides = array<i32>} : memref<1x256x54xbf16, #tpu.memory_space<vmem>>, vector<1x256x48xbf16>,
    %50 = arith.truncf %40 : vector<256x6xf32> to vector<256x6xbf16>
    %c0_28 = arith.constant 0 : index
    %c0_29 = arith.constant 0 : index
    %c48 = arith.constant 48 : index
    %51 = vector.load %arg13[%c0_28, %c0_29, %c48] : memref<1x256x54xbf16, #tpu.memory_space<vmem>>, vector<1x256x6xbf16>
    %52 = vector.shape_cast %51 : vector<1x256x6xbf16> to vector<256x6xbf16>
    %53 = vector.shape_cast %50 : vector<256x6xbf16> to vector<1x256x6xbf16>
    tpu.vector_store %arg13[%c0_28, %c0_29, %c48], %53 {strides = array<i32>} : memref<1x256x54xbf16, #tpu.memory_space<vmem>>, vector<1x256x6xbf16>,
    %54 = vector.extract_strided_slice %10 {offsets = [0, 48], sizes = [256, 48], strides = [1, 1]} : vector<256x96xf32> to vector<256x48xf32>
    %55 = arith.truncf %54 : vector<256x48xf32> to vector<256x48xbf16>
    %c0_30 = arith.constant 0 : index
    %c0_31 = arith.constant 0 : index
    %c0_32 = arith.constant 0 : index
    %56 = vector.load %arg14[%c0_30, %c0_31, %c0_32] : memref<1x256x48xbf16, #tpu.memory_space<vmem>>, vector<1x256x48xbf16>
    %57 = vector.shape_cast %56 : vector<1x256x48xbf16> to vector<256x48xbf16>
    %58 = vector.shape_cast %55 : vector<256x48xbf16> to vector<1x256x48xbf16>
    tpu.vector_store %arg14[%c0_30, %c0_31, %c0_32], %58 {strides = array<i32>} : memref<1x256x48xbf16, #tpu.memory_space<vmem>>, vector<1x256x48xbf16>,
    return
  }
  func.func @transform_0(%arg0: i32, %arg1: i32) -> (i32, i32, i32) {
    %c0_i32 = arith.constant 0 : i32
    %c0_i32_0 = arith.constant 0 : i32
    return %arg0, %arg1, %c0_i32 : i32, i32, i32
  }
  func.func @transform_1(%arg0: i32, %arg1: i32) -> (i32, i32) {
    %c0_i32 = arith.constant 0 : i32
    %c0_i32_0 = arith.constant 0 : i32
    %c0_i32_1 = arith.constant 0 : i32
    return %c0_i32, %c0_i32_0 : i32, i32
  }
  func.func @transform_2(%arg0: i32, %arg1: i32) -> (i32, i32) {
    %c0_i32 = arith.constant 0 : i32
    %c0_i32_0 = arith.constant 0 : i32
    %c0_i32_1 = arith.constant 0 : i32
    return %c0_i32, %c0_i32_0 : i32, i32
  }
  func.func @transform_3(%arg0: i32, %arg1: i32) -> (i32, i32) {
    %c0_i32 = arith.constant 0 : i32
    %c0_i32_0 = arith.constant 0 : i32
    %c0_i32_1 = arith.constant 0 : i32
    return %c0_i32, %c0_i32_0 : i32, i32
  }
  func.func @transform_4(%arg0: i32, %arg1: i32) -> (i32, i32) {
    %c0_i32 = arith.constant 0 : i32
    %c0_i32_0 = arith.constant 0 : i32
    return %arg1, %c0_i32 : i32, i32
  }
  func.func @transform_5(%arg0: i32, %arg1: i32) -> (i32, i32) {
    %c0_i32 = arith.constant 0 : i32
    %c0_i32_0 = arith.constant 0 : i32
    return %arg1, %c0_i32 : i32, i32
  }
  func.func @transform_6(%arg0: i32, %arg1: i32) -> (i32, i32) {
    %c0_i32 = arith.constant 0 : i32
    %c0_i32_0 = arith.constant 0 : i32
    return %arg1, %c0_i32 : i32, i32
  }
  func.func @transform_7(%arg0: i32, %arg1: i32) -> (i32, i32) {
    %c0_i32 = arith.constant 0 : i32
    %c0_i32_0 = arith.constant 0 : i32
    return %arg1, %c0_i32 : i32, i32
  }
  func.func @transform_8(%arg0: i32, %arg1: i32) -> (i32, i32) {
    %c0_i32 = arith.constant 0 : i32
    %c0_i32_0 = arith.constant 0 : i32
    return %arg1, %c0_i32 : i32, i32
  }
  func.func @transform_9(%arg0: i32, %arg1: i32) -> (i32, i32) {
    %c0_i32 = arith.constant 0 : i32
    %c0_i32_0 = arith.constant 0 : i32
    return %arg1, %c0_i32 : i32, i32
  }
  func.func @transform_10(%arg0: i32, %arg1: i32) -> (i32, i32, i32) {
    %c0_i32 = arith.constant 0 : i32
    %c0_i32_0 = arith.constant 0 : i32
    return %arg0, %arg1, %c0_i32 : i32, i32, i32
  }
  func.func @transform_11(%arg0: i32, %arg1: i32) -> (i32, i32, i32) {
    %c0_i32 = arith.constant 0 : i32
    %c0_i32_0 = arith.constant 0 : i32
    return %arg0, %arg1, %c0_i32 : i32, i32, i32
  }
  func.func @transform_12(%arg0: i32, %arg1: i32) -> (i32, i32, i32) {
    %c0_i32 = arith.constant 0 : i32
    %c0_i32_0 = arith.constant 0 : i32
    return %arg0, %arg1, %c0_i32 : i32, i32, i32
  }
}

</mosaic_0001>

<llo_original>
// kernel: tpu_custom_call.1
$region0: #{tpu_custom_call.1}
  #allocation0 [shape = 'u32[]', space=smem, size = 0x4, offset = 0x4, fixed_abs, tag = 'smem constant byte address 0x4 - core index']
  #allocation1 [shape = 'u32[144,128]{1,0:T(1,128)}', space=vmem, size = 0x12000, scoped, tag = 'internal scratch']
  %s0 = inlined_call_operand.vmem [shape: bf16[2,256,48], index: 0, kind: input, shape index: {}]
  %s1 = inlined_call_operand.vmem [shape: bf16[48,38], index: 1, kind: input, shape index: {}]
  %s2 = inlined_call_operand.vmem [shape: bf16[16,96], index: 2, kind: input, shape index: {}]
  %s3 = inlined_call_operand.vmem [shape: bf16[16,72], index: 3, kind: input, shape index: {}]
  %s4 = inlined_call_operand.vmem [shape: f32[256,72], index: 4, kind: input, shape index: {}]
  %s5 = inlined_call_operand.vmem [shape: f32[256,72], index: 5, kind: input, shape index: {}]
  %s6 = inlined_call_operand.vmem [shape: f32[256,72], index: 6, kind: input, shape index: {}]
  %s7 = inlined_call_operand.vmem [shape: f32[256,6], index: 7, kind: input, shape index: {}]
  %s8 = inlined_call_operand.vmem [shape: f32[256,6], index: 8, kind: input, shape index: {}]
  %s9 = inlined_call_operand.vmem [shape: f32[256,6], index: 9, kind: input, shape index: {}]
  %s10 = inlined_call_operand.vmem [shape: bf16[2,256,72], index: 10, kind: output, shape index: {0}]
  %s11 = inlined_call_operand.vmem [shape: bf16[2,256,54], index: 11, kind: output, shape index: {1}]
  %s12 = inlined_call_operand.vmem [shape: bf16[2,256,48], index: 12, kind: output, shape index: {2}]
  %13 = xla_tuple %s10, %s11, %s12
  %s14 = sld [smem:[#allocation0]]
  $region89: #{tpu_custom_call.1} parent=0
    _
  %s16 = ssub.s32 1, %s14
  %s17 = scalar_select 0, %s16, %s14
  loop: start=0, step=1, limit=4
  $region2: #{tpu_custom_call.1} parent=0 // loop_pre_header
    _
  $region3: #{tpu_custom_call.1} parent=0 // loop_header
    %s19 = sphi 0, %s23
    %p20 = scmp.ge.s32.totalorder %s19, 4
    %s26 = sphi 0, %s38
    %s27 = sphi 0, %s34
    %s28 = sphi 0, %s26
    %s29 = sphi 0, %s27
    %s30 = sphi 0, %s28
    %s31 = sphi 0, %s29
    %s43 = sphi 0, %s45
    %s46 = sphi 0, %s43
    %s47 = sphi 0, %s46
    %s63 = sphi 0, %s47
    %s67 = sphi 0, %s67
    %s69 = sphi 0, %s67
    %s70 = sphi 0, %s69
    %s84 = sphi 0, %s70
    %s88 = sphi 0, %s88
    %s90 = sphi 0, %s88
    %s91 = sphi 0, %s90
    %s105 = sphi 0, %s91
    %s109 = sphi 0, %s109
    %s111 = sphi 0, %s109
    %s112 = sphi 0, %s111
    %s126 = sphi 0, %s112
    %s132 = sphi 0, %s134
    %s135 = sphi 0, %s132
    %s136 = sphi 0, %s135
    %s152 = sphi 0, %s136
    %s158 = sphi 0, %s160
    %s161 = sphi 0, %s158
    %s162 = sphi 0, %s161
    %s178 = sphi 0, %s162
    %s184 = sphi 0, %s186
    %s187 = sphi 0, %s184
    %s188 = sphi 0, %s187
    %s204 = sphi 0, %s188
    %s210 = sphi 0, %s212
    %s213 = sphi 0, %s210
    %s214 = sphi 0, %s213
    %s230 = sphi 0, %s214
    %s236 = sphi 0, %s238
    %s239 = sphi 0, %s236
    %s240 = sphi 0, %s239
    %s256 = sphi 0, %s240
    %s262 = sphi 0, %s264
    %s265 = sphi 0, %s262
    %s266 = sphi 0, %s265
    %s282 = sphi 0, %s266
    %s290 = sphi 0, %s292
    %s293 = sphi 0, %s290
    %s294 = sphi 0, %s293
    %s310 = sphi 0, %s294
    %s318 = sphi 0, %s320
    %s321 = sphi 0, %s318
    %s322 = sphi 0, %s321
    %s338 = sphi 0, %s322
    %s346 = sphi 0, %s348
    %s349 = sphi 0, %s346
    %s350 = sphi 0, %s349
    %s366 = sphi 0, %s350
  $region4: #{tpu_custom_call.1} parent=0 // loop_header_branch
    %22 = sbr.rel (%p20) target = $region8
  $region5: #{tpu_custom_call.1} parent=0 // loop_body
    %s24 = ssub.s32 %s19, 1
    %s25 = ssub.s32 %s19, 2
    %s32 = sadd.s32 1, %s27
    %p33 = scmp.ge.s32.totalorder %s32, 1
    %s34 = scalar_select %p33, 0, %s32
    %s35 = sadd.s32 1, %s26
    %s36 = scalar_select %p33, %s35, %s26
    %p37 = scmp.ge.s32.totalorder %s36, 2
    %s38 = scalar_select %p37, 0, %s36
    %s39 = ssub.s32 %s26, %s38
    %s40 = ssub.s32 %s27, %s34
    %s41 = sor.u32 %s39, %s40
    %p42 = scmp.eq.s32.totalorder %s41, 0
    %s44 = sadd.s32 %s43, 1
    %s45 = scalar_select %p42, %s43, %s44
    %p48 = pneg %p42
    %p49 = scmp.eq.s32.totalorder %s19, 1
    %p50 = por %p48, %p49
    %p51 = scmp.ne.s32.totalorder %s43, %s46
    %p52 = scmp.eq.s32.totalorder %s19, 0
    %p53 = por %p51, %p52
    %p54 = scmp.ne.s32.totalorder %s43, %s46
    %p55 = scmp.eq.s32.totalorder %s24, 1
    %p56 = por %p54, %p55
    %p57 = scmp.ne.s32.totalorder %s46, %s47
    %p58 = scmp.eq.s32.totalorder %s24, 0
    %p59 = por %p57, %p58
    %p60 = scmp.ne.s32.totalorder %s46, %s47
    %p61 = scmp.eq.s32.totalorder %s25, 1
    %p62 = por %p60, %p61
    %p64 = scmp.ne.s32.totalorder %s47, %s63
    %p65 = scmp.eq.s32.totalorder %s25, 0
    %p66 = por %p64, %p65
    %s68 = sadd.s32 %s67, 1
    %p71 = scmp.eq.s32.totalorder %s19, 1
    %p72 = scmp.ne.s32.totalorder %s67, %s69
    %p73 = scmp.eq.s32.totalorder %s19, 0
    %p74 = por %p72, %p73
    %p75 = scmp.ne.s32.totalorder %s67, %s69
    %p76 = scmp.eq.s32.totalorder %s24, 1
    %p77 = por %p75, %p76
    %p78 = scmp.ne.s32.totalorder %s69, %s70
    %p79 = scmp.eq.s32.totalorder %s24, 0
    %p80 = por %p78, %p79
    %p81 = scmp.ne.s32.totalorder %s69, %s70
    %p82 = scmp.eq.s32.totalorder %s25, 1
    %p83 = por %p81, %p82
    %p85 = scmp.ne.s32.totalorder %s70, %s84
    %p86 = scmp.eq.s32.totalorder %s25, 0
    %p87 = por %p85, %p86
    %s89 = sadd.s32 %s88, 1
    %p92 = scmp.eq.s32.totalorder %s19, 1
    %p93 = scmp.ne.s32.totalorder %s88, %s90
    %p94 = scmp.eq.s32.totalorder %s19, 0
    %p95 = por %p93, %p94
    %p96 = scmp.ne.s32.totalorder %s88, %s90
    %p97 = scmp.eq.s32.totalorder %s24, 1
    %p98 = por %p96, %p97
    %p99 = scmp.ne.s32.totalorder %s90, %s91
    %p100 = scmp.eq.s32.totalorder %s24, 0
    %p101 = por %p99, %p100
    %p102 = scmp.ne.s32.totalorder %s90, %s91
    %p103 = scmp.eq.s32.totalorder %s25, 1
    %p104 = por %p102, %p103
    %p106 = scmp.ne.s32.totalorder %s91, %s105
    %p107 = scmp.eq.s32.totalorder %s25, 0
    %p108 = por %p106, %p107
    %s110 = sadd.s32 %s109, 1
    %p113 = scmp.eq.s32.totalorder %s19, 1
    %p114 = scmp.ne.s32.totalorder %s109, %s111
    %p115 = scmp.eq.s32.totalorder %s19, 0
    %p116 = por %p114, %p115
    %p117 = scmp.ne.s32.totalorder %s109, %s111
    %p118 = scmp.eq.s32.totalorder %s24, 1
    %p119 = por %p117, %p118
    %p120 = scmp.ne.s32.totalorder %s111, %s112
    %p121 = scmp.eq.s32.totalorder %s24, 0
    %p122 = por %p120, %p121
    %p123 = scmp.ne.s32.totalorder %s111, %s112
    %p124 = scmp.eq.s32.totalorder %s25, 1
    %p125 = por %p123, %p124
    %p127 = scmp.ne.s32.totalorder %s112, %s126
    %p128 = scmp.eq.s32.totalorder %s25, 0
    %p129 = por %p127, %p128
    %s130 = ssub.s32 %s27, %s34
    %p131 = scmp.eq.s32.totalorder %s130, 0
    %s133 = sadd.s32 %s132, 1
    %s134 = scalar_select %p131, %s132, %s133
    %p137 = pneg %p131
    %p138 = scmp.eq.s32.totalorder %s19, 1
    %p139 = por %p137, %p138
    %p140 = scmp.ne.s32.totalorder %s132, %s135
    %p141 = scmp.eq.s32.totalorder %s19, 0
    %p142 = por %p140, %p141
    %p143 = scmp.ne.s32.totalorder %s132, %s135
    %p144 = scmp.eq.s32.totalorder %s24, 1
    %p145 = por %p143, %p144
    %p146 = scmp.ne.s32.totalorder %s135, %s136
    %p147 = scmp.eq.s32.totalorder %s24, 0
    %p148 = por %p146, %p147
    %p149 = scmp.ne.s32.totalorder %s135, %s136
    %p150 = scmp.eq.s32.totalorder %s25, 1
    %p151 = por %p149, %p150
    %p153 = scmp.ne.s32.totalorder %s136, %s152
    %p154 = scmp.eq.s32.totalorder %s25, 0
    %p155 = por %p153, %p154
    %s156 = ssub.s32 %s27, %s34
    %p157 = scmp.eq.s32.totalorder %s156, 0
    %s159 = sadd.s32 %s158, 1
    %s160 = scalar_select %p157, %s158, %s159
    %p163 = pneg %p157
    %p164 = scmp.eq.s32.totalorder %s19, 1
    %p165 = por %p163, %p164
    %p166 = scmp.ne.s32.totalorder %s158, %s161
    %p167 = scmp.eq.s32.totalorder %s19, 0
    %p168 = por %p166, %p167
    %p169 = scmp.ne.s32.totalorder %s158, %s161
    %p170 = scmp.eq.s32.totalorder %s24, 1
    %p171 = por %p169, %p170
    %p172 = scmp.ne.s32.totalorder %s161, %s162
    %p173 = scmp.eq.s32.totalorder %s24, 0
    %p174 = por %p172, %p173
    %p175 = scmp.ne.s32.totalorder %s161, %s162
    %p176 = scmp.eq.s32.totalorder %s25, 1
    %p177 = por %p175, %p176
    %p179 = scmp.ne.s32.totalorder %s162, %s178
    %p180 = scmp.eq.s32.totalorder %s25, 0
    %p181 = por %p179, %p180
    %s182 = ssub.s32 %s27, %s34
    %p183 = scmp.eq.s32.totalorder %s182, 0
    %s185 = sadd.s32 %s184, 1
    %s186 = scalar_select %p183, %s184, %s185
    %p189 = pneg %p183
    %p190 = scmp.eq.s32.totalorder %s19, 1
    %p191 = por %p189, %p190
    %p192 = scmp.ne.s32.totalorder %s184, %s187
    %p193 = scmp.eq.s32.totalorder %s19, 0
    %p194 = por %p192, %p193
    %p195 = scmp.ne.s32.totalorder %s184, %s187
    %p196 = scmp.eq.s32.totalorder %s24, 1
    %p197 = por %p195, %p196
    %p198 = scmp.ne.s32.totalorder %s187, %s188
    %p199 = scmp.eq.s32.totalorder %s24, 0
    %p200 = por %p198, %p199
    %p201 = scmp.ne.s32.totalorder %s187, %s188
    %p202 = scmp.eq.s32.totalorder %s25, 1
    %p203 = por %p201, %p202
    %p205 = scmp.ne.s32.totalorder %s188, %s204
    %p206 = scmp.eq.s32.totalorder %s25, 0
    %p207 = por %p205, %p206
    %s208 = ssub.s32 %s27, %s34
    %p209 = scmp.eq.s32.totalorder %s208, 0
    %s211 = sadd.s32 %s210, 1
    %s212 = scalar_select %p209, %s210, %s211
    %p215 = pneg %p209
    %p216 = scmp.eq.s32.totalorder %s19, 1
    %p217 = por %p215, %p216
    %p218 = scmp.ne.s32.totalorder %s210, %s213
    %p219 = scmp.eq.s32.totalorder %s19, 0
    %p220 = por %p218, %p219
    %p221 = scmp.ne.s32.totalorder %s210, %s213
    %p222 = scmp.eq.s32.totalorder %s24, 1
    %p223 = por %p221, %p222
    %p224 = scmp.ne.s32.totalorder %s213, %s214
    %p225 = scmp.eq.s32.totalorder %s24, 0
    %p226 = por %p224, %p225
    %p227 = scmp.ne.s32.totalorder %s213, %s214
    %p228 = scmp.eq.s32.totalorder %s25, 1
    %p229 = por %p227, %p228
    %p231 = scmp.ne.s32.totalorder %s214, %s230
    %p232 = scmp.eq.s32.totalorder %s25, 0
    %p233 = por %p231, %p232
    %s234 = ssub.s32 %s27, %s34
    %p235 = scmp.eq.s32.totalorder %s234, 0
    %s237 = sadd.s32 %s236, 1
    %s238 = scalar_select %p235, %s236, %s237
    %p241 = pneg %p235
    %p242 = scmp.eq.s32.totalorder %s19, 1
    %p243 = por %p241, %p242
    %p244 = scmp.ne.s32.totalorder %s236, %s239
    %p245 = scmp.eq.s32.totalorder %s19, 0
    %p246 = por %p244, %p245
    %p247 = scmp.ne.s32.totalorder %s236, %s239
    %p248 = scmp.eq.s32.totalorder %s24, 1
    %p249 = por %p247, %p248
    %p250 = scmp.ne.s32.totalorder %s239, %s240
    %p251 = scmp.eq.s32.totalorder %s24, 0
    %p252 = por %p250, %p251
    %p253 = scmp.ne.s32.totalorder %s239, %s240
    %p254 = scmp.eq.s32.totalorder %s25, 1
    %p255 = por %p253, %p254
    %p257 = scmp.ne.s32.totalorder %s240, %s256
    %p258 = scmp.eq.s32.totalorder %s25, 0
    %p259 = por %p257, %p258
    %s260 = ssub.s32 %s27, %s34
    %p261 = scmp.eq.s32.totalorder %s260, 0
    %s263 = sadd.s32 %s262, 1
    %s264 = scalar_select %p261, %s262, %s263
    %p267 = pneg %p261
    %p268 = scmp.eq.s32.totalorder %s19, 1
    %p269 = por %p267, %p268
    %p270 = scmp.ne.s32.totalorder %s262, %s265
    %p271 = scmp.eq.s32.totalorder %s19, 0
    %p272 = por %p270, %p271
    %p273 = scmp.ne.s32.totalorder %s262, %s265
    %p274 = scmp.eq.s32.totalorder %s24, 1
    %p275 = por %p273, %p274
    %p276 = scmp.ne.s32.totalorder %s265, %s266
    %p277 = scmp.eq.s32.totalorder %s24, 0
    %p278 = por %p276, %p277
    %p279 = scmp.ne.s32.totalorder %s265, %s266
    %p280 = scmp.eq.s32.totalorder %s25, 1
    %p281 = por %p279, %p280
    %p283 = scmp.ne.s32.totalorder %s266, %s282
    %p284 = scmp.eq.s32.totalorder %s25, 0
    %p285 = por %p283, %p284
    %s286 = ssub.s32 %s26, %s38
    %s287 = ssub.s32 %s27, %s34
    %s288 = sor.u32 %s286, %s287
    %p289 = scmp.eq.s32.totalorder %s288, 0
    %s291 = sadd.s32 %s290, 1
    %s292 = scalar_select %p289, %s290, %s291
    %p295 = pneg %p289
    %p296 = scmp.eq.s32.totalorder %s19, 1
    %p297 = por %p295, %p296
    %p298 = scmp.ne.s32.totalorder %s290, %s293
    %p299 = scmp.eq.s32.totalorder %s19, 0
    %p300 = por %p298, %p299
    %p301 = scmp.ne.s32.totalorder %s290, %s293
    %p302 = scmp.eq.s32.totalorder %s24, 1
    %p303 = por %p301, %p302
    %p304 = scmp.ne.s32.totalorder %s293, %s294
    %p305 = scmp.eq.s32.totalorder %s24, 0
    %p306 = por %p304, %p305
    %p307 = scmp.ne.s32.totalorder %s293, %s294
    %p308 = scmp.eq.s32.totalorder %s25, 1
    %p309 = por %p307, %p308
    %p311 = scmp.ne.s32.totalorder %s294, %s310
    %p312 = scmp.eq.s32.totalorder %s25, 0
    %p313 = por %p311, %p312
    %s314 = ssub.s32 %s26, %s38
    %s315 = ssub.s32 %s27, %s34
    %s316 = sor.u32 %s314, %s315
    %p317 = scmp.eq.s32.totalorder %s316, 0
    %s319 = sadd.s32 %s318, 1
    %s320 = scalar_select %p317, %s318, %s319
    %p323 = pneg %p317
    %p324 = scmp.eq.s32.totalorder %s19, 1
    %p325 = por %p323, %p324
    %p326 = scmp.ne.s32.totalorder %s318, %s321
    %p327 = scmp.eq.s32.totalorder %s19, 0
    %p328 = por %p326, %p327
    %p329 = scmp.ne.s32.totalorder %s318, %s321
    %p330 = scmp.eq.s32.totalorder %s24, 1
    %p331 = por %p329, %p330
    %p332 = scmp.ne.s32.totalorder %s321, %s322
    %p333 = scmp.eq.s32.totalorder %s24, 0
    %p334 = por %p332, %p333
    %p335 = scmp.ne.s32.totalorder %s321, %s322
    %p336 = scmp.eq.s32.totalorder %s25, 1
    %p337 = por %p335, %p336
    %p339 = scmp.ne.s32.totalorder %s322, %s338
    %p340 = scmp.eq.s32.totalorder %s25, 0
    %p341 = por %p339, %p340
    %s342 = ssub.s32 %s26, %s38
    %s343 = ssub.s32 %s27, %s34
    %s344 = sor.u32 %s342, %s343
    %p345 = scmp.eq.s32.totalorder %s344, 0
    %s347 = sadd.s32 %s346, 1
    %s348 = scalar_select %p345, %s346, %s347
    %p351 = pneg %p345
    %p352 = scmp.eq.s32.totalorder %s19, 1
    %p353 = por %p351, %p352
    %p354 = scmp.ne.s32.totalorder %s346, %s349
    %p355 = scmp.eq.s32.totalorder %s19, 0
    %p356 = por %p354, %p355
    %p357 = scmp.ne.s32.totalorder %s346, %s349
    %p358 = scmp.eq.s32.totalorder %s24, 1
    %p359 = por %p357, %p358
    %p360 = scmp.ne.s32.totalorder %s349, %s350
    %p361 = scmp.eq.s32.totalorder %s24, 0
    %p362 = por %p360, %p361
    %p363 = scmp.ne.s32.totalorder %s349, %s350
    %p364 = scmp.eq.s32.totalorder %s25, 1
    %p365 = por %p363, %p364
    %p367 = scmp.ne.s32.totalorder %s350, %s366
    %p368 = scmp.eq.s32.totalorder %s25, 0
    %p369 = por %p367, %p368
    %p370 = scmp.le.s32.totalorder 1, %s19
    %p371 = scmp.lt.s32.totalorder %s19, 3
    %p372 = pnand %p370, %p371
    %p373 = pneg %p372
    // Predicated region
    $region9: #{tpu_custom_call.1} parent=5 // pred_check
      _
    $region10: #{tpu_custom_call.1} parent=5 // pred_check_branch
      %375 = sbr.rel (%p372) target = $region12
    $region11: #{tpu_custom_call.1} parent=5 // pred_region
      %s376 = ssub.s32 %s19, 1
      // Predicated region
      $region13: #{tpu_custom_call.1} parent=11 // pred_check
        %p377 = pneg %p80
      $region14: #{tpu_custom_call.1} parent=11 // pred_check_branch
        %379 = sbr.rel (%p377) target = $region16
      $region15: #{tpu_custom_call.1} parent=11 // pred_region
        _
      $region16: #{tpu_custom_call.1} parent=11 // pred_fallthru
        _
      // Predicated region
      $region17: #{tpu_custom_call.1} parent=11 // pred_check
        %p380 = pneg %p101
      $region18: #{tpu_custom_call.1} parent=11 // pred_check_branch
        %382 = sbr.rel (%p380) target = $region20
      $region19: #{tpu_custom_call.1} parent=11 // pred_region
        _
      $region20: #{tpu_custom_call.1} parent=11 // pred_fallthru
        _
      // Predicated region
      $region21: #{tpu_custom_call.1} parent=11 // pred_check
        %p383 = pneg %p122
      $region22: #{tpu_custom_call.1} parent=11 // pred_check_branch
        %385 = sbr.rel (%p383) target = $region24
      $region23: #{tpu_custom_call.1} parent=11 // pred_region
        _
      $region24: #{tpu_custom_call.1} parent=11 // pred_fallthru
        _
      // Predicated region
      $region25: #{tpu_custom_call.1} parent=11 // pred_check
        %p386 = pneg %p148
      $region26: #{tpu_custom_call.1} parent=11 // pred_check_branch
        %388 = sbr.rel (%p386) target = $region28
      $region27: #{tpu_custom_call.1} parent=11 // pred_region
        %s389 = smul.u32 32, %s29
        %p390 = scmp.lt.s32.totalorder %s389, 31
        %s391 = scalar_select %p390, %s389, 31
        %s392 = smul.addr %s391, 8
        %s393 = scalar_lea.vmem %s4, %s392
        %s394 = smul.u32 32, %s29
      $region28: #{tpu_custom_call.1} parent=11 // pred_fallthru
        _
      // Predicated region
      $region29: #{tpu_custom_call.1} parent=11 // pred_check
        %p395 = pneg %p174
      $region30: #{tpu_custom_call.1} parent=11 // pred_check_branch
        %397 = sbr.rel (%p395) target = $region32
      $region31: #{tpu_custom_call.1} parent=11 // pred_region
        %s398 = smul.u32 32, %s29
        %p399 = scmp.lt.s32.totalorder %s398, 31
        %s400 = scalar_select %p399, %s398, 31
        %s401 = smul.addr %s400, 8
        %s402 = scalar_lea.vmem %s5, %s401
        %s403 = smul.u32 32, %s29
      $region32: #{tpu_custom_call.1} parent=11 // pred_fallthru
        _
      // Predicated region
      $region33: #{tpu_custom_call.1} parent=11 // pred_check
        %p404 = pneg %p200
      $region34: #{tpu_custom_call.1} parent=11 // pred_check_branch
        %406 = sbr.rel (%p404) target = $region36
      $region35: #{tpu_custom_call.1} parent=11 // pred_region
        %s407 = smul.u32 32, %s29
        %p408 = scmp.lt.s32.totalorder %s407, 31
        %s409 = scalar_select %p408, %s407, 31
        %s410 = smul.addr %s409, 8
        %s411 = scalar_lea.vmem %s6, %s410
        %s412 = smul.u32 32, %s29
      $region36: #{tpu_custom_call.1} parent=11 // pred_fallthru
        _
      // Predicated region
      $region37: #{tpu_custom_call.1} parent=11 // pred_check
        %p413 = pneg %p226
      $region38: #{tpu_custom_call.1} parent=11 // pred_check_branch
        %415 = sbr.rel (%p413) target = $region40
      $region39: #{tpu_custom_call.1} parent=11 // pred_region
        %s416 = smul.u32 32, %s29
        %p417 = scmp.lt.s32.totalorder %s416, 31
        %s418 = scalar_select %p417, %s416, 31
        %s419 = smul.addr %s418, 8
        %s420 = scalar_lea.vmem %s7, %s419
        %s421 = smul.u32 32, %s29
      $region40: #{tpu_custom_call.1} parent=11 // pred_fallthru
        _
      // Predicated region
      $region41: #{tpu_custom_call.1} parent=11 // pred_check
        %p422 = pneg %p252
      $region42: #{tpu_custom_call.1} parent=11 // pred_check_branch
        %424 = sbr.rel (%p422) target = $region44
      $region43: #{tpu_custom_call.1} parent=11 // pred_region
        %s425 = smul.u32 32, %s29
        %p426 = scmp.lt.s32.totalorder %s425, 31
        %s427 = scalar_select %p426, %s425, 31
        %s428 = smul.addr %s427, 8
        %s429 = scalar_lea.vmem %s8, %s428
        %s430 = smul.u32 32, %s29
      $region44: #{tpu_custom_call.1} parent=11 // pred_fallthru
        _
      // Predicated region
      $region45: #{tpu_custom_call.1} parent=11 // pred_check
        %p431 = pneg %p278
      $region46: #{tpu_custom_call.1} parent=11 // pred_check_branch
        %433 = sbr.rel (%p431) target = $region48
      $region47: #{tpu_custom_call.1} parent=11 // pred_region
        %s434 = smul.u32 32, %s29
        %p435 = scmp.lt.s32.totalorder %s434, 31
        %s436 = scalar_select %p435, %s434, 31
        %s437 = smul.addr %s436, 8
        %s438 = scalar_lea.vmem %s9, %s437
        %s439 = smul.u32 32, %s29
      $region48: #{tpu_custom_call.1} parent=11 // pred_fallthru
        _
    $region12: #{tpu_custom_call.1} parent=5 // pred_fallthru
      _
    %p440 = scmp.lt.s32.totalorder %s19, 2
    // Predicated region
    $region49: #{tpu_custom_call.1} parent=5 // pred_check
      %p441 = pneg %p440
    $region50: #{tpu_custom_call.1} parent=5 // pred_check_branch
      %443 = sbr.rel (%p441) target = $region52
    $region51: #{tpu_custom_call.1} parent=5 // pred_region
      // Predicated region
      $region53: #{tpu_custom_call.1} parent=51 // pred_check
        %p444 = pneg %p53
      $region54: #{tpu_custom_call.1} parent=51 // pred_check_branch
        %446 = sbr.rel (%p444) target = $region56
      $region55: #{tpu_custom_call.1} parent=51 // pred_region
        %s447 = smul.u32 32, %s27
        %p448 = scmp.lt.s32.totalorder %s26, 1
        %s449 = scalar_select %p448, %s26, 1
        %p450 = scmp.lt.s32.totalorder %s447, 31
        %s451 = scalar_select %p450, %s447, 31
        %s452 = smul.addr %s449, 32
        %s453 = sadd.s32 %s451, %s452
        %s454 = smul.addr %s453, 4
        %s455 = scalar_lea.vmem %s0, %s454
        %s456 = smul.u32 32, %s27
      $region56: #{tpu_custom_call.1} parent=51 // pred_fallthru
        _
    $region52: #{tpu_custom_call.1} parent=5 // pred_fallthru
      _
    %p457 = scmp.le.s32.totalorder 1, %s19
    %p458 = scmp.lt.s32.totalorder %s19, 3
    %p459 = pnand %p457, %p458
    %p460 = pneg %p459
    // Predicated region
    $region57: #{tpu_custom_call.1} parent=5 // pred_check
      _
    $region58: #{tpu_custom_call.1} parent=5 // pred_check_branch
      %462 = sbr.rel (%p459) target = $region60
    $region59: #{tpu_custom_call.1} parent=5 // pred_region
      %s463 = ssub.s32 %s19, 1
      %s464 = smul.u32 32, %s29
      %p465 = scmp.lt.s32.totalorder %s28, 1
      %s466 = scalar_select %p465, %s28, 1
      %p467 = scmp.lt.s32.totalorder %s464, 31
      %s468 = scalar_select %p467, %s464, 31
      %s469 = smul.addr %s466, 32
      %s470 = sadd.s32 %s468, %s469
      %s471 = smul.addr %s470, 4
      %s472 = scalar_lea.vmem %s0, %s471
      %p473 = pneg %p59
      %p474 = pneg %p56
      %p475 = pneg %p80
      %p476 = pneg %p77
      %p477 = pneg %p101
      %p478 = pneg %p98
      %p479 = pneg %p122
      %p480 = pneg %p119
      %s481 = smul.u32 32, %s29
      %p482 = scmp.lt.s32.totalorder %s481, 31
      %s483 = scalar_select %p482, %s481, 31
      %s484 = smul.addr %s483, 8
      %s485 = scalar_lea.vmem %s4, %s484
      %p486 = pneg %p148
      %p487 = pneg %p145
      %s488 = smul.u32 32, %s29
      %p489 = scmp.lt.s32.totalorder %s488, 31
      %s490 = scalar_select %p489, %s488, 31
      %s491 = smul.addr %s490, 8
      %s492 = scalar_lea.vmem %s5, %s491
      %p493 = pneg %p174
      %p494 = pneg %p171
      %s495 = smul.u32 32, %s29
      %p496 = scmp.lt.s32.totalorder %s495, 31
      %s497 = scalar_select %p496, %s495, 31
      %s498 = smul.addr %s497, 8
      %s499 = scalar_lea.vmem %s6, %s498
      %p500 = pneg %p200
      %p501 = pneg %p197
      %s502 = smul.u32 32, %s29
      %p503 = scmp.lt.s32.totalorder %s502, 31
      %s504 = scalar_select %p503, %s502, 31
      %s505 = smul.addr %s504, 8
      %s506 = scalar_lea.vmem %s7, %s505
      %p507 = pneg %p226
      %p508 = pneg %p223
      %s509 = smul.u32 32, %s29
      %p510 = scmp.lt.s32.totalorder %s509, 31
      %s511 = scalar_select %p510, %s509, 31
      %s512 = smul.addr %s511, 8
      %s513 = scalar_lea.vmem %s8, %s512
      %p514 = pneg %p252
      %p515 = pneg %p249
      %s516 = smul.u32 32, %s29
      %p517 = scmp.lt.s32.totalorder %s516, 31
      %s518 = scalar_select %p517, %s516, 31
      %s519 = smul.addr %s518, 8
      %s520 = scalar_lea.vmem %s9, %s519
      %p521 = pneg %p278
      %p522 = pneg %p275
      %p523 = pneg %p306
      %p524 = pneg %p303
      %s525 = smul.u32 32, %s29
      %p526 = scmp.lt.s32.totalorder %s28, 1
      %s527 = scalar_select %p526, %s28, 1
      %p528 = scmp.lt.s32.totalorder %s525, 31
      %s529 = scalar_select %p528, %s525, 31
      %s530 = smul.addr %s527, 32
      %s531 = sadd.s32 %s529, %s530
      %s532 = smul.addr %s531, 4
      %s533 = scalar_lea.vmem %s10, %s532
      %p534 = pneg %p334
      %p535 = pneg %p331
      %s536 = smul.u32 32, %s29
      %p537 = scmp.lt.s32.totalorder %s28, 1
      %s538 = scalar_select %p537, %s28, 1
      %p539 = scmp.lt.s32.totalorder %s536, 31
      %s540 = scalar_select %p539, %s536, 31
      %s541 = smul.addr %s538, 32
      %s542 = sadd.s32 %s540, %s541
      %s543 = smul.addr %s542, 4
      %s544 = scalar_lea.vmem %s11, %s543
      %p545 = pneg %p362
      %p546 = pneg %p359
      %s547 = smul.u32 32, %s29
      %p548 = scmp.lt.s32.totalorder %s28, 1
      %s549 = scalar_select %p548, %s28, 1
      %p550 = scmp.lt.s32.totalorder %s547, 31
      %s551 = scalar_select %p550, %s547, 31
      %s552 = smul.addr %s549, 32
      %s553 = sadd.s32 %s551, %s552
      %s554 = smul.addr %s553, 4
      %s555 = scalar_lea.vmem %s12, %s554
      %s556 = smul.u32 32, %s29
      %p557 = scmp.lt.s32.totalorder %s28, 1
      %s558 = scalar_select %p557, %s28, 1
      %p559 = scmp.lt.s32.totalorder %s556, 31
      %s560 = scalar_select %p559, %s556, 31
      %s561 = smul.addr %s558, 32
      %s562 = sadd.s32 %s560, %s561
      %s563 = smul.addr %s562, 4
      %s564 = scalar_lea.vmem %s0, %s563
      %s565 = smul.u32 32, %s29
      %s566 = smul.u32 32, %s29
      %p567 = scmp.lt.s32.totalorder %s566, 31
      %s568 = scalar_select %p567, %s566, 31
      %s569 = smul.addr %s568, 8
      %s570 = scalar_lea.vmem %s4, %s569
      %s571 = smul.u32 32, %s29
      %s572 = smul.u32 32, %s29
      %p573 = scmp.lt.s32.totalorder %s572, 31
      %s574 = scalar_select %p573, %s572, 31
      %s575 = smul.addr %s574, 8
      %s576 = scalar_lea.vmem %s5, %s575
      %s577 = smul.u32 32, %s29
      %s578 = smul.u32 32, %s29
      %p579 = scmp.lt.s32.totalorder %s578, 31
      %s580 = scalar_select %p579, %s578, 31
      %s581 = smul.addr %s580, 8
      %s582 = scalar_lea.vmem %s6, %s581
      %s583 = smul.u32 32, %s29
      %s584 = smul.u32 32, %s29
      %p585 = scmp.lt.s32.totalorder %s584, 31
      %s586 = scalar_select %p585, %s584, 31
      %s587 = smul.addr %s586, 8
      %s588 = scalar_lea.vmem %s7, %s587
      %s589 = smul.u32 32, %s29
      %s590 = smul.u32 32, %s29
      %p591 = scmp.lt.s32.totalorder %s590, 31
      %s592 = scalar_select %p591, %s590, 31
      %s593 = smul.addr %s592, 8
      %s594 = scalar_lea.vmem %s8, %s593
      %s595 = smul.u32 32, %s29
      %s596 = smul.u32 32, %s29
      %p597 = scmp.lt.s32.totalorder %s596, 31
      %s598 = scalar_select %p597, %s596, 31
      %s599 = smul.addr %s598, 8
      %s600 = scalar_lea.vmem %s9, %s599
      %s601 = smul.u32 32, %s29
      %s602 = smul.u32 32, %s29
      %p603 = scmp.lt.s32.totalorder %s28, 1
      %s604 = scalar_select %p603, %s28, 1
      %p605 = scmp.lt.s32.totalorder %s602, 31
      %s606 = scalar_select %p605, %s602, 31
      %s607 = smul.addr %s604, 32
      %s608 = sadd.s32 %s606, %s607
      %s609 = smul.addr %s608, 4
      %s610 = scalar_lea.vmem %s10, %s609
      %s611 = smul.u32 32, %s29
      %s612 = smul.u32 32, %s29
      %p613 = scmp.lt.s32.totalorder %s28, 1
      %s614 = scalar_select %p613, %s28, 1
      %p615 = scmp.lt.s32.totalorder %s612, 31
      %s616 = scalar_select %p615, %s612, 31
      %s617 = smul.addr %s614, 32
      %s618 = sadd.s32 %s616, %s617
      %s619 = smul.addr %s618, 4
      %s620 = scalar_lea.vmem %s11, %s619
      %s621 = smul.u32 32, %s29
      %s622 = smul.u32 32, %s29
      %p623 = scmp.lt.s32.totalorder %s28, 1
      %s624 = scalar_select %p623, %s28, 1
      %p625 = scmp.lt.s32.totalorder %s622, 31
      %s626 = scalar_select %p625, %s622, 31
      %s627 = smul.addr %s624, 32
      %s628 = sadd.s32 %s626, %s627
      %s629 = smul.addr %s628, 4
      %s630 = scalar_lea.vmem %s12, %s629
      %s631 = smul.u32 32, %s29
      %v633 = vld [vmem:[%s564] sm:$0xf]
      %v634 = vld [vmem:[%s564 + $0x4] sm:$0xf]
      %v635 = vld [vmem:[%s564 + $0x8] sm:$0xf]
      %v636 = vld [vmem:[%s564 + $0xc] sm:$0xf]
      %v637 = vld [vmem:[%s564 + $0x10] sm:$0xf]
      %v638 = vld [vmem:[%s564 + $0x14] sm:$0xf]
      %v639 = vld [vmem:[%s564 + $0x18] sm:$0xf]
      %v640 = vld [vmem:[%s564 + $0x1c] sm:$0xf]
      %v641 = vld [vmem:[%s564 + $0x20] sm:$0xf]
      %v642 = vld [vmem:[%s564 + $0x24] sm:$0xf]
      %v643 = vld [vmem:[%s564 + $0x28] sm:$0xf]
      %v644 = vld [vmem:[%s564 + $0x2c] sm:$0xf]
      %v645 = vld [vmem:[%s564 + $0x30] sm:$0xf]
      %v646 = vld [vmem:[%s564 + $0x34] sm:$0xf]
      %v647 = vld [vmem:[%s564 + $0x38] sm:$0xf]
      %v648 = vld [vmem:[%s564 + $0x3c] sm:$0xf]
      %v649 = vld [vmem:[%s564 + $0x40] sm:$0xf]
      %v650 = vld [vmem:[%s564 + $0x44] sm:$0xf]
      %v651 = vld [vmem:[%s564 + $0x48] sm:$0xf]
      %v652 = vld [vmem:[%s564 + $0x4c] sm:$0xf]
      %v653 = vld [vmem:[%s564 + $0x50] sm:$0xf]
      %v654 = vld [vmem:[%s564 + $0x54] sm:$0xf]
      %v655 = vld [vmem:[%s564 + $0x58] sm:$0xf]
      %v656 = vld [vmem:[%s564 + $0x5c] sm:$0xf]
      %v657 = vld [vmem:[%s564 + $0x60] sm:$0xf]
      %v658 = vld [vmem:[%s564 + $0x64] sm:$0xf]
      %v659 = vld [vmem:[%s564 + $0x68] sm:$0xf]
      %v660 = vld [vmem:[%s564 + $0x6c] sm:$0xf]
      %v661 = vld [vmem:[%s564 + $0x70] sm:$0xf]
      %v662 = vld [vmem:[%s564 + $0x74] sm:$0xf]
      %v663 = vld [vmem:[%s564 + $0x78] sm:$0xf]
      %v664 = vld [vmem:[%s564 + $0x7c] sm:$0xf]
      %v665 = vld [vmem:[%s1] sm:$0xf]
      %v666 = vld [vmem:[%s1 + $0x4] sm:$0xf]
      %v667 = vld [vmem:[%s1 + $0x8] sm:$0xf]
      %v668 = vld [vmem:[%s1 + $0xc] sm:$0xf]
      %v669 = vld [vmem:[%s1 + $0x10] sm:$0xf]
      %v670 = vld [vmem:[%s1 + $0x14] sm:$0xf]
      %v703 = vunpack.c.l.b16 %v633
      %v704 = vunpack.c.l.b16 %v634
      %v705 = vunpack.c.l.b16 %v635
      %v706 = vunpack.c.l.b16 %v636
      %v707 = vunpack.c.l.b16 %v637
      %v708 = vunpack.c.l.b16 %v638
      %v709 = vunpack.c.l.b16 %v639
      %v710 = vunpack.c.l.b16 %v640
      %v711 = vunpack.c.l.b16 %v641
      %v712 = vunpack.c.l.b16 %v642
      %v713 = vunpack.c.l.b16 %v643
      %v714 = vunpack.c.l.b16 %v644
      %v715 = vunpack.c.l.b16 %v645
      %v716 = vunpack.c.l.b16 %v646
      %v717 = vunpack.c.l.b16 %v647
      %v718 = vunpack.c.l.b16 %v648
      %v719 = vunpack.c.l.b16 %v649
      %v720 = vunpack.c.l.b16 %v650
      %v721 = vunpack.c.l.b16 %v651
      %v722 = vunpack.c.l.b16 %v652
      %v723 = vunpack.c.l.b16 %v653
      %v724 = vunpack.c.l.b16 %v654
      %v725 = vunpack.c.l.b16 %v655
      %v726 = vunpack.c.l.b16 %v656
      %v727 = vunpack.c.l.b16 %v657
      %v728 = vunpack.c.l.b16 %v658
      %v729 = vunpack.c.l.b16 %v659
      %v730 = vunpack.c.l.b16 %v660
      %v731 = vunpack.c.l.b16 %v661
      %v732 = vunpack.c.l.b16 %v662
      %v733 = vunpack.c.l.b16 %v663
      %v734 = vunpack.c.l.b16 %v664
      %v735 = vpack.c.b16 %v704, %v703
      %v736 = vpack.c.b16 %v706, %v705
      %v737 = vpack.c.b16 %v708, %v707
      %v738 = vpack.c.b16 %v710, %v709
      %v739 = vpack.c.b16 %v712, %v711
      %v740 = vpack.c.b16 %v714, %v713
      %v741 = vpack.c.b16 %v716, %v715
      %v742 = vpack.c.b16 %v718, %v717
      %v743 = vpack.c.b16 %v720, %v719
      %v744 = vpack.c.b16 %v722, %v721
      %v745 = vpack.c.b16 %v724, %v723
      %v746 = vpack.c.b16 %v726, %v725
      %v747 = vpack.c.b16 %v728, %v727
      %v748 = vpack.c.b16 %v730, %v729
      %v749 = vpack.c.b16 %v732, %v731
      %v750 = vpack.c.b16 %v734, %v733
      %v757 = vunpack.c.l.b16 %v665
      %v758 = vunpack.c.l.b16 %v666
      %v759 = vunpack.c.l.b16 %v667
      %v760 = vunpack.c.l.b16 %v668
      %v761 = vunpack.c.l.b16 %v669
      %v762 = vunpack.c.l.b16 %v670
      %v763 = vpack.c.b16 %v758, %v757
      %v764 = vpack.c.b16 %v760, %v759
      %v765 = vpack.c.b16 %v762, %v761
      %vm769 = vcmask 392192
      %v771 = vsel %vm769, %v735, 0
      %v774 = vsel %vm769, %v736, 0
      %v777 = vsel %vm769, %v737, 0
      %v780 = vsel %vm769, %v738, 0
      %v783 = vsel %vm769, %v739, 0
      %v786 = vsel %vm769, %v740, 0
      %v789 = vsel %vm769, %v741, 0
      %v792 = vsel %vm769, %v742, 0
      %v795 = vsel %vm769, %v743, 0
      %v798 = vsel %vm769, %v744, 0
      %v801 = vsel %vm769, %v745, 0
      %v804 = vsel %vm769, %v746, 0
      %v807 = vsel %vm769, %v747, 0
      %v810 = vsel %vm769, %v748, 0
      %v813 = vsel %vm769, %v749, 0
      %v816 = vsel %vm769, %v750, 0
      %818 = vmatprep.subr.bf16.mxu0 0
      %819 = vmatpush1.bf16.msra.mxu0 0
      %820 = vmatprep.subr.bf16.mxu0 0
      %821 = vmatpush1.bf16.msra.mxu0 0
      %822 = vmatprep.subr.bf16.mxu0 0
      %823 = vmatpush1.bf16.msra.mxu0 0
      %824 = vmatprep.subr.bf16.mxu0 0
      %825 = vmatpush1.bf16.msra.mxu0 0
      %826 = vmatprep.subr.bf16.mxu0 0
      %827 = vmatpush1.bf16.msra.mxu0 0
      %828 = vmatprep.subr.bf16.mxu0 0
      %829 = vmatpush1.bf16.msra.mxu0 %v765
      %830 = vmatprep.subr.bf16.mxu0 0
      %831 = vmatpush1.bf16.msra.mxu0 %v764
      %832 = vmatprep.subr.bf16.mxu0 0
      %833 = vmatpush1.bf16.msra.mxu0 %v763
      %834 = vmatprep.subr.bf16.mxu0 0
      %835 = vmatpush2.bf16.msra.mxu0 0
      %836 = vmatprep.subr.bf16.mxu0 0
      %837 = vmatpush2.bf16.msra.mxu0 0
      %838 = vmatprep.subr.bf16.mxu0 0
      %839 = vmatpush2.bf16.msra.mxu0 0
      %840 = vmatprep.subr.bf16.mxu0 0
      %841 = vmatpush2.bf16.msra.mxu0 0
      %842 = vmatprep.subr.bf16.mxu0 0
      %843 = vmatpush2.bf16.msra.mxu0 0
      %844 = vmatprep.subr.bf16.mxu0 0
      %845 = vmatpush2.bf16.msra.mxu0 0
      %846 = vmatprep.subr.bf16.mxu0 0
      %847 = vmatpush2.bf16.msra.mxu0 0
      %848 = vmatprep.subr.bf16.mxu0 0
      %849 = vmatpush2.bf16.msra.mxu0 0
      %850 = vmatprep.mubr.bf16.mxu0 0
      %851 = vmatmul.mubr.bf16.gmra.mxu0 %v771
      %v852 = vpop.f32.mrf.mxu0
      %v853 = vadd.f32 0.0, %v852
      %v854 = vpop.f32.mrf.mxu0
      %v855 = vpop.f32.mrf.mxu0
      %v856 = vadd.f32 0.0, %v855
      %v857 = vpop.f32.mrf.mxu0
      %858 = vmatprep.mubr.bf16.mxu0 0
      %859 = vmatmul.mubr.bf16.gmra.mxu0 %v774
      %v860 = vpop.f32.mrf.mxu0
      %v861 = vadd.f32 0.0, %v860
      %v862 = vpop.f32.mrf.mxu0
      %v863 = vpop.f32.mrf.mxu0
      %v864 = vadd.f32 0.0, %v863
      %v865 = vpop.f32.mrf.mxu0
      %866 = vmatprep.mubr.bf16.mxu0 0
      %867 = vmatmul.mubr.bf16.gmra.mxu0 %v777
      %v868 = vpop.f32.mrf.mxu0
      %v869 = vadd.f32 0.0, %v868
      %v870 = vpop.f32.mrf.mxu0
      %v871 = vpop.f32.mrf.mxu0
      %v872 = vadd.f32 0.0, %v871
      %v873 = vpop.f32.mrf.mxu0
      %874 = vmatprep.mubr.bf16.mxu0 0
      %875 = vmatmul.mubr.bf16.gmra.mxu0 %v780
      %v876 = vpop.f32.mrf.mxu0
      %v877 = vadd.f32 0.0, %v876
      %v878 = vpop.f32.mrf.mxu0
      %v879 = vpop.f32.mrf.mxu0
      %v880 = vadd.f32 0.0, %v879
      %v881 = vpop.f32.mrf.mxu0
      %882 = vmatprep.mubr.bf16.mxu0 0
      %883 = vmatmul.mubr.bf16.gmra.mxu0 %v783
      %v884 = vpop.f32.mrf.mxu0
      %v885 = vadd.f32 0.0, %v884
      %v886 = vpop.f32.mrf.mxu0
      %v887 = vpop.f32.mrf.mxu0
      %v888 = vadd.f32 0.0, %v887
      %v889 = vpop.f32.mrf.mxu0
      %890 = vmatprep.mubr.bf16.mxu0 0
      %891 = vmatmul.mubr.bf16.gmra.mxu0 %v786
      %v892 = vpop.f32.mrf.mxu0
      %v893 = vadd.f32 0.0, %v892
      %v894 = vpop.f32.mrf.mxu0
      %v895 = vpop.f32.mrf.mxu0
      %v896 = vadd.f32 0.0, %v895
      %v897 = vpop.f32.mrf.mxu0
      %898 = vmatprep.mubr.bf16.mxu0 0
      %899 = vmatmul.mubr.bf16.gmra.mxu0 %v789
      %v900 = vpop.f32.mrf.mxu0
      %v901 = vadd.f32 0.0, %v900
      %v902 = vpop.f32.mrf.mxu0
      %v903 = vpop.f32.mrf.mxu0
      %v904 = vadd.f32 0.0, %v903
      %v905 = vpop.f32.mrf.mxu0
      %906 = vmatprep.mubr.bf16.mxu0 0
      %907 = vmatmul.mubr.bf16.gmra.mxu0 %v792
      %v908 = vpop.f32.mrf.mxu0
      %v909 = vadd.f32 0.0, %v908
      %v910 = vpop.f32.mrf.mxu0
      %v911 = vpop.f32.mrf.mxu0
      %v912 = vadd.f32 0.0, %v911
      %v913 = vpop.f32.mrf.mxu0
      %914 = vmatprep.mubr.bf16.mxu0 0
      %915 = vmatmul.mubr.bf16.gmra.mxu0 %v795
      %v916 = vpop.f32.mrf.mxu0
      %v917 = vadd.f32 0.0, %v916
      %v918 = vpop.f32.mrf.mxu0
      %v919 = vpop.f32.mrf.mxu0
      %v920 = vadd.f32 0.0, %v919
      %v921 = vpop.f32.mrf.mxu0
      %922 = vmatprep.mubr.bf16.mxu0 0
      %923 = vmatmul.mubr.bf16.gmra.mxu0 %v798
      %v924 = vpop.f32.mrf.mxu0
      %v925 = vadd.f32 0.0, %v924
      %v926 = vpop.f32.mrf.mxu0
      %v927 = vpop.f32.mrf.mxu0
      %v928 = vadd.f32 0.0, %v927
      %v929 = vpop.f32.mrf.mxu0
      %930 = vmatprep.mubr.bf16.mxu0 0
      %931 = vmatmul.mubr.bf16.gmra.mxu0 %v801
      %v932 = vpop.f32.mrf.mxu0
      %v933 = vadd.f32 0.0, %v932
      %v934 = vpop.f32.mrf.mxu0
      %v935 = vpop.f32.mrf.mxu0
      %v936 = vadd.f32 0.0, %v935
      %v937 = vpop.f32.mrf.mxu0
      %938 = vmatprep.mubr.bf16.mxu0 0
      %939 = vmatmul.mubr.bf16.gmra.mxu0 %v804
      %v940 = vpop.f32.mrf.mxu0
      %v941 = vadd.f32 0.0, %v940
      %v942 = vpop.f32.mrf.mxu0
      %v943 = vpop.f32.mrf.mxu0
      %v944 = vadd.f32 0.0, %v943
      %v945 = vpop.f32.mrf.mxu0
      %946 = vmatprep.mubr.bf16.mxu0 0
      %947 = vmatmul.mubr.bf16.gmra.mxu0 %v807
      %v948 = vpop.f32.mrf.mxu0
      %v949 = vadd.f32 0.0, %v948
      %v950 = vpop.f32.mrf.mxu0
      %v951 = vpop.f32.mrf.mxu0
      %v952 = vadd.f32 0.0, %v951
      %v953 = vpop.f32.mrf.mxu0
      %954 = vmatprep.mubr.bf16.mxu0 0
      %955 = vmatmul.mubr.bf16.gmra.mxu0 %v810
      %v956 = vpop.f32.mrf.mxu0
      %v957 = vadd.f32 0.0, %v956
      %v958 = vpop.f32.mrf.mxu0
      %v959 = vpop.f32.mrf.mxu0
      %v960 = vadd.f32 0.0, %v959
      %v961 = vpop.f32.mrf.mxu0
      %962 = vmatprep.mubr.bf16.mxu0 0
      %963 = vmatmul.mubr.bf16.gmra.mxu0 %v813
      %v964 = vpop.f32.mrf.mxu0
      %v965 = vadd.f32 0.0, %v964
      %v966 = vpop.f32.mrf.mxu0
      %v967 = vpop.f32.mrf.mxu0
      %v968 = vadd.f32 0.0, %v967
      %v969 = vpop.f32.mrf.mxu0
      %970 = vmatprep.mubr.bf16.mxu0 0
      %971 = vmatmul.mubr.bf16.gmra.mxu0 %v816
      %v972 = vpop.f32.mrf.mxu0
      %v973 = vadd.f32 0.0, %v972
      %v974 = vpop.f32.mrf.mxu0
      %v975 = vpop.f32.mrf.mxu0
      %v976 = vadd.f32 0.0, %v975
      %v977 = vpop.f32.mrf.mxu0
      %978 = vdwg.mxu0
      %v979 = vpack.c.bf16 %v856, %v853
      %v980 = vpack.c.bf16 %v864, %v861
      %v981 = vpack.c.bf16 %v872, %v869
      %v982 = vpack.c.bf16 %v880, %v877
      %v983 = vpack.c.bf16 %v888, %v885
      %v984 = vpack.c.bf16 %v896, %v893
      %v985 = vpack.c.bf16 %v904, %v901
      %v986 = vpack.c.bf16 %v912, %v909
      %v987 = vpack.c.bf16 %v920, %v917
      %v988 = vpack.c.bf16 %v928, %v925
      %v989 = vpack.c.bf16 %v936, %v933
      %v990 = vpack.c.bf16 %v944, %v941
      %v991 = vpack.c.bf16 %v952, %v949
      %v992 = vpack.c.bf16 %v960, %v957
      %v993 = vpack.c.bf16 %v968, %v965
      %v994 = vpack.c.bf16 %v976, %v973
      %v995 = vld [vmem:[%s2] sm:$0xf]
      %v996 = vld [vmem:[%s2 + $0x4] sm:$0xf]
      %v999 = vunpack.c.l.b16 %v995
      %v1000 = vunpack.c.l.b16 %v996
      %v1001 = vpack.c.b16 %v1000, %v999
      %vm1003 = vcmask 130048
      %v1005 = vsel %vm1003, %v979, 0
      %v1008 = vsel %vm1003, %v980, 0
      %v1011 = vsel %vm1003, %v981, 0
      %v1014 = vsel %vm1003, %v982, 0
      %v1017 = vsel %vm1003, %v983, 0
      %v1020 = vsel %vm1003, %v984, 0
      %v1023 = vsel %vm1003, %v985, 0
      %v1026 = vsel %vm1003, %v986, 0
      %v1029 = vsel %vm1003, %v987, 0
      %v1032 = vsel %vm1003, %v988, 0
      %v1035 = vsel %vm1003, %v989, 0
      %v1038 = vsel %vm1003, %v990, 0
      %v1041 = vsel %vm1003, %v991, 0
      %v1044 = vsel %vm1003, %v992, 0
      %v1047 = vsel %vm1003, %v993, 0
      %v1050 = vsel %vm1003, %v994, 0
      %1052 = vmatprep.subr.bf16.mxu0 0
      %1053 = vmatpush1.bf16.msra.mxu0 0
      %1054 = vmatprep.subr.bf16.mxu0 0
      %1055 = vmatpush1.bf16.msra.mxu0 0
      %1056 = vmatprep.subr.bf16.mxu0 0
      %1057 = vmatpush1.bf16.msra.mxu0 0
      %1058 = vmatprep.subr.bf16.mxu0 0
      %1059 = vmatpush1.bf16.msra.mxu0 0
      %1060 = vmatprep.subr.bf16.mxu0 0
      %1061 = vmatpush1.bf16.msra.mxu0 0
      %1062 = vmatprep.subr.bf16.mxu0 0
      %1063 = vmatpush1.bf16.msra.mxu0 0
      %1064 = vmatprep.subr.bf16.mxu0 0
      %1065 = vmatpush1.bf16.msra.mxu0 0
      %1066 = vmatprep.subr.bf16.mxu0 0
      %1067 = vmatpush1.bf16.msra.mxu0 %v1001
      %1068 = vmatprep.subr.bf16.mxu0 0
      %1069 = vmatpush2.bf16.msra.mxu0 0
      %1070 = vmatprep.subr.bf16.mxu0 0
      %1071 = vmatpush2.bf16.msra.mxu0 0
      %1072 = vmatprep.subr.bf16.mxu0 0
      %1073 = vmatpush2.bf16.msra.mxu0 0
      %1074 = vmatprep.subr.bf16.mxu0 0
      %1075 = vmatpush2.bf16.msra.mxu0 0
      %1076 = vmatprep.subr.bf16.mxu0 0
      %1077 = vmatpush2.bf16.msra.mxu0 0
      %1078 = vmatprep.subr.bf16.mxu0 0
      %1079 = vmatpush2.bf16.msra.mxu0 0
      %1080 = vmatprep.subr.bf16.mxu0 0
      %1081 = vmatpush2.bf16.msra.mxu0 0
      %1082 = vmatprep.subr.bf16.mxu0 0
      %1083 = vmatpush2.bf16.msra.mxu0 0
      %1084 = vmatprep.mubr.bf16.mxu0 0
      %1085 = vmatmul.mubr.bf16.gmra.mxu0 %v1005
      %v1086 = vpop.f32.mrf.mxu0
      %v1087 = vadd.f32 0.0, %v1086
      %v1088 = vpop.f32.mrf.mxu0
      %v1089 = vpop.f32.mrf.mxu0
      %v1090 = vadd.f32 0.0, %v1089
      %v1091 = vpop.f32.mrf.mxu0
      %1092 = vmatprep.mubr.bf16.mxu0 0
      %1093 = vmatmul.mubr.bf16.gmra.mxu0 %v1008
      %v1094 = vpop.f32.mrf.mxu0
      %v1095 = vadd.f32 0.0, %v1094
      %v1096 = vpop.f32.mrf.mxu0
      %v1097 = vpop.f32.mrf.mxu0
      %v1098 = vadd.f32 0.0, %v1097
      %v1099 = vpop.f32.mrf.mxu0
      %1100 = vmatprep.mubr.bf16.mxu0 0
      %1101 = vmatmul.mubr.bf16.gmra.mxu0 %v1011
      %v1102 = vpop.f32.mrf.mxu0
      %v1103 = vadd.f32 0.0, %v1102
      %v1104 = vpop.f32.mrf.mxu0
      %v1105 = vpop.f32.mrf.mxu0
      %v1106 = vadd.f32 0.0, %v1105
      %v1107 = vpop.f32.mrf.mxu0
      %1108 = vmatprep.mubr.bf16.mxu0 0
      %1109 = vmatmul.mubr.bf16.gmra.mxu0 %v1014
      %v1110 = vpop.f32.mrf.mxu0
      %v1111 = vadd.f32 0.0, %v1110
      %v1112 = vpop.f32.mrf.mxu0
      %v1113 = vpop.f32.mrf.mxu0
      %v1114 = vadd.f32 0.0, %v1113
      %v1115 = vpop.f32.mrf.mxu0
      %1116 = vmatprep.mubr.bf16.mxu0 0
      %1117 = vmatmul.mubr.bf16.gmra.mxu0 %v1017
      %v1118 = vpop.f32.mrf.mxu0
      %v1119 = vadd.f32 0.0, %v1118
      %v1120 = vpop.f32.mrf.mxu0
      %v1121 = vpop.f32.mrf.mxu0
      %v1122 = vadd.f32 0.0, %v1121
      %v1123 = vpop.f32.mrf.mxu0
      %1124 = vmatprep.mubr.bf16.mxu0 0
      %1125 = vmatmul.mubr.bf16.gmra.mxu0 %v1020
      %v1126 = vpop.f32.mrf.mxu0
      %v1127 = vadd.f32 0.0, %v1126
      %v1128 = vpop.f32.mrf.mxu0
      %v1129 = vpop.f32.mrf.mxu0
      %v1130 = vadd.f32 0.0, %v1129
      %v1131 = vpop.f32.mrf.mxu0
      %1132 = vmatprep.mubr.bf16.mxu0 0
      %1133 = vmatmul.mubr.bf16.gmra.mxu0 %v1023
      %v1134 = vpop.f32.mrf.mxu0
      %v1135 = vadd.f32 0.0, %v1134
      %v1136 = vpop.f32.mrf.mxu0
      %v1137 = vpop.f32.mrf.mxu0
      %v1138 = vadd.f32 0.0, %v1137
      %v1139 = vpop.f32.mrf.mxu0
      %1140 = vmatprep.mubr.bf16.mxu0 0
      %1141 = vmatmul.mubr.bf16.gmra.mxu0 %v1026
      %v1142 = vpop.f32.mrf.mxu0
      %v1143 = vadd.f32 0.0, %v1142
      %v1144 = vpop.f32.mrf.mxu0
      %v1145 = vpop.f32.mrf.mxu0
      %v1146 = vadd.f32 0.0, %v1145
      %v1147 = vpop.f32.mrf.mxu0
      %1148 = vmatprep.mubr.bf16.mxu0 0
      %1149 = vmatmul.mubr.bf16.gmra.mxu0 %v1029
      %v1150 = vpop.f32.mrf.mxu0
      %v1151 = vadd.f32 0.0, %v1150
      %v1152 = vpop.f32.mrf.mxu0
      %v1153 = vpop.f32.mrf.mxu0
      %v1154 = vadd.f32 0.0, %v1153
      %v1155 = vpop.f32.mrf.mxu0
      %1156 = vmatprep.mubr.bf16.mxu0 0
      %1157 = vmatmul.mubr.bf16.gmra.mxu0 %v1032
      %v1158 = vpop.f32.mrf.mxu0
      %v1159 = vadd.f32 0.0, %v1158
      %v1160 = vpop.f32.mrf.mxu0
      %v1161 = vpop.f32.mrf.mxu0
      %v1162 = vadd.f32 0.0, %v1161
      %v1163 = vpop.f32.mrf.mxu0
      %1164 = vmatprep.mubr.bf16.mxu0 0
      %1165 = vmatmul.mubr.bf16.gmra.mxu0 %v1035
      %v1166 = vpop.f32.mrf.mxu0
      %v1167 = vadd.f32 0.0, %v1166
      %v1168 = vpop.f32.mrf.mxu0
      %v1169 = vpop.f32.mrf.mxu0
      %v1170 = vadd.f32 0.0, %v1169
      %v1171 = vpop.f32.mrf.mxu0
      %1172 = vmatprep.mubr.bf16.mxu0 0
      %1173 = vmatmul.mubr.bf16.gmra.mxu0 %v1038
      %v1174 = vpop.f32.mrf.mxu0
      %v1175 = vadd.f32 0.0, %v1174
      %v1176 = vpop.f32.mrf.mxu0
      %v1177 = vpop.f32.mrf.mxu0
      %v1178 = vadd.f32 0.0, %v1177
      %v1179 = vpop.f32.mrf.mxu0
      %1180 = vmatprep.mubr.bf16.mxu0 0
      %1181 = vmatmul.mubr.bf16.gmra.mxu0 %v1041
      %v1182 = vpop.f32.mrf.mxu0
      %v1183 = vadd.f32 0.0, %v1182
      %v1184 = vpop.f32.mrf.mxu0
      %v1185 = vpop.f32.mrf.mxu0
      %v1186 = vadd.f32 0.0, %v1185
      %v1187 = vpop.f32.mrf.mxu0
      %1188 = vmatprep.mubr.bf16.mxu0 0
      %1189 = vmatmul.mubr.bf16.gmra.mxu0 %v1044
      %v1190 = vpop.f32.mrf.mxu0
      %v1191 = vadd.f32 0.0, %v1190
      %v1192 = vpop.f32.mrf.mxu0
      %v1193 = vpop.f32.mrf.mxu0
      %v1194 = vadd.f32 0.0, %v1193
      %v1195 = vpop.f32.mrf.mxu0
      %1196 = vmatprep.mubr.bf16.mxu0 0
      %1197 = vmatmul.mubr.bf16.gmra.mxu0 %v1047
      %v1198 = vpop.f32.mrf.mxu0
      %v1199 = vadd.f32 0.0, %v1198
      %v1200 = vpop.f32.mrf.mxu0
      %v1201 = vpop.f32.mrf.mxu0
      %v1202 = vadd.f32 0.0, %v1201
      %v1203 = vpop.f32.mrf.mxu0
      %1204 = vmatprep.mubr.bf16.mxu0 0
      %1205 = vmatmul.mubr.bf16.gmra.mxu0 %v1050
      %v1206 = vpop.f32.mrf.mxu0
      %v1207 = vadd.f32 0.0, %v1206
      %v1208 = vpop.f32.mrf.mxu0
      %v1209 = vpop.f32.mrf.mxu0
      %v1210 = vadd.f32 0.0, %v1209
      %v1211 = vpop.f32.mrf.mxu0
      %1212 = vdwg.mxu0
      %v1213 = vld [vmem:[%s3] sm:$0xf]
      %v1214 = vld [vmem:[%s3 + $0x4] sm:$0xf]
      %1231 = vrot.lane.b32.xlu0 %v979, 106
      %v1232 = vpop.permute.xlu0 %1231
      %1233 = vrot.lane.b32.xlu0 %v980, 106
      %v1234 = vpop.permute.xlu0 %1233
      %1235 = vrot.lane.b32.xlu0 %v981, 106
      %v1236 = vpop.permute.xlu0 %1235
      %1237 = vrot.lane.b32.xlu0 %v982, 106
      %v1238 = vpop.permute.xlu0 %1237
      %1239 = vrot.lane.b32.xlu0 %v983, 106
      %v1240 = vpop.permute.xlu0 %1239
      %1241 = vrot.lane.b32.xlu0 %v984, 106
      %v1242 = vpop.permute.xlu0 %1241
      %1243 = vrot.lane.b32.xlu0 %v985, 106
      %v1244 = vpop.permute.xlu0 %1243
      %1245 = vrot.lane.b32.xlu0 %v986, 106
      %v1246 = vpop.permute.xlu0 %1245
      %1247 = vrot.lane.b32.xlu0 %v987, 106
      %v1248 = vpop.permute.xlu0 %1247
      %1249 = vrot.lane.b32.xlu0 %v988, 106
      %v1250 = vpop.permute.xlu0 %1249
      %1251 = vrot.lane.b32.xlu0 %v989, 106
      %v1252 = vpop.permute.xlu0 %1251
      %1253 = vrot.lane.b32.xlu0 %v990, 106
      %v1254 = vpop.permute.xlu0 %1253
      %1255 = vrot.lane.b32.xlu0 %v991, 106
      %v1256 = vpop.permute.xlu0 %1255
      %1257 = vrot.lane.b32.xlu0 %v992, 106
      %v1258 = vpop.permute.xlu0 %1257
      %1259 = vrot.lane.b32.xlu0 %v993, 106
      %v1260 = vpop.permute.xlu0 %1259
      %1261 = vrot.lane.b32.xlu0 %v994, 106
      %v1262 = vpop.permute.xlu0 %1261
      %v1265 = vunpack.c.l.b16 %v1213
      %v1266 = vunpack.c.l.b16 %v1214
      %v1267 = vpack.c.b16 %v1266, %v1265
      %v1270 = vsel %vm1003, %v1232, 0
      %v1273 = vsel %vm1003, %v1234, 0
      %v1276 = vsel %vm1003, %v1236, 0
      %v1279 = vsel %vm1003, %v1238, 0
      %v1282 = vsel %vm1003, %v1240, 0
      %v1285 = vsel %vm1003, %v1242, 0
      %v1288 = vsel %vm1003, %v1244, 0
      %v1291 = vsel %vm1003, %v1246, 0
      %v1294 = vsel %vm1003, %v1248, 0
      %v1297 = vsel %vm1003, %v1250, 0
      %v1300 = vsel %vm1003, %v1252, 0
      %v1303 = vsel %vm1003, %v1254, 0
      %v1306 = vsel %vm1003, %v1256, 0
      %v1309 = vsel %vm1003, %v1258, 0
      %v1312 = vsel %vm1003, %v1260, 0
      %v1315 = vsel %vm1003, %v1262, 0
      %1317 = vmatprep.subr.bf16.mxu0 0
      %1318 = vmatpush1.bf16.msra.mxu0 0
      %1319 = vmatprep.subr.bf16.mxu0 0
      %1320 = vmatpush1.bf16.msra.mxu0 0
      %1321 = vmatprep.subr.bf16.mxu0 0
      %1322 = vmatpush1.bf16.msra.mxu0 0
      %1323 = vmatprep.subr.bf16.mxu0 0
      %1324 = vmatpush1.bf16.msra.mxu0 0
      %1325 = vmatprep.subr.bf16.mxu0 0
      %1326 = vmatpush1.bf16.msra.mxu0 0
      %1327 = vmatprep.subr.bf16.mxu0 0
      %1328 = vmatpush1.bf16.msra.mxu0 0
      %1329 = vmatprep.subr.bf16.mxu0 0
      %1330 = vmatpush1.bf16.msra.mxu0 0
      %1331 = vmatprep.subr.bf16.mxu0 0
      %1332 = vmatpush1.bf16.msra.mxu0 %v1267
      %1333 = vmatprep.subr.bf16.mxu0 0
      %1334 = vmatpush2.bf16.msra.mxu0 0
      %1335 = vmatprep.subr.bf16.mxu0 0
      %1336 = vmatpush2.bf16.msra.mxu0 0
      %1337 = vmatprep.subr.bf16.mxu0 0
      %1338 = vmatpush2.bf16.msra.mxu0 0
      %1339 = vmatprep.subr.bf16.mxu0 0
      %1340 = vmatpush2.bf16.msra.mxu0 0
      %1341 = vmatprep.subr.bf16.mxu0 0
      %1342 = vmatpush2.bf16.msra.mxu0 0
      %1343 = vmatprep.subr.bf16.mxu0 0
      %1344 = vmatpush2.bf16.msra.mxu0 0
      %1345 = vmatprep.subr.bf16.mxu0 0
      %1346 = vmatpush2.bf16.msra.mxu0 0
      %1347 = vmatprep.subr.bf16.mxu0 0
      %1348 = vmatpush2.bf16.msra.mxu0 0
      %1349 = vmatprep.mubr.bf16.mxu0 0
      %1350 = vmatmul.mubr.bf16.gmra.mxu0 %v1270
      %v1351 = vpop.f32.mrf.mxu0
      %v1352 = vadd.f32 0.0, %v1351
      %v1353 = vpop.f32.mrf.mxu0
      %v1354 = vpop.f32.mrf.mxu0
      %v1355 = vadd.f32 0.0, %v1354
      %v1356 = vpop.f32.mrf.mxu0
      %1357 = vmatprep.mubr.bf16.mxu0 0
      %1358 = vmatmul.mubr.bf16.gmra.mxu0 %v1273
      %v1359 = vpop.f32.mrf.mxu0
      %v1360 = vadd.f32 0.0, %v1359
      %v1361 = vpop.f32.mrf.mxu0
      %v1362 = vpop.f32.mrf.mxu0
      %v1363 = vadd.f32 0.0, %v1362
      %v1364 = vpop.f32.mrf.mxu0
      %1365 = vmatprep.mubr.bf16.mxu0 0
      %1366 = vmatmul.mubr.bf16.gmra.mxu0 %v1276
      %v1367 = vpop.f32.mrf.mxu0
      %v1368 = vadd.f32 0.0, %v1367
      %v1369 = vpop.f32.mrf.mxu0
      %v1370 = vpop.f32.mrf.mxu0
      %v1371 = vadd.f32 0.0, %v1370
      %v1372 = vpop.f32.mrf.mxu0
      %1373 = vmatprep.mubr.bf16.mxu0 0
      %1374 = vmatmul.mubr.bf16.gmra.mxu0 %v1279
      %v1375 = vpop.f32.mrf.mxu0
      %v1376 = vadd.f32 0.0, %v1375
      %v1377 = vpop.f32.mrf.mxu0
      %v1378 = vpop.f32.mrf.mxu0
      %v1379 = vadd.f32 0.0, %v1378
      %v1380 = vpop.f32.mrf.mxu0
      %1381 = vmatprep.mubr.bf16.mxu0 0
      %1382 = vmatmul.mubr.bf16.gmra.mxu0 %v1282
      %v1383 = vpop.f32.mrf.mxu0
      %v1384 = vadd.f32 0.0, %v1383
      %v1385 = vpop.f32.mrf.mxu0
      %v1386 = vpop.f32.mrf.mxu0
      %v1387 = vadd.f32 0.0, %v1386
      %v1388 = vpop.f32.mrf.mxu0
      %1389 = vmatprep.mubr.bf16.mxu0 0
      %1390 = vmatmul.mubr.bf16.gmra.mxu0 %v1285
      %v1391 = vpop.f32.mrf.mxu0
      %v1392 = vadd.f32 0.0, %v1391
      %v1393 = vpop.f32.mrf.mxu0
      %v1394 = vpop.f32.mrf.mxu0
      %v1395 = vadd.f32 0.0, %v1394
      %v1396 = vpop.f32.mrf.mxu0
      %1397 = vmatprep.mubr.bf16.mxu0 0
      %1398 = vmatmul.mubr.bf16.gmra.mxu0 %v1288
      %v1399 = vpop.f32.mrf.mxu0
      %v1400 = vadd.f32 0.0, %v1399
      %v1401 = vpop.f32.mrf.mxu0
      %v1402 = vpop.f32.mrf.mxu0
      %v1403 = vadd.f32 0.0, %v1402
      %v1404 = vpop.f32.mrf.mxu0
      %1405 = vmatprep.mubr.bf16.mxu0 0
      %1406 = vmatmul.mubr.bf16.gmra.mxu0 %v1291
      %v1407 = vpop.f32.mrf.mxu0
      %v1408 = vadd.f32 0.0, %v1407
      %v1409 = vpop.f32.mrf.mxu0
      %v1410 = vpop.f32.mrf.mxu0
      %v1411 = vadd.f32 0.0, %v1410
      %v1412 = vpop.f32.mrf.mxu0
      %1413 = vmatprep.mubr.bf16.mxu0 0
      %1414 = vmatmul.mubr.bf16.gmra.mxu0 %v1294
      %v1415 = vpop.f32.mrf.mxu0
      %v1416 = vadd.f32 0.0, %v1415
      %v1417 = vpop.f32.mrf.mxu0
      %v1418 = vpop.f32.mrf.mxu0
      %v1419 = vadd.f32 0.0, %v1418
      %v1420 = vpop.f32.mrf.mxu0
      %1421 = vmatprep.mubr.bf16.mxu0 0
      %1422 = vmatmul.mubr.bf16.gmra.mxu0 %v1297
      %v1423 = vpop.f32.mrf.mxu0
      %v1424 = vadd.f32 0.0, %v1423
      %v1425 = vpop.f32.mrf.mxu0
      %v1426 = vpop.f32.mrf.mxu0
      %v1427 = vadd.f32 0.0, %v1426
      %v1428 = vpop.f32.mrf.mxu0
      %1429 = vmatprep.mubr.bf16.mxu0 0
      %1430 = vmatmul.mubr.bf16.gmra.mxu0 %v1300
      %v1431 = vpop.f32.mrf.mxu0
      %v1432 = vadd.f32 0.0, %v1431
      %v1433 = vpop.f32.mrf.mxu0
      %v1434 = vpop.f32.mrf.mxu0
      %v1435 = vadd.f32 0.0, %v1434
      %v1436 = vpop.f32.mrf.mxu0
      %1437 = vmatprep.mubr.bf16.mxu0 0
      %1438 = vmatmul.mubr.bf16.gmra.mxu0 %v1303
      %v1439 = vpop.f32.mrf.mxu0
      %v1440 = vadd.f32 0.0, %v1439
      %v1441 = vpop.f32.mrf.mxu0
      %v1442 = vpop.f32.mrf.mxu0
      %v1443 = vadd.f32 0.0, %v1442
      %v1444 = vpop.f32.mrf.mxu0
      %1445 = vmatprep.mubr.bf16.mxu0 0
      %1446 = vmatmul.mubr.bf16.gmra.mxu0 %v1306
      %v1447 = vpop.f32.mrf.mxu0
      %v1448 = vadd.f32 0.0, %v1447
      %v1449 = vpop.f32.mrf.mxu0
      %v1450 = vpop.f32.mrf.mxu0
      %v1451 = vadd.f32 0.0, %v1450
      %v1452 = vpop.f32.mrf.mxu0
      %1453 = vmatprep.mubr.bf16.mxu0 0
      %1454 = vmatmul.mubr.bf16.gmra.mxu0 %v1309
      %v1455 = vpop.f32.mrf.mxu0
      %v1456 = vadd.f32 0.0, %v1455
      %v1457 = vpop.f32.mrf.mxu0
      %v1458 = vpop.f32.mrf.mxu0
      %v1459 = vadd.f32 0.0, %v1458
      %v1460 = vpop.f32.mrf.mxu0
      %1461 = vmatprep.mubr.bf16.mxu0 0
      %1462 = vmatmul.mubr.bf16.gmra.mxu0 %v1312
      %v1463 = vpop.f32.mrf.mxu0
      %v1464 = vadd.f32 0.0, %v1463
      %v1465 = vpop.f32.mrf.mxu0
      %v1466 = vpop.f32.mrf.mxu0
      %v1467 = vadd.f32 0.0, %v1466
      %v1468 = vpop.f32.mrf.mxu0
      %1469 = vmatprep.mubr.bf16.mxu0 0
      %1470 = vmatmul.mubr.bf16.gmra.mxu0 %v1315
      %v1471 = vpop.f32.mrf.mxu0
      %v1472 = vadd.f32 0.0, %v1471
      %v1473 = vpop.f32.mrf.mxu0
      %v1474 = vpop.f32.mrf.mxu0
      %v1475 = vadd.f32 0.0, %v1474
      %v1476 = vpop.f32.mrf.mxu0
      %1477 = vdwg.mxu0
      %v1478 = vld [vmem:[%s570] sm:$0xff]
      %v1479 = vld [vmem:[%s570 + $0x8] sm:$0xff]
      %v1480 = vld [vmem:[%s570 + $0x10] sm:$0xff]
      %v1481 = vld [vmem:[%s570 + $0x18] sm:$0xff]
      %v1482 = vld [vmem:[%s570 + $0x20] sm:$0xff]
      %v1483 = vld [vmem:[%s570 + $0x28] sm:$0xff]
      %v1484 = vld [vmem:[%s570 + $0x30] sm:$0xff]
      %v1485 = vld [vmem:[%s570 + $0x38] sm:$0xff]
      %v1486 = vld [vmem:[%s570 + $0x40] sm:$0xff]
      %v1487 = vld [vmem:[%s570 + $0x48] sm:$0xff]
      %v1488 = vld [vmem:[%s570 + $0x50] sm:$0xff]
      %v1489 = vld [vmem:[%s570 + $0x58] sm:$0xff]
      %v1490 = vld [vmem:[%s570 + $0x60] sm:$0xff]
      %v1491 = vld [vmem:[%s570 + $0x68] sm:$0xff]
      %v1492 = vld [vmem:[%s570 + $0x70] sm:$0xff]
      %v1493 = vld [vmem:[%s570 + $0x78] sm:$0xff]
      %v1494 = vld [vmem:[%s570 + $0x80] sm:$0xff]
      %v1495 = vld [vmem:[%s570 + $0x88] sm:$0xff]
      %v1496 = vld [vmem:[%s570 + $0x90] sm:$0xff]
      %v1497 = vld [vmem:[%s570 + $0x98] sm:$0xff]
      %v1498 = vld [vmem:[%s570 + $0xa0] sm:$0xff]
      %v1499 = vld [vmem:[%s570 + $0xa8] sm:$0xff]
      %v1500 = vld [vmem:[%s570 + $0xb0] sm:$0xff]
      %v1501 = vld [vmem:[%s570 + $0xb8] sm:$0xff]
      %v1502 = vld [vmem:[%s570 + $0xc0] sm:$0xff]
      %v1503 = vld [vmem:[%s570 + $0xc8] sm:$0xff]
      %v1504 = vld [vmem:[%s570 + $0xd0] sm:$0xff]
      %v1505 = vld [vmem:[%s570 + $0xd8] sm:$0xff]
      %v1506 = vld [vmem:[%s570 + $0xe0] sm:$0xff]
      %v1507 = vld [vmem:[%s570 + $0xe8] sm:$0xff]
      %v1508 = vld [vmem:[%s570 + $0xf0] sm:$0xff]
      %v1509 = vld [vmem:[%s570 + $0xf8] sm:$0xff]
      %v1510 = vld [vmem:[%s576] sm:$0xff]
      %v1511 = vld [vmem:[%s576 + $0x8] sm:$0xff]
      %v1512 = vld [vmem:[%s576 + $0x10] sm:$0xff]
      %v1513 = vld [vmem:[%s576 + $0x18] sm:$0xff]
      %v1514 = vld [vmem:[%s576 + $0x20] sm:$0xff]
      %v1515 = vld [vmem:[%s576 + $0x28] sm:$0xff]
      %v1516 = vld [vmem:[%s576 + $0x30] sm:$0xff]
      %v1517 = vld [vmem:[%s576 + $0x38] sm:$0xff]
      %v1518 = vld [vmem:[%s576 + $0x40] sm:$0xff]
      %v1519 = vld [vmem:[%s576 + $0x48] sm:$0xff]
      %v1520 = vld [vmem:[%s576 + $0x50] sm:$0xff]
      %v1521 = vld [vmem:[%s576 + $0x58] sm:$0xff]
      %v1522 = vld [vmem:[%s576 + $0x60] sm:$0xff]
      %v1523 = vld [vmem:[%s576 + $0x68] sm:$0xff]
      %v1524 = vld [vmem:[%s576 + $0x70] sm:$0xff]
      %v1525 = vld [vmem:[%s576 + $0x78] sm:$0xff]
      %v1526 = vld [vmem:[%s576 + $0x80] sm:$0xff]
      %v1527 = vld [vmem:[%s576 + $0x88] sm:$0xff]
      %v1528 = vld [vmem:[%s576 + $0x90] sm:$0xff]
      %v1529 = vld [vmem:[%s576 + $0x98] sm:$0xff]
      %v1530 = vld [vmem:[%s576 + $0xa0] sm:$0xff]
      %v1531 = vld [vmem:[%s576 + $0xa8] sm:$0xff]
      %v1532 = vld [vmem:[%s576 + $0xb0] sm:$0xff]
      %v1533 = vld [vmem:[%s576 + $0xb8] sm:$0xff]
      %v1534 = vld [vmem:[%s576 + $0xc0] sm:$0xff]
      %v1535 = vld [vmem:[%s576 + $0xc8] sm:$0xff]
      %v1536 = vld [vmem:[%s576 + $0xd0] sm:$0xff]
      %v1537 = vld [vmem:[%s576 + $0xd8] sm:$0xff]
      %v1538 = vld [vmem:[%s576 + $0xe0] sm:$0xff]
      %v1539 = vld [vmem:[%s576 + $0xe8] sm:$0xff]
      %v1540 = vld [vmem:[%s576 + $0xf0] sm:$0xff]
      %v1541 = vld [vmem:[%s576 + $0xf8] sm:$0xff]
      %v1542 = vld [vmem:[%s582] sm:$0xff]
      %v1543 = vld [vmem:[%s582 + $0x8] sm:$0xff]
      %v1544 = vld [vmem:[%s582 + $0x10] sm:$0xff]
      %v1545 = vld [vmem:[%s582 + $0x18] sm:$0xff]
      %v1546 = vld [vmem:[%s582 + $0x20] sm:$0xff]
      %v1547 = vld [vmem:[%s582 + $0x28] sm:$0xff]
      %v1548 = vld [vmem:[%s582 + $0x30] sm:$0xff]
      %v1549 = vld [vmem:[%s582 + $0x38] sm:$0xff]
      %v1550 = vld [vmem:[%s582 + $0x40] sm:$0xff]
      %v1551 = vld [vmem:[%s582 + $0x48] sm:$0xff]
      %v1552 = vld [vmem:[%s582 + $0x50] sm:$0xff]
      %v1553 = vld [vmem:[%s582 + $0x58] sm:$0xff]
      %v1554 = vld [vmem:[%s582 + $0x60] sm:$0xff]
      %v1555 = vld [vmem:[%s582 + $0x68] sm:$0xff]
      %v1556 = vld [vmem:[%s582 + $0x70] sm:$0xff]
      %v1557 = vld [vmem:[%s582 + $0x78] sm:$0xff]
      %v1558 = vld [vmem:[%s582 + $0x80] sm:$0xff]
      %v1559 = vld [vmem:[%s582 + $0x88] sm:$0xff]
      %v1560 = vld [vmem:[%s582 + $0x90] sm:$0xff]
      %v1561 = vld [vmem:[%s582 + $0x98] sm:$0xff]
      %v1562 = vld [vmem:[%s582 + $0xa0] sm:$0xff]
      %v1563 = vld [vmem:[%s582 + $0xa8] sm:$0xff]
      %v1564 = vld [vmem:[%s582 + $0xb0] sm:$0xff]
      %v1565 = vld [vmem:[%s582 + $0xb8] sm:$0xff]
      %v1566 = vld [vmem:[%s582 + $0xc0] sm:$0xff]
      %v1567 = vld [vmem:[%s582 + $0xc8] sm:$0xff]
      %v1568 = vld [vmem:[%s582 + $0xd0] sm:$0xff]
      %v1569 = vld [vmem:[%s582 + $0xd8] sm:$0xff]
      %v1570 = vld [vmem:[%s582 + $0xe0] sm:$0xff]
      %v1571 = vld [vmem:[%s582 + $0xe8] sm:$0xff]
      %v1572 = vld [vmem:[%s582 + $0xf0] sm:$0xff]
      %v1573 = vld [vmem:[%s582 + $0xf8] sm:$0xff]
      %v1574 = vmul.f32 %v1352, %v1478
      %v1575 = vmul.f32 %v1355, %v1479
      %v1576 = vmul.f32 %v1360, %v1480
      %v1577 = vmul.f32 %v1363, %v1481
      %v1578 = vmul.f32 %v1368, %v1482
      %v1579 = vmul.f32 %v1371, %v1483
      %v1580 = vmul.f32 %v1376, %v1484
      %v1581 = vmul.f32 %v1379, %v1485
      %v1582 = vmul.f32 %v1384, %v1486
      %v1583 = vmul.f32 %v1387, %v1487
      %v1584 = vmul.f32 %v1392, %v1488
      %v1585 = vmul.f32 %v1395, %v1489
      %v1586 = vmul.f32 %v1400, %v1490
      %v1587 = vmul.f32 %v1403, %v1491
      %v1588 = vmul.f32 %v1408, %v1492
      %v1589 = vmul.f32 %v1411, %v1493
      %v1590 = vmul.f32 %v1416, %v1494
      %v1591 = vmul.f32 %v1419, %v1495
      %v1592 = vmul.f32 %v1424, %v1496
      %v1593 = vmul.f32 %v1427, %v1497
      %v1594 = vmul.f32 %v1432, %v1498
      %v1595 = vmul.f32 %v1435, %v1499
      %v1596 = vmul.f32 %v1440, %v1500
      %v1597 = vmul.f32 %v1443, %v1501
      %v1598 = vmul.f32 %v1448, %v1502
      %v1599 = vmul.f32 %v1451, %v1503
      %v1600 = vmul.f32 %v1456, %v1504
      %v1601 = vmul.f32 %v1459, %v1505
      %v1602 = vmul.f32 %v1464, %v1506
      %v1603 = vmul.f32 %v1467, %v1507
      %v1604 = vmul.f32 %v1472, %v1508
      %v1605 = vmul.f32 %v1475, %v1509
      %1638 = vrot.lane.b32.xlu0 %v1352, 127
      %v1639 = vpop.permute.xlu0 %1638
      %1640 = vrot.lane.b32.xlu0 %v1355, 127
      %v1641 = vpop.permute.xlu0 %1640
      %1642 = vrot.lane.b32.xlu0 %v1360, 127
      %v1643 = vpop.permute.xlu0 %1642
      %1644 = vrot.lane.b32.xlu0 %v1363, 127
      %v1645 = vpop.permute.xlu0 %1644
      %1646 = vrot.lane.b32.xlu0 %v1368, 127
      %v1647 = vpop.permute.xlu0 %1646
      %1648 = vrot.lane.b32.xlu0 %v1371, 127
      %v1649 = vpop.permute.xlu0 %1648
      %1650 = vrot.lane.b32.xlu0 %v1376, 127
      %v1651 = vpop.permute.xlu0 %1650
      %1652 = vrot.lane.b32.xlu0 %v1379, 127
      %v1653 = vpop.permute.xlu0 %1652
      %1654 = vrot.lane.b32.xlu0 %v1384, 127
      %v1655 = vpop.permute.xlu0 %1654
      %1656 = vrot.lane.b32.xlu0 %v1387, 127
      %v1657 = vpop.permute.xlu0 %1656
      %1658 = vrot.lane.b32.xlu0 %v1392, 127
      %v1659 = vpop.permute.xlu0 %1658
      %1660 = vrot.lane.b32.xlu0 %v1395, 127
      %v1661 = vpop.permute.xlu0 %1660
      %1662 = vrot.lane.b32.xlu0 %v1400, 127
      %v1663 = vpop.permute.xlu0 %1662
      %1664 = vrot.lane.b32.xlu0 %v1403, 127
      %v1665 = vpop.permute.xlu0 %1664
      %1666 = vrot.lane.b32.xlu0 %v1408, 127
      %v1667 = vpop.permute.xlu0 %1666
      %1668 = vrot.lane.b32.xlu0 %v1411, 127
      %v1669 = vpop.permute.xlu0 %1668
      %1670 = vrot.lane.b32.xlu0 %v1416, 127
      %v1671 = vpop.permute.xlu0 %1670
      %1672 = vrot.lane.b32.xlu0 %v1419, 127
      %v1673 = vpop.permute.xlu0 %1672
      %1674 = vrot.lane.b32.xlu0 %v1424, 127
      %v1675 = vpop.permute.xlu0 %1674
      %1676 = vrot.lane.b32.xlu0 %v1427, 127
      %v1677 = vpop.permute.xlu0 %1676
      %1678 = vrot.lane.b32.xlu0 %v1432, 127
      %v1679 = vpop.permute.xlu0 %1678
      %1680 = vrot.lane.b32.xlu0 %v1435, 127
      %v1681 = vpop.permute.xlu0 %1680
      %1682 = vrot.lane.b32.xlu0 %v1440, 127
      %v1683 = vpop.permute.xlu0 %1682
      %1684 = vrot.lane.b32.xlu0 %v1443, 127
      %v1685 = vpop.permute.xlu0 %1684
      %1686 = vrot.lane.b32.xlu0 %v1448, 127
      %v1687 = vpop.permute.xlu0 %1686
      %1688 = vrot.lane.b32.xlu0 %v1451, 127
      %v1689 = vpop.permute.xlu0 %1688
      %1690 = vrot.lane.b32.xlu0 %v1456, 127
      %v1691 = vpop.permute.xlu0 %1690
      %1692 = vrot.lane.b32.xlu0 %v1459, 127
      %v1693 = vpop.permute.xlu0 %1692
      %1694 = vrot.lane.b32.xlu0 %v1464, 127
      %v1695 = vpop.permute.xlu0 %1694
      %1696 = vrot.lane.b32.xlu0 %v1467, 127
      %v1697 = vpop.permute.xlu0 %1696
      %1698 = vrot.lane.b32.xlu0 %v1472, 127
      %v1699 = vpop.permute.xlu0 %1698
      %1700 = vrot.lane.b32.xlu0 %v1475, 127
      %v1701 = vpop.permute.xlu0 %1700
      %1734 = vrot.lane.b32.xlu0 %v1352, 71
      %v1735 = vpop.permute.xlu0 %1734
      %1736 = vrot.lane.b32.xlu0 %v1355, 71
      %v1737 = vpop.permute.xlu0 %1736
      %1738 = vrot.lane.b32.xlu0 %v1360, 71
      %v1739 = vpop.permute.xlu0 %1738
      %1740 = vrot.lane.b32.xlu0 %v1363, 71
      %v1741 = vpop.permute.xlu0 %1740
      %1742 = vrot.lane.b32.xlu0 %v1368, 71
      %v1743 = vpop.permute.xlu0 %1742
      %1744 = vrot.lane.b32.xlu0 %v1371, 71
      %v1745 = vpop.permute.xlu0 %1744
      %1746 = vrot.lane.b32.xlu0 %v1376, 71
      %v1747 = vpop.permute.xlu0 %1746
      %1748 = vrot.lane.b32.xlu0 %v1379, 71
      %v1749 = vpop.permute.xlu0 %1748
      %1750 = vrot.lane.b32.xlu0 %v1384, 71
      %v1751 = vpop.permute.xlu0 %1750
      %1752 = vrot.lane.b32.xlu0 %v1387, 71
      %v1753 = vpop.permute.xlu0 %1752
      %1754 = vrot.lane.b32.xlu0 %v1392, 71
      %v1755 = vpop.permute.xlu0 %1754
      %1756 = vrot.lane.b32.xlu0 %v1395, 71
      %v1757 = vpop.permute.xlu0 %1756
      %1758 = vrot.lane.b32.xlu0 %v1400, 71
      %v1759 = vpop.permute.xlu0 %1758
      %1760 = vrot.lane.b32.xlu0 %v1403, 71
      %v1761 = vpop.permute.xlu0 %1760
      %1762 = vrot.lane.b32.xlu0 %v1408, 71
      %v1763 = vpop.permute.xlu0 %1762
      %1764 = vrot.lane.b32.xlu0 %v1411, 71
      %v1765 = vpop.permute.xlu0 %1764
      %1766 = vrot.lane.b32.xlu0 %v1416, 71
      %v1767 = vpop.permute.xlu0 %1766
      %1768 = vrot.lane.b32.xlu0 %v1419, 71
      %v1769 = vpop.permute.xlu0 %1768
      %1770 = vrot.lane.b32.xlu0 %v1424, 71
      %v1771 = vpop.permute.xlu0 %1770
      %1772 = vrot.lane.b32.xlu0 %v1427, 71
      %v1773 = vpop.permute.xlu0 %1772
      %1774 = vrot.lane.b32.xlu0 %v1432, 71
      %v1775 = vpop.permute.xlu0 %1774
      %1776 = vrot.lane.b32.xlu0 %v1435, 71
      %v1777 = vpop.permute.xlu0 %1776
      %1778 = vrot.lane.b32.xlu0 %v1440, 71
      %v1779 = vpop.permute.xlu0 %1778
      %1780 = vrot.lane.b32.xlu0 %v1443, 71
      %v1781 = vpop.permute.xlu0 %1780
      %1782 = vrot.lane.b32.xlu0 %v1448, 71
      %v1783 = vpop.permute.xlu0 %1782
      %1784 = vrot.lane.b32.xlu0 %v1451, 71
      %v1785 = vpop.permute.xlu0 %1784
      %1786 = vrot.lane.b32.xlu0 %v1456, 71
      %v1787 = vpop.permute.xlu0 %1786
      %1788 = vrot.lane.b32.xlu0 %v1459, 71
      %v1789 = vpop.permute.xlu0 %1788
      %1790 = vrot.lane.b32.xlu0 %v1464, 71
      %v1791 = vpop.permute.xlu0 %1790
      %1792 = vrot.lane.b32.xlu0 %v1467, 71
      %v1793 = vpop.permute.xlu0 %1792
      %1794 = vrot.lane.b32.xlu0 %v1472, 71
      %v1795 = vpop.permute.xlu0 %1794
      %1796 = vrot.lane.b32.xlu0 %v1475, 71
      %v1797 = vpop.permute.xlu0 %1796
      %vm1830 = vcmask 580608
      %v1831 = vsel %vm1830, %v1639, %v1735
      %v1832 = vsel %vm1830, %v1641, %v1737
      %v1833 = vsel %vm1830, %v1643, %v1739
      %v1834 = vsel %vm1830, %v1645, %v1741
      %v1835 = vsel %vm1830, %v1647, %v1743
      %v1836 = vsel %vm1830, %v1649, %v1745
      %v1837 = vsel %vm1830, %v1651, %v1747
      %v1838 = vsel %vm1830, %v1653, %v1749
      %v1839 = vsel %vm1830, %v1655, %v1751
      %v1840 = vsel %vm1830, %v1657, %v1753
      %v1841 = vsel %vm1830, %v1659, %v1755
      %v1842 = vsel %vm1830, %v1661, %v1757
      %v1843 = vsel %vm1830, %v1663, %v1759
      %v1844 = vsel %vm1830, %v1665, %v1761
      %v1845 = vsel %vm1830, %v1667, %v1763
      %v1846 = vsel %vm1830, %v1669, %v1765
      %v1847 = vsel %vm1830, %v1671, %v1767
      %v1848 = vsel %vm1830, %v1673, %v1769
      %v1849 = vsel %vm1830, %v1675, %v1771
      %v1850 = vsel %vm1830, %v1677, %v1773
      %v1851 = vsel %vm1830, %v1679, %v1775
      %v1852 = vsel %vm1830, %v1681, %v1777
      %v1853 = vsel %vm1830, %v1683, %v1779
      %v1854 = vsel %vm1830, %v1685, %v1781
      %v1855 = vsel %vm1830, %v1687, %v1783
      %v1856 = vsel %vm1830, %v1689, %v1785
      %v1857 = vsel %vm1830, %v1691, %v1787
      %v1858 = vsel %vm1830, %v1693, %v1789
      %v1859 = vsel %vm1830, %v1695, %v1791
      %v1860 = vsel %vm1830, %v1697, %v1793
      %v1861 = vsel %vm1830, %v1699, %v1795
      %v1862 = vsel %vm1830, %v1701, %v1797
      %v1863 = vmul.f32 %v1831, %v1510
      %v1864 = vmul.f32 %v1832, %v1511
      %v1865 = vmul.f32 %v1833, %v1512
      %v1866 = vmul.f32 %v1834, %v1513
      %v1867 = vmul.f32 %v1835, %v1514
      %v1868 = vmul.f32 %v1836, %v1515
      %v1869 = vmul.f32 %v1837, %v1516
      %v1870 = vmul.f32 %v1838, %v1517
      %v1871 = vmul.f32 %v1839, %v1518
      %v1872 = vmul.f32 %v1840, %v1519
      %v1873 = vmul.f32 %v1841, %v1520
      %v1874 = vmul.f32 %v1842, %v1521
      %v1875 = vmul.f32 %v1843, %v1522
      %v1876 = vmul.f32 %v1844, %v1523
      %v1877 = vmul.f32 %v1845, %v1524
      %v1878 = vmul.f32 %v1846, %v1525
      %v1879 = vmul.f32 %v1847, %v1526
      %v1880 = vmul.f32 %v1848, %v1527
      %v1881 = vmul.f32 %v1849, %v1528
      %v1882 = vmul.f32 %v1850, %v1529
      %v1883 = vmul.f32 %v1851, %v1530
      %v1884 = vmul.f32 %v1852, %v1531
      %v1885 = vmul.f32 %v1853, %v1532
      %v1886 = vmul.f32 %v1854, %v1533
      %v1887 = vmul.f32 %v1855, %v1534
      %v1888 = vmul.f32 %v1856, %v1535
      %v1889 = vmul.f32 %v1857, %v1536
      %v1890 = vmul.f32 %v1858, %v1537
      %v1891 = vmul.f32 %v1859, %v1538
      %v1892 = vmul.f32 %v1860, %v1539
      %v1893 = vmul.f32 %v1861, %v1540
      %v1894 = vmul.f32 %v1862, %v1541
      %v1895 = vadd.f32 %v1574, %v1863
      %v1896 = vadd.f32 %v1575, %v1864
      %v1897 = vadd.f32 %v1576, %v1865
      %v1898 = vadd.f32 %v1577, %v1866
      %v1899 = vadd.f32 %v1578, %v1867
      %v1900 = vadd.f32 %v1579, %v1868
      %v1901 = vadd.f32 %v1580, %v1869
      %v1902 = vadd.f32 %v1581, %v1870
      %v1903 = vadd.f32 %v1582, %v1871
      %v1904 = vadd.f32 %v1583, %v1872
      %v1905 = vadd.f32 %v1584, %v1873
      %v1906 = vadd.f32 %v1585, %v1874
      %v1907 = vadd.f32 %v1586, %v1875
      %v1908 = vadd.f32 %v1587, %v1876
      %v1909 = vadd.f32 %v1588, %v1877
      %v1910 = vadd.f32 %v1589, %v1878
      %v1911 = vadd.f32 %v1590, %v1879
      %v1912 = vadd.f32 %v1591, %v1880
      %v1913 = vadd.f32 %v1592, %v1881
      %v1914 = vadd.f32 %v1593, %v1882
      %v1915 = vadd.f32 %v1594, %v1883
      %v1916 = vadd.f32 %v1595, %v1884
      %v1917 = vadd.f32 %v1596, %v1885
      %v1918 = vadd.f32 %v1597, %v1886
      %v1919 = vadd.f32 %v1598, %v1887
      %v1920 = vadd.f32 %v1599, %v1888
      %v1921 = vadd.f32 %v1600, %v1889
      %v1922 = vadd.f32 %v1601, %v1890
      %v1923 = vadd.f32 %v1602, %v1891
      %v1924 = vadd.f32 %v1603, %v1892
      %v1925 = vadd.f32 %v1604, %v1893
      %v1926 = vadd.f32 %v1605, %v1894
      %1927 = vrot.lane.b32.xlu0 %v1352, 57
      %v1928 = vpop.permute.xlu0 %1927
      %1929 = vrot.lane.b32.xlu0 %v1355, 57
      %v1930 = vpop.permute.xlu0 %1929
      %1931 = vrot.lane.b32.xlu0 %v1360, 57
      %v1932 = vpop.permute.xlu0 %1931
      %1933 = vrot.lane.b32.xlu0 %v1363, 57
      %v1934 = vpop.permute.xlu0 %1933
      %1935 = vrot.lane.b32.xlu0 %v1368, 57
      %v1936 = vpop.permute.xlu0 %1935
      %1937 = vrot.lane.b32.xlu0 %v1371, 57
      %v1938 = vpop.permute.xlu0 %1937
      %1939 = vrot.lane.b32.xlu0 %v1376, 57
      %v1940 = vpop.permute.xlu0 %1939
      %1941 = vrot.lane.b32.xlu0 %v1379, 57
      %v1942 = vpop.permute.xlu0 %1941
      %1943 = vrot.lane.b32.xlu0 %v1384, 57
      %v1944 = vpop.permute.xlu0 %1943
      %1945 = vrot.lane.b32.xlu0 %v1387, 57
      %v1946 = vpop.permute.xlu0 %1945
      %1947 = vrot.lane.b32.xlu0 %v1392, 57
      %v1948 = vpop.permute.xlu0 %1947
      %1949 = vrot.lane.b32.xlu0 %v1395, 57
      %v1950 = vpop.permute.xlu0 %1949
      %1951 = vrot.lane.b32.xlu0 %v1400, 57
      %v1952 = vpop.permute.xlu0 %1951
      %1953 = vrot.lane.b32.xlu0 %v1403, 57
      %v1954 = vpop.permute.xlu0 %1953
      %1955 = vrot.lane.b32.xlu0 %v1408, 57
      %v1956 = vpop.permute.xlu0 %1955
      %1957 = vrot.lane.b32.xlu0 %v1411, 57
      %v1958 = vpop.permute.xlu0 %1957
      %1959 = vrot.lane.b32.xlu0 %v1416, 57
      %v1960 = vpop.permute.xlu0 %1959
      %1961 = vrot.lane.b32.xlu0 %v1419, 57
      %v1962 = vpop.permute.xlu0 %1961
      %1963 = vrot.lane.b32.xlu0 %v1424, 57
      %v1964 = vpop.permute.xlu0 %1963
      %1965 = vrot.lane.b32.xlu0 %v1427, 57
      %v1966 = vpop.permute.xlu0 %1965
      %1967 = vrot.lane.b32.xlu0 %v1432, 57
      %v1968 = vpop.permute.xlu0 %1967
      %1969 = vrot.lane.b32.xlu0 %v1435, 57
      %v1970 = vpop.permute.xlu0 %1969
      %1971 = vrot.lane.b32.xlu0 %v1440, 57
      %v1972 = vpop.permute.xlu0 %1971
      %1973 = vrot.lane.b32.xlu0 %v1443, 57
      %v1974 = vpop.permute.xlu0 %1973
      %1975 = vrot.lane.b32.xlu0 %v1448, 57
      %v1976 = vpop.permute.xlu0 %1975
      %1977 = vrot.lane.b32.xlu0 %v1451, 57
      %v1978 = vpop.permute.xlu0 %1977
      %1979 = vrot.lane.b32.xlu0 %v1456, 57
      %v1980 = vpop.permute.xlu0 %1979
      %1981 = vrot.lane.b32.xlu0 %v1459, 57
      %v1982 = vpop.permute.xlu0 %1981
      %1983 = vrot.lane.b32.xlu0 %v1464, 57
      %v1984 = vpop.permute.xlu0 %1983
      %1985 = vrot.lane.b32.xlu0 %v1467, 57
      %v1986 = vpop.permute.xlu0 %1985
      %1987 = vrot.lane.b32.xlu0 %v1472, 57
      %v1988 = vpop.permute.xlu0 %1987
      %1989 = vrot.lane.b32.xlu0 %v1475, 57
      %v1990 = vpop.permute.xlu0 %1989
      %2023 = vrot.lane.b32.xlu0 %v1352, 1
      %v2024 = vpop.permute.xlu0 %2023
      %2025 = vrot.lane.b32.xlu0 %v1355, 1
      %v2026 = vpop.permute.xlu0 %2025
      %2027 = vrot.lane.b32.xlu0 %v1360, 1
      %v2028 = vpop.permute.xlu0 %2027
      %2029 = vrot.lane.b32.xlu0 %v1363, 1
      %v2030 = vpop.permute.xlu0 %2029
      %2031 = vrot.lane.b32.xlu0 %v1368, 1
      %v2032 = vpop.permute.xlu0 %2031
      %2033 = vrot.lane.b32.xlu0 %v1371, 1
      %v2034 = vpop.permute.xlu0 %2033
      %2035 = vrot.lane.b32.xlu0 %v1376, 1
      %v2036 = vpop.permute.xlu0 %2035
      %2037 = vrot.lane.b32.xlu0 %v1379, 1
      %v2038 = vpop.permute.xlu0 %2037
      %2039 = vrot.lane.b32.xlu0 %v1384, 1
      %v2040 = vpop.permute.xlu0 %2039
      %2041 = vrot.lane.b32.xlu0 %v1387, 1
      %v2042 = vpop.permute.xlu0 %2041
      %2043 = vrot.lane.b32.xlu0 %v1392, 1
      %v2044 = vpop.permute.xlu0 %2043
      %2045 = vrot.lane.b32.xlu0 %v1395, 1
      %v2046 = vpop.permute.xlu0 %2045
      %2047 = vrot.lane.b32.xlu0 %v1400, 1
      %v2048 = vpop.permute.xlu0 %2047
      %2049 = vrot.lane.b32.xlu0 %v1403, 1
      %v2050 = vpop.permute.xlu0 %2049
      %2051 = vrot.lane.b32.xlu0 %v1408, 1
      %v2052 = vpop.permute.xlu0 %2051
      %2053 = vrot.lane.b32.xlu0 %v1411, 1
      %v2054 = vpop.permute.xlu0 %2053
      %2055 = vrot.lane.b32.xlu0 %v1416, 1
      %v2056 = vpop.permute.xlu0 %2055
      %2057 = vrot.lane.b32.xlu0 %v1419, 1
      %v2058 = vpop.permute.xlu0 %2057
      %2059 = vrot.lane.b32.xlu0 %v1424, 1
      %v2060 = vpop.permute.xlu0 %2059
      %2061 = vrot.lane.b32.xlu0 %v1427, 1
      %v2062 = vpop.permute.xlu0 %2061
      %2063 = vrot.lane.b32.xlu0 %v1432, 1
      %v2064 = vpop.permute.xlu0 %2063
      %2065 = vrot.lane.b32.xlu0 %v1435, 1
      %v2066 = vpop.permute.xlu0 %2065
      %2067 = vrot.lane.b32.xlu0 %v1440, 1
      %v2068 = vpop.permute.xlu0 %2067
      %2069 = vrot.lane.b32.xlu0 %v1443, 1
      %v2070 = vpop.permute.xlu0 %2069
      %2071 = vrot.lane.b32.xlu0 %v1448, 1
      %v2072 = vpop.permute.xlu0 %2071
      %2073 = vrot.lane.b32.xlu0 %v1451, 1
      %v2074 = vpop.permute.xlu0 %2073
      %2075 = vrot.lane.b32.xlu0 %v1456, 1
      %v2076 = vpop.permute.xlu0 %2075
      %2077 = vrot.lane.b32.xlu0 %v1459, 1
      %v2078 = vpop.permute.xlu0 %2077
      %2079 = vrot.lane.b32.xlu0 %v1464, 1
      %v2080 = vpop.permute.xlu0 %2079
      %2081 = vrot.lane.b32.xlu0 %v1467, 1
      %v2082 = vpop.permute.xlu0 %2081
      %2083 = vrot.lane.b32.xlu0 %v1472, 1
      %v2084 = vpop.permute.xlu0 %2083
      %2085 = vrot.lane.b32.xlu0 %v1475, 1
      %v2086 = vpop.permute.xlu0 %2085
      %vm2119 = vcmask 7168
      %v2120 = vsel %vm2119, %v1928, %v2024
      %v2121 = vsel %vm2119, %v1930, %v2026
      %v2122 = vsel %vm2119, %v1932, %v2028
      %v2123 = vsel %vm2119, %v1934, %v2030
      %v2124 = vsel %vm2119, %v1936, %v2032
      %v2125 = vsel %vm2119, %v1938, %v2034
      %v2126 = vsel %vm2119, %v1940, %v2036
      %v2127 = vsel %vm2119, %v1942, %v2038
      %v2128 = vsel %vm2119, %v1944, %v2040
      %v2129 = vsel %vm2119, %v1946, %v2042
      %v2130 = vsel %vm2119, %v1948, %v2044
      %v2131 = vsel %vm2119, %v1950, %v2046
      %v2132 = vsel %vm2119, %v1952, %v2048
      %v2133 = vsel %vm2119, %v1954, %v2050
      %v2134 = vsel %vm2119, %v1956, %v2052
      %v2135 = vsel %vm2119, %v1958, %v2054
      %v2136 = vsel %vm2119, %v1960, %v2056
      %v2137 = vsel %vm2119, %v1962, %v2058
      %v2138 = vsel %vm2119, %v1964, %v2060
      %v2139 = vsel %vm2119, %v1966, %v2062
      %v2140 = vsel %vm2119, %v1968, %v2064
      %v2141 = vsel %vm2119, %v1970, %v2066
      %v2142 = vsel %vm2119, %v1972, %v2068
      %v2143 = vsel %vm2119, %v1974, %v2070
      %v2144 = vsel %vm2119, %v1976, %v2072
      %v2145 = vsel %vm2119, %v1978, %v2074
      %v2146 = vsel %vm2119, %v1980, %v2076
      %v2147 = vsel %vm2119, %v1982, %v2078
      %v2148 = vsel %vm2119, %v1984, %v2080
      %v2149 = vsel %vm2119, %v1986, %v2082
      %v2150 = vsel %vm2119, %v1988, %v2084
      %v2151 = vsel %vm2119, %v1990, %v2086
      %v2152 = vmul.f32 %v2120, %v1542
      %v2153 = vmul.f32 %v2121, %v1543
      %v2154 = vmul.f32 %v2122, %v1544
      %v2155 = vmul.f32 %v2123, %v1545
      %v2156 = vmul.f32 %v2124, %v1546
      %v2157 = vmul.f32 %v2125, %v1547
      %v2158 = vmul.f32 %v2126, %v1548
      %v2159 = vmul.f32 %v2127, %v1549
      %v2160 = vmul.f32 %v2128, %v1550
      %v2161 = vmul.f32 %v2129, %v1551
      %v2162 = vmul.f32 %v2130, %v1552
      %v2163 = vmul.f32 %v2131, %v1553
      %v2164 = vmul.f32 %v2132, %v1554
      %v2165 = vmul.f32 %v2133, %v1555
      %v2166 = vmul.f32 %v2134, %v1556
      %v2167 = vmul.f32 %v2135, %v1557
      %v2168 = vmul.f32 %v2136, %v1558
      %v2169 = vmul.f32 %v2137, %v1559
      %v2170 = vmul.f32 %v2138, %v1560
      %v2171 = vmul.f32 %v2139, %v1561
      %v2172 = vmul.f32 %v2140, %v1562
      %v2173 = vmul.f32 %v2141, %v1563
      %v2174 = vmul.f32 %v2142, %v1564
      %v2175 = vmul.f32 %v2143, %v1565
      %v2176 = vmul.f32 %v2144, %v1566
      %v2177 = vmul.f32 %v2145, %v1567
      %v2178 = vmul.f32 %v2146, %v1568
      %v2179 = vmul.f32 %v2147, %v1569
      %v2180 = vmul.f32 %v2148, %v1570
      %v2181 = vmul.f32 %v2149, %v1571
      %v2182 = vmul.f32 %v2150, %v1572
      %v2183 = vmul.f32 %v2151, %v1573
      %v2184 = vadd.f32 %v1895, %v2152
      %v2185 = vadd.f32 %v1896, %v2153
      %v2186 = vadd.f32 %v1897, %v2154
      %v2187 = vadd.f32 %v1898, %v2155
      %v2188 = vadd.f32 %v1899, %v2156
      %v2189 = vadd.f32 %v1900, %v2157
      %v2190 = vadd.f32 %v1901, %v2158
      %v2191 = vadd.f32 %v1902, %v2159
      %v2192 = vadd.f32 %v1903, %v2160
      %v2193 = vadd.f32 %v1904, %v2161
      %v2194 = vadd.f32 %v1905, %v2162
      %v2195 = vadd.f32 %v1906, %v2163
      %v2196 = vadd.f32 %v1907, %v2164
      %v2197 = vadd.f32 %v1908, %v2165
      %v2198 = vadd.f32 %v1909, %v2166
      %v2199 = vadd.f32 %v1910, %v2167
      %v2200 = vadd.f32 %v1911, %v2168
      %v2201 = vadd.f32 %v1912, %v2169
      %v2202 = vadd.f32 %v1913, %v2170
      %v2203 = vadd.f32 %v1914, %v2171
      %v2204 = vadd.f32 %v1915, %v2172
      %v2205 = vadd.f32 %v1916, %v2173
      %v2206 = vadd.f32 %v1917, %v2174
      %v2207 = vadd.f32 %v1918, %v2175
      %v2208 = vadd.f32 %v1919, %v2176
      %v2209 = vadd.f32 %v1920, %v2177
      %v2210 = vadd.f32 %v1921, %v2178
      %v2211 = vadd.f32 %v1922, %v2179
      %v2212 = vadd.f32 %v1923, %v2180
      %v2213 = vadd.f32 %v1924, %v2181
      %v2214 = vadd.f32 %v1925, %v2182
      %v2215 = vadd.f32 %v1926, %v2183
      %v2216 = vld [vmem:[%s588] sm:$0xff]
      %v2217 = vld [vmem:[%s588 + $0x8] sm:$0xff]
      %v2218 = vld [vmem:[%s588 + $0x10] sm:$0xff]
      %v2219 = vld [vmem:[%s588 + $0x18] sm:$0xff]
      %v2220 = vld [vmem:[%s588 + $0x20] sm:$0xff]
      %v2221 = vld [vmem:[%s588 + $0x28] sm:$0xff]
      %v2222 = vld [vmem:[%s588 + $0x30] sm:$0xff]
      %v2223 = vld [vmem:[%s588 + $0x38] sm:$0xff]
      %v2224 = vld [vmem:[%s588 + $0x40] sm:$0xff]
      %v2225 = vld [vmem:[%s588 + $0x48] sm:$0xff]
      %v2226 = vld [vmem:[%s588 + $0x50] sm:$0xff]
      %v2227 = vld [vmem:[%s588 + $0x58] sm:$0xff]
      %v2228 = vld [vmem:[%s588 + $0x60] sm:$0xff]
      %v2229 = vld [vmem:[%s588 + $0x68] sm:$0xff]
      %v2230 = vld [vmem:[%s588 + $0x70] sm:$0xff]
      %v2231 = vld [vmem:[%s588 + $0x78] sm:$0xff]
      %v2232 = vld [vmem:[%s588 + $0x80] sm:$0xff]
      %v2233 = vld [vmem:[%s588 + $0x88] sm:$0xff]
      %v2234 = vld [vmem:[%s588 + $0x90] sm:$0xff]
      %v2235 = vld [vmem:[%s588 + $0x98] sm:$0xff]
      %v2236 = vld [vmem:[%s588 + $0xa0] sm:$0xff]
      %v2237 = vld [vmem:[%s588 + $0xa8] sm:$0xff]
      %v2238 = vld [vmem:[%s588 + $0xb0] sm:$0xff]
      %v2239 = vld [vmem:[%s588 + $0xb8] sm:$0xff]
      %v2240 = vld [vmem:[%s588 + $0xc0] sm:$0xff]
      %v2241 = vld [vmem:[%s588 + $0xc8] sm:$0xff]
      %v2242 = vld [vmem:[%s588 + $0xd0] sm:$0xff]
      %v2243 = vld [vmem:[%s588 + $0xd8] sm:$0xff]
      %v2244 = vld [vmem:[%s588 + $0xe0] sm:$0xff]
      %v2245 = vld [vmem:[%s588 + $0xe8] sm:$0xff]
      %v2246 = vld [vmem:[%s588 + $0xf0] sm:$0xff]
      %v2247 = vld [vmem:[%s588 + $0xf8] sm:$0xff]
      %v2248 = vld [vmem:[%s594] sm:$0xff]
      %v2249 = vld [vmem:[%s594 + $0x8] sm:$0xff]
      %v2250 = vld [vmem:[%s594 + $0x10] sm:$0xff]
      %v2251 = vld [vmem:[%s594 + $0x18] sm:$0xff]
      %v2252 = vld [vmem:[%s594 + $0x20] sm:$0xff]
      %v2253 = vld [vmem:[%s594 + $0x28] sm:$0xff]
      %v2254 = vld [vmem:[%s594 + $0x30] sm:$0xff]
      %v2255 = vld [vmem:[%s594 + $0x38] sm:$0xff]
      %v2256 = vld [vmem:[%s594 + $0x40] sm:$0xff]
      %v2257 = vld [vmem:[%s594 + $0x48] sm:$0xff]
      %v2258 = vld [vmem:[%s594 + $0x50] sm:$0xff]
      %v2259 = vld [vmem:[%s594 + $0x58] sm:$0xff]
      %v2260 = vld [vmem:[%s594 + $0x60] sm:$0xff]
      %v2261 = vld [vmem:[%s594 + $0x68] sm:$0xff]
      %v2262 = vld [vmem:[%s594 + $0x70] sm:$0xff]
      %v2263 = vld [vmem:[%s594 + $0x78] sm:$0xff]
      %v2264 = vld [vmem:[%s594 + $0x80] sm:$0xff]
      %v2265 = vld [vmem:[%s594 + $0x88] sm:$0xff]
      %v2266 = vld [vmem:[%s594 + $0x90] sm:$0xff]
      %v2267 = vld [vmem:[%s594 + $0x98] sm:$0xff]
      %v2268 = vld [vmem:[%s594 + $0xa0] sm:$0xff]
      %v2269 = vld [vmem:[%s594 + $0xa8] sm:$0xff]
      %v2270 = vld [vmem:[%s594 + $0xb0] sm:$0xff]
      %v2271 = vld [vmem:[%s594 + $0xb8] sm:$0xff]
      %v2272 = vld [vmem:[%s594 + $0xc0] sm:$0xff]
      %v2273 = vld [vmem:[%s594 + $0xc8] sm:$0xff]
      %v2274 = vld [vmem:[%s594 + $0xd0] sm:$0xff]
      %v2275 = vld [vmem:[%s594 + $0xd8] sm:$0xff]
      %v2276 = vld [vmem:[%s594 + $0xe0] sm:$0xff]
      %v2277 = vld [vmem:[%s594 + $0xe8] sm:$0xff]
      %v2278 = vld [vmem:[%s594 + $0xf0] sm:$0xff]
      %v2279 = vld [vmem:[%s594 + $0xf8] sm:$0xff]
      %v2280 = vld [vmem:[%s600] sm:$0xff]
      %v2281 = vld [vmem:[%s600 + $0x8] sm:$0xff]
      %v2282 = vld [vmem:[%s600 + $0x10] sm:$0xff]
      %v2283 = vld [vmem:[%s600 + $0x18] sm:$0xff]
      %v2284 = vld [vmem:[%s600 + $0x20] sm:$0xff]
      %v2285 = vld [vmem:[%s600 + $0x28] sm:$0xff]
      %v2286 = vld [vmem:[%s600 + $0x30] sm:$0xff]
      %v2287 = vld [vmem:[%s600 + $0x38] sm:$0xff]
      %v2288 = vld [vmem:[%s600 + $0x40] sm:$0xff]
      %v2289 = vld [vmem:[%s600 + $0x48] sm:$0xff]
      %v2290 = vld [vmem:[%s600 + $0x50] sm:$0xff]
      %v2291 = vld [vmem:[%s600 + $0x58] sm:$0xff]
      %v2292 = vld [vmem:[%s600 + $0x60] sm:$0xff]
      %v2293 = vld [vmem:[%s600 + $0x68] sm:$0xff]
      %v2294 = vld [vmem:[%s600 + $0x70] sm:$0xff]
      %v2295 = vld [vmem:[%s600 + $0x78] sm:$0xff]
      %v2296 = vld [vmem:[%s600 + $0x80] sm:$0xff]
      %v2297 = vld [vmem:[%s600 + $0x88] sm:$0xff]
      %v2298 = vld [vmem:[%s600 + $0x90] sm:$0xff]
      %v2299 = vld [vmem:[%s600 + $0x98] sm:$0xff]
      %v2300 = vld [vmem:[%s600 + $0xa0] sm:$0xff]
      %v2301 = vld [vmem:[%s600 + $0xa8] sm:$0xff]
      %v2302 = vld [vmem:[%s600 + $0xb0] sm:$0xff]
      %v2303 = vld [vmem:[%s600 + $0xb8] sm:$0xff]
      %v2304 = vld [vmem:[%s600 + $0xc0] sm:$0xff]
      %v2305 = vld [vmem:[%s600 + $0xc8] sm:$0xff]
      %v2306 = vld [vmem:[%s600 + $0xd0] sm:$0xff]
      %v2307 = vld [vmem:[%s600 + $0xd8] sm:$0xff]
      %v2308 = vld [vmem:[%s600 + $0xe0] sm:$0xff]
      %v2309 = vld [vmem:[%s600 + $0xe8] sm:$0xff]
      %v2310 = vld [vmem:[%s600 + $0xf0] sm:$0xff]
      %v2311 = vld [vmem:[%s600 + $0xf8] sm:$0xff]
      %2344 = vrot.lane.b32.xlu0 %v2216, 16
      %v2345 = vpop.permute.xlu0 %2344
      %2346 = vrot.lane.b32.xlu0 %v2217, 16
      %v2347 = vpop.permute.xlu0 %2346
      %2348 = vrot.lane.b32.xlu0 %v2218, 16
      %v2349 = vpop.permute.xlu0 %2348
      %2350 = vrot.lane.b32.xlu0 %v2219, 16
      %v2351 = vpop.permute.xlu0 %2350
      %2352 = vrot.lane.b32.xlu0 %v2220, 16
      %v2353 = vpop.permute.xlu0 %2352
      %2354 = vrot.lane.b32.xlu0 %v2221, 16
      %v2355 = vpop.permute.xlu0 %2354
      %2356 = vrot.lane.b32.xlu0 %v2222, 16
      %v2357 = vpop.permute.xlu0 %2356
      %2358 = vrot.lane.b32.xlu0 %v2223, 16
      %v2359 = vpop.permute.xlu0 %2358
      %2360 = vrot.lane.b32.xlu0 %v2224, 16
      %v2361 = vpop.permute.xlu0 %2360
      %2362 = vrot.lane.b32.xlu0 %v2225, 16
      %v2363 = vpop.permute.xlu0 %2362
      %2364 = vrot.lane.b32.xlu0 %v2226, 16
      %v2365 = vpop.permute.xlu0 %2364
      %2366 = vrot.lane.b32.xlu0 %v2227, 16
      %v2367 = vpop.permute.xlu0 %2366
      %2368 = vrot.lane.b32.xlu0 %v2228, 16
      %v2369 = vpop.permute.xlu0 %2368
      %2370 = vrot.lane.b32.xlu0 %v2229, 16
      %v2371 = vpop.permute.xlu0 %2370
      %2372 = vrot.lane.b32.xlu0 %v2230, 16
      %v2373 = vpop.permute.xlu0 %2372
      %2374 = vrot.lane.b32.xlu0 %v2231, 16
      %v2375 = vpop.permute.xlu0 %2374
      %2376 = vrot.lane.b32.xlu0 %v2232, 16
      %v2377 = vpop.permute.xlu0 %2376
      %2378 = vrot.lane.b32.xlu0 %v2233, 16
      %v2379 = vpop.permute.xlu0 %2378
      %2380 = vrot.lane.b32.xlu0 %v2234, 16
      %v2381 = vpop.permute.xlu0 %2380
      %2382 = vrot.lane.b32.xlu0 %v2235, 16
      %v2383 = vpop.permute.xlu0 %2382
      %2384 = vrot.lane.b32.xlu0 %v2236, 16
      %v2385 = vpop.permute.xlu0 %2384
      %2386 = vrot.lane.b32.xlu0 %v2237, 16
      %v2387 = vpop.permute.xlu0 %2386
      %2388 = vrot.lane.b32.xlu0 %v2238, 16
      %v2389 = vpop.permute.xlu0 %2388
      %2390 = vrot.lane.b32.xlu0 %v2239, 16
      %v2391 = vpop.permute.xlu0 %2390
      %2392 = vrot.lane.b32.xlu0 %v2240, 16
      %v2393 = vpop.permute.xlu0 %2392
      %2394 = vrot.lane.b32.xlu0 %v2241, 16
      %v2395 = vpop.permute.xlu0 %2394
      %2396 = vrot.lane.b32.xlu0 %v2242, 16
      %v2397 = vpop.permute.xlu0 %2396
      %2398 = vrot.lane.b32.xlu0 %v2243, 16
      %v2399 = vpop.permute.xlu0 %2398
      %2400 = vrot.lane.b32.xlu0 %v2244, 16
      %v2401 = vpop.permute.xlu0 %2400
      %2402 = vrot.lane.b32.xlu0 %v2245, 16
      %v2403 = vpop.permute.xlu0 %2402
      %2404 = vrot.lane.b32.xlu0 %v2246, 16
      %v2405 = vpop.permute.xlu0 %2404
      %2406 = vrot.lane.b32.xlu0 %v2247, 16
      %v2407 = vpop.permute.xlu0 %2406
      %v2440 = vmul.f32 %v853, %v2345
      %v2441 = vmul.f32 %v856, %v2347
      %v2442 = vmul.f32 %v861, %v2349
      %v2443 = vmul.f32 %v864, %v2351
      %v2444 = vmul.f32 %v869, %v2353
      %v2445 = vmul.f32 %v872, %v2355
      %v2446 = vmul.f32 %v877, %v2357
      %v2447 = vmul.f32 %v880, %v2359
      %v2448 = vmul.f32 %v885, %v2361
      %v2449 = vmul.f32 %v888, %v2363
      %v2450 = vmul.f32 %v893, %v2365
      %v2451 = vmul.f32 %v896, %v2367
      %v2452 = vmul.f32 %v901, %v2369
      %v2453 = vmul.f32 %v904, %v2371
      %v2454 = vmul.f32 %v909, %v2373
      %v2455 = vmul.f32 %v912, %v2375
      %v2456 = vmul.f32 %v917, %v2377
      %v2457 = vmul.f32 %v920, %v2379
      %v2458 = vmul.f32 %v925, %v2381
      %v2459 = vmul.f32 %v928, %v2383
      %v2460 = vmul.f32 %v933, %v2385
      %v2461 = vmul.f32 %v936, %v2387
      %v2462 = vmul.f32 %v941, %v2389
      %v2463 = vmul.f32 %v944, %v2391
      %v2464 = vmul.f32 %v949, %v2393
      %v2465 = vmul.f32 %v952, %v2395
      %v2466 = vmul.f32 %v957, %v2397
      %v2467 = vmul.f32 %v960, %v2399
      %v2468 = vmul.f32 %v965, %v2401
      %v2469 = vmul.f32 %v968, %v2403
      %v2470 = vmul.f32 %v973, %v2405
      %v2471 = vmul.f32 %v976, %v2407
      %2504 = vrot.lane.b32.xlu0 %v853, 111
      %v2505 = vpop.permute.xlu0 %2504
      %2506 = vrot.lane.b32.xlu0 %v856, 111
      %v2507 = vpop.permute.xlu0 %2506
      %2508 = vrot.lane.b32.xlu0 %v861, 111
      %v2509 = vpop.permute.xlu0 %2508
      %2510 = vrot.lane.b32.xlu0 %v864, 111
      %v2511 = vpop.permute.xlu0 %2510
      %2512 = vrot.lane.b32.xlu0 %v869, 111
      %v2513 = vpop.permute.xlu0 %2512
      %2514 = vrot.lane.b32.xlu0 %v872, 111
      %v2515 = vpop.permute.xlu0 %2514
      %2516 = vrot.lane.b32.xlu0 %v877, 111
      %v2517 = vpop.permute.xlu0 %2516
      %2518 = vrot.lane.b32.xlu0 %v880, 111
      %v2519 = vpop.permute.xlu0 %2518
      %2520 = vrot.lane.b32.xlu0 %v885, 111
      %v2521 = vpop.permute.xlu0 %2520
      %2522 = vrot.lane.b32.xlu0 %v888, 111
      %v2523 = vpop.permute.xlu0 %2522
      %2524 = vrot.lane.b32.xlu0 %v893, 111
      %v2525 = vpop.permute.xlu0 %2524
      %2526 = vrot.lane.b32.xlu0 %v896, 111
      %v2527 = vpop.permute.xlu0 %2526
      %2528 = vrot.lane.b32.xlu0 %v901, 111
      %v2529 = vpop.permute.xlu0 %2528
      %2530 = vrot.lane.b32.xlu0 %v904, 111
      %v2531 = vpop.permute.xlu0 %2530
      %2532 = vrot.lane.b32.xlu0 %v909, 111
      %v2533 = vpop.permute.xlu0 %2532
      %2534 = vrot.lane.b32.xlu0 %v912, 111
      %v2535 = vpop.permute.xlu0 %2534
      %2536 = vrot.lane.b32.xlu0 %v917, 111
      %v2537 = vpop.permute.xlu0 %2536
      %2538 = vrot.lane.b32.xlu0 %v920, 111
      %v2539 = vpop.permute.xlu0 %2538
      %2540 = vrot.lane.b32.xlu0 %v925, 111
      %v2541 = vpop.permute.xlu0 %2540
      %2542 = vrot.lane.b32.xlu0 %v928, 111
      %v2543 = vpop.permute.xlu0 %2542
      %2544 = vrot.lane.b32.xlu0 %v933, 111
      %v2545 = vpop.permute.xlu0 %2544
      %2546 = vrot.lane.b32.xlu0 %v936, 111
      %v2547 = vpop.permute.xlu0 %2546
      %2548 = vrot.lane.b32.xlu0 %v941, 111
      %v2549 = vpop.permute.xlu0 %2548
      %2550 = vrot.lane.b32.xlu0 %v944, 111
      %v2551 = vpop.permute.xlu0 %2550
      %2552 = vrot.lane.b32.xlu0 %v949, 111
      %v2553 = vpop.permute.xlu0 %2552
      %2554 = vrot.lane.b32.xlu0 %v952, 111
      %v2555 = vpop.permute.xlu0 %2554
      %2556 = vrot.lane.b32.xlu0 %v957, 111
      %v2557 = vpop.permute.xlu0 %2556
      %2558 = vrot.lane.b32.xlu0 %v960, 111
      %v2559 = vpop.permute.xlu0 %2558
      %2560 = vrot.lane.b32.xlu0 %v965, 111
      %v2561 = vpop.permute.xlu0 %2560
      %2562 = vrot.lane.b32.xlu0 %v968, 111
      %v2563 = vpop.permute.xlu0 %2562
      %2564 = vrot.lane.b32.xlu0 %v973, 111
      %v2565 = vpop.permute.xlu0 %2564
      %2566 = vrot.lane.b32.xlu0 %v976, 111
      %v2567 = vpop.permute.xlu0 %2566
      %2600 = vrot.lane.b32.xlu0 %v853, 117
      %v2601 = vpop.permute.xlu0 %2600
      %2602 = vrot.lane.b32.xlu0 %v856, 117
      %v2603 = vpop.permute.xlu0 %2602
      %2604 = vrot.lane.b32.xlu0 %v861, 117
      %v2605 = vpop.permute.xlu0 %2604
      %2606 = vrot.lane.b32.xlu0 %v864, 117
      %v2607 = vpop.permute.xlu0 %2606
      %2608 = vrot.lane.b32.xlu0 %v869, 117
      %v2609 = vpop.permute.xlu0 %2608
      %2610 = vrot.lane.b32.xlu0 %v872, 117
      %v2611 = vpop.permute.xlu0 %2610
      %2612 = vrot.lane.b32.xlu0 %v877, 117
      %v2613 = vpop.permute.xlu0 %2612
      %2614 = vrot.lane.b32.xlu0 %v880, 117
      %v2615 = vpop.permute.xlu0 %2614
      %2616 = vrot.lane.b32.xlu0 %v885, 117
      %v2617 = vpop.permute.xlu0 %2616
      %2618 = vrot.lane.b32.xlu0 %v888, 117
      %v2619 = vpop.permute.xlu0 %2618
      %2620 = vrot.lane.b32.xlu0 %v893, 117
      %v2621 = vpop.permute.xlu0 %2620
      %2622 = vrot.lane.b32.xlu0 %v896, 117
      %v2623 = vpop.permute.xlu0 %2622
      %2624 = vrot.lane.b32.xlu0 %v901, 117
      %v2625 = vpop.permute.xlu0 %2624
      %2626 = vrot.lane.b32.xlu0 %v904, 117
      %v2627 = vpop.permute.xlu0 %2626
      %2628 = vrot.lane.b32.xlu0 %v909, 117
      %v2629 = vpop.permute.xlu0 %2628
      %2630 = vrot.lane.b32.xlu0 %v912, 117
      %v2631 = vpop.permute.xlu0 %2630
      %2632 = vrot.lane.b32.xlu0 %v917, 117
      %v2633 = vpop.permute.xlu0 %2632
      %2634 = vrot.lane.b32.xlu0 %v920, 117
      %v2635 = vpop.permute.xlu0 %2634
      %2636 = vrot.lane.b32.xlu0 %v925, 117
      %v2637 = vpop.permute.xlu0 %2636
      %2638 = vrot.lane.b32.xlu0 %v928, 117
      %v2639 = vpop.permute.xlu0 %2638
      %2640 = vrot.lane.b32.xlu0 %v933, 117
      %v2641 = vpop.permute.xlu0 %2640
      %2642 = vrot.lane.b32.xlu0 %v936, 117
      %v2643 = vpop.permute.xlu0 %2642
      %2644 = vrot.lane.b32.xlu0 %v941, 117
      %v2645 = vpop.permute.xlu0 %2644
      %2646 = vrot.lane.b32.xlu0 %v944, 117
      %v2647 = vpop.permute.xlu0 %2646
      %2648 = vrot.lane.b32.xlu0 %v949, 117
      %v2649 = vpop.permute.xlu0 %2648
      %2650 = vrot.lane.b32.xlu0 %v952, 117
      %v2651 = vpop.permute.xlu0 %2650
      %2652 = vrot.lane.b32.xlu0 %v957, 117
      %v2653 = vpop.permute.xlu0 %2652
      %2654 = vrot.lane.b32.xlu0 %v960, 117
      %v2655 = vpop.permute.xlu0 %2654
      %2656 = vrot.lane.b32.xlu0 %v965, 117
      %v2657 = vpop.permute.xlu0 %2656
      %2658 = vrot.lane.b32.xlu0 %v968, 117
      %v2659 = vpop.permute.xlu0 %2658
      %2660 = vrot.lane.b32.xlu0 %v973, 117
      %v2661 = vpop.permute.xlu0 %2660
      %2662 = vrot.lane.b32.xlu0 %v976, 117
      %v2663 = vpop.permute.xlu0 %2662
      %vm2696 = vcmask 39936
      %v2697 = vsel %vm2696, %v2505, %v2601
      %v2698 = vsel %vm2696, %v2507, %v2603
      %v2699 = vsel %vm2696, %v2509, %v2605
      %v2700 = vsel %vm2696, %v2511, %v2607
      %v2701 = vsel %vm2696, %v2513, %v2609
      %v2702 = vsel %vm2696, %v2515, %v2611
      %v2703 = vsel %vm2696, %v2517, %v2613
      %v2704 = vsel %vm2696, %v2519, %v2615
      %v2705 = vsel %vm2696, %v2521, %v2617
      %v2706 = vsel %vm2696, %v2523, %v2619
      %v2707 = vsel %vm2696, %v2525, %v2621
      %v2708 = vsel %vm2696, %v2527, %v2623
      %v2709 = vsel %vm2696, %v2529, %v2625
      %v2710 = vsel %vm2696, %v2531, %v2627
      %v2711 = vsel %vm2696, %v2533, %v2629
      %v2712 = vsel %vm2696, %v2535, %v2631
      %v2713 = vsel %vm2696, %v2537, %v2633
      %v2714 = vsel %vm2696, %v2539, %v2635
      %v2715 = vsel %vm2696, %v2541, %v2637
      %v2716 = vsel %vm2696, %v2543, %v2639
      %v2717 = vsel %vm2696, %v2545, %v2641
      %v2718 = vsel %vm2696, %v2547, %v2643
      %v2719 = vsel %vm2696, %v2549, %v2645
      %v2720 = vsel %vm2696, %v2551, %v2647
      %v2721 = vsel %vm2696, %v2553, %v2649
      %v2722 = vsel %vm2696, %v2555, %v2651
      %v2723 = vsel %vm2696, %v2557, %v2653
      %v2724 = vsel %vm2696, %v2559, %v2655
      %v2725 = vsel %vm2696, %v2561, %v2657
      %v2726 = vsel %vm2696, %v2563, %v2659
      %v2727 = vsel %vm2696, %v2565, %v2661
      %v2728 = vsel %vm2696, %v2567, %v2663
      %v2729 = vmul.f32 %v2697, %v2248
      %v2730 = vmul.f32 %v2698, %v2249
      %v2731 = vmul.f32 %v2699, %v2250
      %v2732 = vmul.f32 %v2700, %v2251
      %v2733 = vmul.f32 %v2701, %v2252
      %v2734 = vmul.f32 %v2702, %v2253
      %v2735 = vmul.f32 %v2703, %v2254
      %v2736 = vmul.f32 %v2704, %v2255
      %v2737 = vmul.f32 %v2705, %v2256
      %v2738 = vmul.f32 %v2706, %v2257
      %v2739 = vmul.f32 %v2707, %v2258
      %v2740 = vmul.f32 %v2708, %v2259
      %v2741 = vmul.f32 %v2709, %v2260
      %v2742 = vmul.f32 %v2710, %v2261
      %v2743 = vmul.f32 %v2711, %v2262
      %v2744 = vmul.f32 %v2712, %v2263
      %v2745 = vmul.f32 %v2713, %v2264
      %v2746 = vmul.f32 %v2714, %v2265
      %v2747 = vmul.f32 %v2715, %v2266
      %v2748 = vmul.f32 %v2716, %v2267
      %v2749 = vmul.f32 %v2717, %v2268
      %v2750 = vmul.f32 %v2718, %v2269
      %v2751 = vmul.f32 %v2719, %v2270
      %v2752 = vmul.f32 %v2720, %v2271
      %v2753 = vmul.f32 %v2721, %v2272
      %v2754 = vmul.f32 %v2722, %v2273
      %v2755 = vmul.f32 %v2723, %v2274
      %v2756 = vmul.f32 %v2724, %v2275
      %v2757 = vmul.f32 %v2725, %v2276
      %v2758 = vmul.f32 %v2726, %v2277
      %v2759 = vmul.f32 %v2727, %v2278
      %v2760 = vmul.f32 %v2728, %v2279
      %2793 = vrot.lane.b32.xlu0 %v2729, 16
      %v2794 = vpop.permute.xlu0 %2793
      %2795 = vrot.lane.b32.xlu0 %v2730, 16
      %v2796 = vpop.permute.xlu0 %2795
      %2797 = vrot.lane.b32.xlu0 %v2731, 16
      %v2798 = vpop.permute.xlu0 %2797
      %2799 = vrot.lane.b32.xlu0 %v2732, 16
      %v2800 = vpop.permute.xlu0 %2799
      %2801 = vrot.lane.b32.xlu0 %v2733, 16
      %v2802 = vpop.permute.xlu0 %2801
      %2803 = vrot.lane.b32.xlu0 %v2734, 16
      %v2804 = vpop.permute.xlu0 %2803
      %2805 = vrot.lane.b32.xlu0 %v2735, 16
      %v2806 = vpop.permute.xlu0 %2805
      %2807 = vrot.lane.b32.xlu0 %v2736, 16
      %v2808 = vpop.permute.xlu0 %2807
      %2809 = vrot.lane.b32.xlu0 %v2737, 16
      %v2810 = vpop.permute.xlu0 %2809
      %2811 = vrot.lane.b32.xlu0 %v2738, 16
      %v2812 = vpop.permute.xlu0 %2811
      %2813 = vrot.lane.b32.xlu0 %v2739, 16
      %v2814 = vpop.permute.xlu0 %2813
      %2815 = vrot.lane.b32.xlu0 %v2740, 16
      %v2816 = vpop.permute.xlu0 %2815
      %2817 = vrot.lane.b32.xlu0 %v2741, 16
      %v2818 = vpop.permute.xlu0 %2817
      %2819 = vrot.lane.b32.xlu0 %v2742, 16
      %v2820 = vpop.permute.xlu0 %2819
      %2821 = vrot.lane.b32.xlu0 %v2743, 16
      %v2822 = vpop.permute.xlu0 %2821
      %2823 = vrot.lane.b32.xlu0 %v2744, 16
      %v2824 = vpop.permute.xlu0 %2823
      %2825 = vrot.lane.b32.xlu0 %v2745, 16
      %v2826 = vpop.permute.xlu0 %2825
      %2827 = vrot.lane.b32.xlu0 %v2746, 16
      %v2828 = vpop.permute.xlu0 %2827
      %2829 = vrot.lane.b32.xlu0 %v2747, 16
      %v2830 = vpop.permute.xlu0 %2829
      %2831 = vrot.lane.b32.xlu0 %v2748, 16
      %v2832 = vpop.permute.xlu0 %2831
      %2833 = vrot.lane.b32.xlu0 %v2749, 16
      %v2834 = vpop.permute.xlu0 %2833
      %2835 = vrot.lane.b32.xlu0 %v2750, 16
      %v2836 = vpop.permute.xlu0 %2835
      %2837 = vrot.lane.b32.xlu0 %v2751, 16
      %v2838 = vpop.permute.xlu0 %2837
      %2839 = vrot.lane.b32.xlu0 %v2752, 16
      %v2840 = vpop.permute.xlu0 %2839
      %2841 = vrot.lane.b32.xlu0 %v2753, 16
      %v2842 = vpop.permute.xlu0 %2841
      %2843 = vrot.lane.b32.xlu0 %v2754, 16
      %v2844 = vpop.permute.xlu0 %2843
      %2845 = vrot.lane.b32.xlu0 %v2755, 16
      %v2846 = vpop.permute.xlu0 %2845
      %2847 = vrot.lane.b32.xlu0 %v2756, 16
      %v2848 = vpop.permute.xlu0 %2847
      %2849 = vrot.lane.b32.xlu0 %v2757, 16
      %v2850 = vpop.permute.xlu0 %2849
      %2851 = vrot.lane.b32.xlu0 %v2758, 16
      %v2852 = vpop.permute.xlu0 %2851
      %2853 = vrot.lane.b32.xlu0 %v2759, 16
      %v2854 = vpop.permute.xlu0 %2853
      %2855 = vrot.lane.b32.xlu0 %v2760, 16
      %v2856 = vpop.permute.xlu0 %2855
      %v2889 = vadd.f32 %v2440, %v2794
      %v2890 = vadd.f32 %v2441, %v2796
      %v2891 = vadd.f32 %v2442, %v2798
      %v2892 = vadd.f32 %v2443, %v2800
      %v2893 = vadd.f32 %v2444, %v2802
      %v2894 = vadd.f32 %v2445, %v2804
      %v2895 = vadd.f32 %v2446, %v2806
      %v2896 = vadd.f32 %v2447, %v2808
      %v2897 = vadd.f32 %v2448, %v2810
      %v2898 = vadd.f32 %v2449, %v2812
      %v2899 = vadd.f32 %v2450, %v2814
      %v2900 = vadd.f32 %v2451, %v2816
      %v2901 = vadd.f32 %v2452, %v2818
      %v2902 = vadd.f32 %v2453, %v2820
      %v2903 = vadd.f32 %v2454, %v2822
      %v2904 = vadd.f32 %v2455, %v2824
      %v2905 = vadd.f32 %v2456, %v2826
      %v2906 = vadd.f32 %v2457, %v2828
      %v2907 = vadd.f32 %v2458, %v2830
      %v2908 = vadd.f32 %v2459, %v2832
      %v2909 = vadd.f32 %v2460, %v2834
      %v2910 = vadd.f32 %v2461, %v2836
      %v2911 = vadd.f32 %v2462, %v2838
      %v2912 = vadd.f32 %v2463, %v2840
      %v2913 = vadd.f32 %v2464, %v2842
      %v2914 = vadd.f32 %v2465, %v2844
      %v2915 = vadd.f32 %v2466, %v2846
      %v2916 = vadd.f32 %v2467, %v2848
      %v2917 = vadd.f32 %v2468, %v2850
      %v2918 = vadd.f32 %v2469, %v2852
      %v2919 = vadd.f32 %v2470, %v2854
      %v2920 = vadd.f32 %v2471, %v2856
      %2921 = vrot.lane.b32.xlu0 %v853, 107
      %v2922 = vpop.permute.xlu0 %2921
      %2923 = vrot.lane.b32.xlu0 %v856, 107
      %v2924 = vpop.permute.xlu0 %2923
      %2925 = vrot.lane.b32.xlu0 %v861, 107
      %v2926 = vpop.permute.xlu0 %2925
      %2927 = vrot.lane.b32.xlu0 %v864, 107
      %v2928 = vpop.permute.xlu0 %2927
      %2929 = vrot.lane.b32.xlu0 %v869, 107
      %v2930 = vpop.permute.xlu0 %2929
      %2931 = vrot.lane.b32.xlu0 %v872, 107
      %v2932 = vpop.permute.xlu0 %2931
      %2933 = vrot.lane.b32.xlu0 %v877, 107
      %v2934 = vpop.permute.xlu0 %2933
      %2935 = vrot.lane.b32.xlu0 %v880, 107
      %v2936 = vpop.permute.xlu0 %2935
      %2937 = vrot.lane.b32.xlu0 %v885, 107
      %v2938 = vpop.permute.xlu0 %2937
      %2939 = vrot.lane.b32.xlu0 %v888, 107
      %v2940 = vpop.permute.xlu0 %2939
      %2941 = vrot.lane.b32.xlu0 %v893, 107
      %v2942 = vpop.permute.xlu0 %2941
      %2943 = vrot.lane.b32.xlu0 %v896, 107
      %v2944 = vpop.permute.xlu0 %2943
      %2945 = vrot.lane.b32.xlu0 %v901, 107
      %v2946 = vpop.permute.xlu0 %2945
      %2947 = vrot.lane.b32.xlu0 %v904, 107
      %v2948 = vpop.permute.xlu0 %2947
      %2949 = vrot.lane.b32.xlu0 %v909, 107
      %v2950 = vpop.permute.xlu0 %2949
      %2951 = vrot.lane.b32.xlu0 %v912, 107
      %v2952 = vpop.permute.xlu0 %2951
      %2953 = vrot.lane.b32.xlu0 %v917, 107
      %v2954 = vpop.permute.xlu0 %2953
      %2955 = vrot.lane.b32.xlu0 %v920, 107
      %v2956 = vpop.permute.xlu0 %2955
      %2957 = vrot.lane.b32.xlu0 %v925, 107
      %v2958 = vpop.permute.xlu0 %2957
      %2959 = vrot.lane.b32.xlu0 %v928, 107
      %v2960 = vpop.permute.xlu0 %2959
      %2961 = vrot.lane.b32.xlu0 %v933, 107
      %v2962 = vpop.permute.xlu0 %2961
      %2963 = vrot.lane.b32.xlu0 %v936, 107
      %v2964 = vpop.permute.xlu0 %2963
      %2965 = vrot.lane.b32.xlu0 %v941, 107
      %v2966 = vpop.permute.xlu0 %2965
      %2967 = vrot.lane.b32.xlu0 %v944, 107
      %v2968 = vpop.permute.xlu0 %2967
      %2969 = vrot.lane.b32.xlu0 %v949, 107
      %v2970 = vpop.permute.xlu0 %2969
      %2971 = vrot.lane.b32.xlu0 %v952, 107
      %v2972 = vpop.permute.xlu0 %2971
      %2973 = vrot.lane.b32.xlu0 %v957, 107
      %v2974 = vpop.permute.xlu0 %2973
      %2975 = vrot.lane.b32.xlu0 %v960, 107
      %v2976 = vpop.permute.xlu0 %2975
      %2977 = vrot.lane.b32.xlu0 %v965, 107
      %v2978 = vpop.permute.xlu0 %2977
      %2979 = vrot.lane.b32.xlu0 %v968, 107
      %v2980 = vpop.permute.xlu0 %2979
      %2981 = vrot.lane.b32.xlu0 %v973, 107
      %v2982 = vpop.permute.xlu0 %2981
      %2983 = vrot.lane.b32.xlu0 %v976, 107
      %v2984 = vpop.permute.xlu0 %2983
      %3017 = vrot.lane.b32.xlu0 %v853, 113
      %v3018 = vpop.permute.xlu0 %3017
      %3019 = vrot.lane.b32.xlu0 %v856, 113
      %v3020 = vpop.permute.xlu0 %3019
      %3021 = vrot.lane.b32.xlu0 %v861, 113
      %v3022 = vpop.permute.xlu0 %3021
      %3023 = vrot.lane.b32.xlu0 %v864, 113
      %v3024 = vpop.permute.xlu0 %3023
      %3025 = vrot.lane.b32.xlu0 %v869, 113
      %v3026 = vpop.permute.xlu0 %3025
      %3027 = vrot.lane.b32.xlu0 %v872, 113
      %v3028 = vpop.permute.xlu0 %3027
      %3029 = vrot.lane.b32.xlu0 %v877, 113
      %v3030 = vpop.permute.xlu0 %3029
      %3031 = vrot.lane.b32.xlu0 %v880, 113
      %v3032 = vpop.permute.xlu0 %3031
      %3033 = vrot.lane.b32.xlu0 %v885, 113
      %v3034 = vpop.permute.xlu0 %3033
      %3035 = vrot.lane.b32.xlu0 %v888, 113
      %v3036 = vpop.permute.xlu0 %3035
      %3037 = vrot.lane.b32.xlu0 %v893, 113
      %v3038 = vpop.permute.xlu0 %3037
      %3039 = vrot.lane.b32.xlu0 %v896, 113
      %v3040 = vpop.permute.xlu0 %3039
      %3041 = vrot.lane.b32.xlu0 %v901, 113
      %v3042 = vpop.permute.xlu0 %3041
      %3043 = vrot.lane.b32.xlu0 %v904, 113
      %v3044 = vpop.permute.xlu0 %3043
      %3045 = vrot.lane.b32.xlu0 %v909, 113
      %v3046 = vpop.permute.xlu0 %3045
      %3047 = vrot.lane.b32.xlu0 %v912, 113
      %v3048 = vpop.permute.xlu0 %3047
      %3049 = vrot.lane.b32.xlu0 %v917, 113
      %v3050 = vpop.permute.xlu0 %3049
      %3051 = vrot.lane.b32.xlu0 %v920, 113
      %v3052 = vpop.permute.xlu0 %3051
      %3053 = vrot.lane.b32.xlu0 %v925, 113
      %v3054 = vpop.permute.xlu0 %3053
      %3055 = vrot.lane.b32.xlu0 %v928, 113
      %v3056 = vpop.permute.xlu0 %3055
      %3057 = vrot.lane.b32.xlu0 %v933, 113
      %v3058 = vpop.permute.xlu0 %3057
      %3059 = vrot.lane.b32.xlu0 %v936, 113
      %v3060 = vpop.permute.xlu0 %3059
      %3061 = vrot.lane.b32.xlu0 %v941, 113
      %v3062 = vpop.permute.xlu0 %3061
      %3063 = vrot.lane.b32.xlu0 %v944, 113
      %v3064 = vpop.permute.xlu0 %3063
      %3065 = vrot.lane.b32.xlu0 %v949, 113
      %v3066 = vpop.permute.xlu0 %3065
      %3067 = vrot.lane.b32.xlu0 %v952, 113
      %v3068 = vpop.permute.xlu0 %3067
      %3069 = vrot.lane.b32.xlu0 %v957, 113
      %v3070 = vpop.permute.xlu0 %3069
      %3071 = vrot.lane.b32.xlu0 %v960, 113
      %v3072 = vpop.permute.xlu0 %3071
      %3073 = vrot.lane.b32.xlu0 %v965, 113
      %v3074 = vpop.permute.xlu0 %3073
      %3075 = vrot.lane.b32.xlu0 %v968, 113
      %v3076 = vpop.permute.xlu0 %3075
      %3077 = vrot.lane.b32.xlu0 %v973, 113
      %v3078 = vpop.permute.xlu0 %3077
      %3079 = vrot.lane.b32.xlu0 %v976, 113
      %v3080 = vpop.permute.xlu0 %3079
      %v3113 = vsel %vm2119, %v2922, %v3018
      %v3114 = vsel %vm2119, %v2924, %v3020
      %v3115 = vsel %vm2119, %v2926, %v3022
      %v3116 = vsel %vm2119, %v2928, %v3024
      %v3117 = vsel %vm2119, %v2930, %v3026
      %v3118 = vsel %vm2119, %v2932, %v3028
      %v3119 = vsel %vm2119, %v2934, %v3030
      %v3120 = vsel %vm2119, %v2936, %v3032
      %v3121 = vsel %vm2119, %v2938, %v3034
      %v3122 = vsel %vm2119, %v2940, %v3036
      %v3123 = vsel %vm2119, %v2942, %v3038
      %v3124 = vsel %vm2119, %v2944, %v3040
      %v3125 = vsel %vm2119, %v2946, %v3042
      %v3126 = vsel %vm2119, %v2948, %v3044
      %v3127 = vsel %vm2119, %v2950, %v3046
      %v3128 = vsel %vm2119, %v2952, %v3048
      %v3129 = vsel %vm2119, %v2954, %v3050
      %v3130 = vsel %vm2119, %v2956, %v3052
      %v3131 = vsel %vm2119, %v2958, %v3054
      %v3132 = vsel %vm2119, %v2960, %v3056
      %v3133 = vsel %vm2119, %v2962, %v3058
      %v3134 = vsel %vm2119, %v2964, %v3060
      %v3135 = vsel %vm2119, %v2966, %v3062
      %v3136 = vsel %vm2119, %v2968, %v3064
      %v3137 = vsel %vm2119, %v2970, %v3066
      %v3138 = vsel %vm2119, %v2972, %v3068
      %v3139 = vsel %vm2119, %v2974, %v3070
      %v3140 = vsel %vm2119, %v2976, %v3072
      %v3141 = vsel %vm2119, %v2978, %v3074
      %v3142 = vsel %vm2119, %v2980, %v3076
      %v3143 = vsel %vm2119, %v2982, %v3078
      %v3144 = vsel %vm2119, %v2984, %v3080
      %v3145 = vmul.f32 %v3113, %v2280
      %v3146 = vmul.f32 %v3114, %v2281
      %v3147 = vmul.f32 %v3115, %v2282
      %v3148 = vmul.f32 %v3116, %v2283
      %v3149 = vmul.f32 %v3117, %v2284
      %v3150 = vmul.f32 %v3118, %v2285
      %v3151 = vmul.f32 %v3119, %v2286
      %v3152 = vmul.f32 %v3120, %v2287
      %v3153 = vmul.f32 %v3121, %v2288
      %v3154 = vmul.f32 %v3122, %v2289
      %v3155 = vmul.f32 %v3123, %v2290
      %v3156 = vmul.f32 %v3124, %v2291
      %v3157 = vmul.f32 %v3125, %v2292
      %v3158 = vmul.f32 %v3126, %v2293
      %v3159 = vmul.f32 %v3127, %v2294
      %v3160 = vmul.f32 %v3128, %v2295
      %v3161 = vmul.f32 %v3129, %v2296
      %v3162 = vmul.f32 %v3130, %v2297
      %v3163 = vmul.f32 %v3131, %v2298
      %v3164 = vmul.f32 %v3132, %v2299
      %v3165 = vmul.f32 %v3133, %v2300
      %v3166 = vmul.f32 %v3134, %v2301
      %v3167 = vmul.f32 %v3135, %v2302
      %v3168 = vmul.f32 %v3136, %v2303
      %v3169 = vmul.f32 %v3137, %v2304
      %v3170 = vmul.f32 %v3138, %v2305
      %v3171 = vmul.f32 %v3139, %v2306
      %v3172 = vmul.f32 %v3140, %v2307
      %v3173 = vmul.f32 %v3141, %v2308
      %v3174 = vmul.f32 %v3142, %v2309
      %v3175 = vmul.f32 %v3143, %v2310
      %v3176 = vmul.f32 %v3144, %v2311
      %3209 = vrot.lane.b32.xlu0 %v3145, 16
      %v3210 = vpop.permute.xlu0 %3209
      %3211 = vrot.lane.b32.xlu0 %v3146, 16
      %v3212 = vpop.permute.xlu0 %3211
      %3213 = vrot.lane.b32.xlu0 %v3147, 16
      %v3214 = vpop.permute.xlu0 %3213
      %3215 = vrot.lane.b32.xlu0 %v3148, 16
      %v3216 = vpop.permute.xlu0 %3215
      %3217 = vrot.lane.b32.xlu0 %v3149, 16
      %v3218 = vpop.permute.xlu0 %3217
      %3219 = vrot.lane.b32.xlu0 %v3150, 16
      %v3220 = vpop.permute.xlu0 %3219
      %3221 = vrot.lane.b32.xlu0 %v3151, 16
      %v3222 = vpop.permute.xlu0 %3221
      %3223 = vrot.lane.b32.xlu0 %v3152, 16
      %v3224 = vpop.permute.xlu0 %3223
      %3225 = vrot.lane.b32.xlu0 %v3153, 16
      %v3226 = vpop.permute.xlu0 %3225
      %3227 = vrot.lane.b32.xlu0 %v3154, 16
      %v3228 = vpop.permute.xlu0 %3227
      %3229 = vrot.lane.b32.xlu0 %v3155, 16
      %v3230 = vpop.permute.xlu0 %3229
      %3231 = vrot.lane.b32.xlu0 %v3156, 16
      %v3232 = vpop.permute.xlu0 %3231
      %3233 = vrot.lane.b32.xlu0 %v3157, 16
      %v3234 = vpop.permute.xlu0 %3233
      %3235 = vrot.lane.b32.xlu0 %v3158, 16
      %v3236 = vpop.permute.xlu0 %3235
      %3237 = vrot.lane.b32.xlu0 %v3159, 16
      %v3238 = vpop.permute.xlu0 %3237
      %3239 = vrot.lane.b32.xlu0 %v3160, 16
      %v3240 = vpop.permute.xlu0 %3239
      %3241 = vrot.lane.b32.xlu0 %v3161, 16
      %v3242 = vpop.permute.xlu0 %3241
      %3243 = vrot.lane.b32.xlu0 %v3162, 16
      %v3244 = vpop.permute.xlu0 %3243
      %3245 = vrot.lane.b32.xlu0 %v3163, 16
      %v3246 = vpop.permute.xlu0 %3245
      %3247 = vrot.lane.b32.xlu0 %v3164, 16
      %v3248 = vpop.permute.xlu0 %3247
      %3249 = vrot.lane.b32.xlu0 %v3165, 16
      %v3250 = vpop.permute.xlu0 %3249
      %3251 = vrot.lane.b32.xlu0 %v3166, 16
      %v3252 = vpop.permute.xlu0 %3251
      %3253 = vrot.lane.b32.xlu0 %v3167, 16
      %v3254 = vpop.permute.xlu0 %3253
      %3255 = vrot.lane.b32.xlu0 %v3168, 16
      %v3256 = vpop.permute.xlu0 %3255
      %3257 = vrot.lane.b32.xlu0 %v3169, 16
      %v3258 = vpop.permute.xlu0 %3257
      %3259 = vrot.lane.b32.xlu0 %v3170, 16
      %v3260 = vpop.permute.xlu0 %3259
      %3261 = vrot.lane.b32.xlu0 %v3171, 16
      %v3262 = vpop.permute.xlu0 %3261
      %3263 = vrot.lane.b32.xlu0 %v3172, 16
      %v3264 = vpop.permute.xlu0 %3263
      %3265 = vrot.lane.b32.xlu0 %v3173, 16
      %v3266 = vpop.permute.xlu0 %3265
      %3267 = vrot.lane.b32.xlu0 %v3174, 16
      %v3268 = vpop.permute.xlu0 %3267
      %3269 = vrot.lane.b32.xlu0 %v3175, 16
      %v3270 = vpop.permute.xlu0 %3269
      %3271 = vrot.lane.b32.xlu0 %v3176, 16
      %v3272 = vpop.permute.xlu0 %3271
      %v3305 = vadd.f32 %v2889, %v3210
      %v3306 = vadd.f32 %v2890, %v3212
      %v3307 = vadd.f32 %v2891, %v3214
      %v3308 = vadd.f32 %v2892, %v3216
      %v3309 = vadd.f32 %v2893, %v3218
      %v3310 = vadd.f32 %v2894, %v3220
      %v3311 = vadd.f32 %v2895, %v3222
      %v3312 = vadd.f32 %v2896, %v3224
      %v3313 = vadd.f32 %v2897, %v3226
      %v3314 = vadd.f32 %v2898, %v3228
      %v3315 = vadd.f32 %v2899, %v3230
      %v3316 = vadd.f32 %v2900, %v3232
      %v3317 = vadd.f32 %v2901, %v3234
      %v3318 = vadd.f32 %v2902, %v3236
      %v3319 = vadd.f32 %v2903, %v3238
      %v3320 = vadd.f32 %v2904, %v3240
      %v3321 = vadd.f32 %v2905, %v3242
      %v3322 = vadd.f32 %v2906, %v3244
      %v3323 = vadd.f32 %v2907, %v3246
      %v3324 = vadd.f32 %v2908, %v3248
      %v3325 = vadd.f32 %v2909, %v3250
      %v3326 = vadd.f32 %v2910, %v3252
      %v3327 = vadd.f32 %v2911, %v3254
      %v3328 = vadd.f32 %v2912, %v3256
      %v3329 = vadd.f32 %v2913, %v3258
      %v3330 = vadd.f32 %v2914, %v3260
      %v3331 = vadd.f32 %v2915, %v3262
      %v3332 = vadd.f32 %v2916, %v3264
      %v3333 = vadd.f32 %v2917, %v3266
      %v3334 = vadd.f32 %v2918, %v3268
      %v3335 = vadd.f32 %v2919, %v3270
      %v3336 = vadd.f32 %v2920, %v3272
      %v3337 = vpack.c.bf16 %v2185, %v2184
      %v3338 = vpack.c.bf16 %v2187, %v2186
      %v3339 = vpack.c.bf16 %v2189, %v2188
      %v3340 = vpack.c.bf16 %v2191, %v2190
      %v3341 = vpack.c.bf16 %v2193, %v2192
      %v3342 = vpack.c.bf16 %v2195, %v2194
      %v3343 = vpack.c.bf16 %v2197, %v2196
      %v3344 = vpack.c.bf16 %v2199, %v2198
      %v3345 = vpack.c.bf16 %v2201, %v2200
      %v3346 = vpack.c.bf16 %v2203, %v2202
      %v3347 = vpack.c.bf16 %v2205, %v2204
      %v3348 = vpack.c.bf16 %v2207, %v2206
      %v3349 = vpack.c.bf16 %v2209, %v2208
      %v3350 = vpack.c.bf16 %v2211, %v2210
      %v3351 = vpack.c.bf16 %v2213, %v2212
      %v3352 = vpack.c.bf16 %v2215, %v2214
      %v3369 = vunpack.c.l.b16 %v3337
      %v3370 = vunpack.c.h.b16 %v3337
      %v3371 = vunpack.c.l.b16 %v3338
      %v3372 = vunpack.c.h.b16 %v3338
      %v3373 = vunpack.c.l.b16 %v3339
      %v3374 = vunpack.c.h.b16 %v3339
      %v3375 = vunpack.c.l.b16 %v3340
      %v3376 = vunpack.c.h.b16 %v3340
      %v3377 = vunpack.c.l.b16 %v3341
      %v3378 = vunpack.c.h.b16 %v3341
      %v3379 = vunpack.c.l.b16 %v3342
      %v3380 = vunpack.c.h.b16 %v3342
      %v3381 = vunpack.c.l.b16 %v3343
      %v3382 = vunpack.c.h.b16 %v3343
      %v3383 = vunpack.c.l.b16 %v3344
      %v3384 = vunpack.c.h.b16 %v3344
      %v3385 = vunpack.c.l.b16 %v3345
      %v3386 = vunpack.c.h.b16 %v3345
      %v3387 = vunpack.c.l.b16 %v3346
      %v3388 = vunpack.c.h.b16 %v3346
      %v3389 = vunpack.c.l.b16 %v3347
      %v3390 = vunpack.c.h.b16 %v3347
      %v3391 = vunpack.c.l.b16 %v3348
      %v3392 = vunpack.c.h.b16 %v3348
      %v3393 = vunpack.c.l.b16 %v3349
      %v3394 = vunpack.c.h.b16 %v3349
      %v3395 = vunpack.c.l.b16 %v3350
      %v3396 = vunpack.c.h.b16 %v3350
      %v3397 = vunpack.c.l.b16 %v3351
      %v3398 = vunpack.c.h.b16 %v3351
      %v3399 = vunpack.c.l.b16 %v3352
      %v3400 = vunpack.c.h.b16 %v3352
      %v3401 = vpack.c.b16 %v3369, %v3369
      %v3402 = vpack.c.b16 %v3370, %v3370
      %v3403 = vpack.c.b16 %v3371, %v3371
      %v3404 = vpack.c.b16 %v3372, %v3372
      %v3405 = vpack.c.b16 %v3373, %v3373
      %v3406 = vpack.c.b16 %v3374, %v3374
      %v3407 = vpack.c.b16 %v3375, %v3375
      %v3408 = vpack.c.b16 %v3376, %v3376
      %v3409 = vpack.c.b16 %v3377, %v3377
      %v3410 = vpack.c.b16 %v3378, %v3378
      %v3411 = vpack.c.b16 %v3379, %v3379
      %v3412 = vpack.c.b16 %v3380, %v3380
      %v3413 = vpack.c.b16 %v3381, %v3381
      %v3414 = vpack.c.b16 %v3382, %v3382
      %v3415 = vpack.c.b16 %v3383, %v3383
      %v3416 = vpack.c.b16 %v3384, %v3384
      %v3417 = vpack.c.b16 %v3385, %v3385
      %v3418 = vpack.c.b16 %v3386, %v3386
      %v3419 = vpack.c.b16 %v3387, %v3387
      %v3420 = vpack.c.b16 %v3388, %v3388
      %v3421 = vpack.c.b16 %v3389, %v3389
      %v3422 = vpack.c.b16 %v3390, %v3390
      %v3423 = vpack.c.b16 %v3391, %v3391
      %v3424 = vpack.c.b16 %v3392, %v3392
      %v3425 = vpack.c.b16 %v3393, %v3393
      %v3426 = vpack.c.b16 %v3394, %v3394
      %v3427 = vpack.c.b16 %v3395, %v3395
      %v3428 = vpack.c.b16 %v3396, %v3396
      %v3429 = vpack.c.b16 %v3397, %v3397
      %v3430 = vpack.c.b16 %v3398, %v3398
      %v3431 = vpack.c.b16 %v3399, %v3399
      %v3432 = vpack.c.b16 %v3400, %v3400
      %vm3465 = vcmask 584704
      %3466 = vst.msk [vmem:[%s610] sm:$0xf] %vm3465, %v3401
      %3467 = vst.msk [vmem:[%s610 + $0x4] sm:$0xf] %vm3465, %v3402
      %3468 = vst.msk [vmem:[%s610 + $0x8] sm:$0xf] %vm3465, %v3403
      %3469 = vst.msk [vmem:[%s610 + $0xc] sm:$0xf] %vm3465, %v3404
      %3470 = vst.msk [vmem:[%s610 + $0x10] sm:$0xf] %vm3465, %v3405
      %3471 = vst.msk [vmem:[%s610 + $0x14] sm:$0xf] %vm3465, %v3406
      %3472 = vst.msk [vmem:[%s610 + $0x18] sm:$0xf] %vm3465, %v3407
      %3473 = vst.msk [vmem:[%s610 + $0x1c] sm:$0xf] %vm3465, %v3408
      %3474 = vst.msk [vmem:[%s610 + $0x20] sm:$0xf] %vm3465, %v3409
      %3475 = vst.msk [vmem:[%s610 + $0x24] sm:$0xf] %vm3465, %v3410
      %3476 = vst.msk [vmem:[%s610 + $0x28] sm:$0xf] %vm3465, %v3411
      %3477 = vst.msk [vmem:[%s610 + $0x2c] sm:$0xf] %vm3465, %v3412
      %3478 = vst.msk [vmem:[%s610 + $0x30] sm:$0xf] %vm3465, %v3413
      %3479 = vst.msk [vmem:[%s610 + $0x34] sm:$0xf] %vm3465, %v3414
      %3480 = vst.msk [vmem:[%s610 + $0x38] sm:$0xf] %vm3465, %v3415
      %3481 = vst.msk [vmem:[%s610 + $0x3c] sm:$0xf] %vm3465, %v3416
      %3482 = vst.msk [vmem:[%s610 + $0x40] sm:$0xf] %vm3465, %v3417
      %3483 = vst.msk [vmem:[%s610 + $0x44] sm:$0xf] %vm3465, %v3418
      %3484 = vst.msk [vmem:[%s610 + $0x48] sm:$0xf] %vm3465, %v3419
      %3485 = vst.msk [vmem:[%s610 + $0x4c] sm:$0xf] %vm3465, %v3420
      %3486 = vst.msk [vmem:[%s610 + $0x50] sm:$0xf] %vm3465, %v3421
      %3487 = vst.msk [vmem:[%s610 + $0x54] sm:$0xf] %vm3465, %v3422
      %3488 = vst.msk [vmem:[%s610 + $0x58] sm:$0xf] %vm3465, %v3423
      %3489 = vst.msk [vmem:[%s610 + $0x5c] sm:$0xf] %vm3465, %v3424
      %3490 = vst.msk [vmem:[%s610 + $0x60] sm:$0xf] %vm3465, %v3425
      %3491 = vst.msk [vmem:[%s610 + $0x64] sm:$0xf] %vm3465, %v3426
      %3492 = vst.msk [vmem:[%s610 + $0x68] sm:$0xf] %vm3465, %v3427
      %3493 = vst.msk [vmem:[%s610 + $0x6c] sm:$0xf] %vm3465, %v3428
      %3494 = vst.msk [vmem:[%s610 + $0x70] sm:$0xf] %vm3465, %v3429
      %3495 = vst.msk [vmem:[%s610 + $0x74] sm:$0xf] %vm3465, %v3430
      %3496 = vst.msk [vmem:[%s610 + $0x78] sm:$0xf] %vm3465, %v3431
      %3497 = vst.msk [vmem:[%s610 + $0x7c] sm:$0xf] %vm3465, %v3432
      %v3498 = vpack.c.bf16 %v1090, %v1087
      %v3499 = vpack.c.bf16 %v1098, %v1095
      %v3500 = vpack.c.bf16 %v1106, %v1103
      %v3501 = vpack.c.bf16 %v1114, %v1111
      %v3502 = vpack.c.bf16 %v1122, %v1119
      %v3503 = vpack.c.bf16 %v1130, %v1127
      %v3504 = vpack.c.bf16 %v1138, %v1135
      %v3505 = vpack.c.bf16 %v1146, %v1143
      %v3506 = vpack.c.bf16 %v1154, %v1151
      %v3507 = vpack.c.bf16 %v1162, %v1159
      %v3508 = vpack.c.bf16 %v1170, %v1167
      %v3509 = vpack.c.bf16 %v1178, %v1175
      %v3510 = vpack.c.bf16 %v1186, %v1183
      %v3511 = vpack.c.bf16 %v1194, %v1191
      %v3512 = vpack.c.bf16 %v1202, %v1199
      %v3513 = vpack.c.bf16 %v1210, %v1207
      %v3530 = vunpack.c.l.b16 %v3498
      %v3531 = vunpack.c.h.b16 %v3498
      %v3532 = vunpack.c.l.b16 %v3499
      %v3533 = vunpack.c.h.b16 %v3499
      %v3534 = vunpack.c.l.b16 %v3500
      %v3535 = vunpack.c.h.b16 %v3500
      %v3536 = vunpack.c.l.b16 %v3501
      %v3537 = vunpack.c.h.b16 %v3501
      %v3538 = vunpack.c.l.b16 %v3502
      %v3539 = vunpack.c.h.b16 %v3502
      %v3540 = vunpack.c.l.b16 %v3503
      %v3541 = vunpack.c.h.b16 %v3503
      %v3542 = vunpack.c.l.b16 %v3504
      %v3543 = vunpack.c.h.b16 %v3504
      %v3544 = vunpack.c.l.b16 %v3505
      %v3545 = vunpack.c.h.b16 %v3505
      %v3546 = vunpack.c.l.b16 %v3506
      %v3547 = vunpack.c.h.b16 %v3506
      %v3548 = vunpack.c.l.b16 %v3507
      %v3549 = vunpack.c.h.b16 %v3507
      %v3550 = vunpack.c.l.b16 %v3508
      %v3551 = vunpack.c.h.b16 %v3508
      %v3552 = vunpack.c.l.b16 %v3509
      %v3553 = vunpack.c.h.b16 %v3509
      %v3554 = vunpack.c.l.b16 %v3510
      %v3555 = vunpack.c.h.b16 %v3510
      %v3556 = vunpack.c.l.b16 %v3511
      %v3557 = vunpack.c.h.b16 %v3511
      %v3558 = vunpack.c.l.b16 %v3512
      %v3559 = vunpack.c.h.b16 %v3512
      %v3560 = vunpack.c.l.b16 %v3513
      %v3561 = vunpack.c.h.b16 %v3513
      %v3562 = vpack.c.b16 %v3530, %v3530
      %v3563 = vpack.c.b16 %v3531, %v3531
      %v3564 = vpack.c.b16 %v3532, %v3532
      %v3565 = vpack.c.b16 %v3533, %v3533
      %v3566 = vpack.c.b16 %v3534, %v3534
      %v3567 = vpack.c.b16 %v3535, %v3535
      %v3568 = vpack.c.b16 %v3536, %v3536
      %v3569 = vpack.c.b16 %v3537, %v3537
      %v3570 = vpack.c.b16 %v3538, %v3538
      %v3571 = vpack.c.b16 %v3539, %v3539
      %v3572 = vpack.c.b16 %v3540, %v3540
      %v3573 = vpack.c.b16 %v3541, %v3541
      %v3574 = vpack.c.b16 %v3542, %v3542
      %v3575 = vpack.c.b16 %v3543, %v3543
      %v3576 = vpack.c.b16 %v3544, %v3544
      %v3577 = vpack.c.b16 %v3545, %v3545
      %v3578 = vpack.c.b16 %v3546, %v3546
      %v3579 = vpack.c.b16 %v3547, %v3547
      %v3580 = vpack.c.b16 %v3548, %v3548
      %v3581 = vpack.c.b16 %v3549, %v3549
      %v3582 = vpack.c.b16 %v3550, %v3550
      %v3583 = vpack.c.b16 %v3551, %v3551
      %v3584 = vpack.c.b16 %v3552, %v3552
      %v3585 = vpack.c.b16 %v3553, %v3553
      %v3586 = vpack.c.b16 %v3554, %v3554
      %v3587 = vpack.c.b16 %v3555, %v3555
      %v3588 = vpack.c.b16 %v3556, %v3556
      %v3589 = vpack.c.b16 %v3557, %v3557
      %v3590 = vpack.c.b16 %v3558, %v3558
      %v3591 = vpack.c.b16 %v3559, %v3559
      %v3592 = vpack.c.b16 %v3560, %v3560
      %v3593 = vpack.c.b16 %v3561, %v3561
      %vm3626 = vcmask 388096
      %3627 = vst.msk [vmem:[%s620] sm:$0xf] %vm3626, %v3562
      %3628 = vst.msk [vmem:[%s620 + $0x4] sm:$0xf] %vm3626, %v3563
      %3629 = vst.msk [vmem:[%s620 + $0x8] sm:$0xf] %vm3626, %v3564
      %3630 = vst.msk [vmem:[%s620 + $0xc] sm:$0xf] %vm3626, %v3565
      %3631 = vst.msk [vmem:[%s620 + $0x10] sm:$0xf] %vm3626, %v3566
      %3632 = vst.msk [vmem:[%s620 + $0x14] sm:$0xf] %vm3626, %v3567
      %3633 = vst.msk [vmem:[%s620 + $0x18] sm:$0xf] %vm3626, %v3568
      %3634 = vst.msk [vmem:[%s620 + $0x1c] sm:$0xf] %vm3626, %v3569
      %3635 = vst.msk [vmem:[%s620 + $0x20] sm:$0xf] %vm3626, %v3570
      %3636 = vst.msk [vmem:[%s620 + $0x24] sm:$0xf] %vm3626, %v3571
      %3637 = vst.msk [vmem:[%s620 + $0x28] sm:$0xf] %vm3626, %v3572
      %3638 = vst.msk [vmem:[%s620 + $0x2c] sm:$0xf] %vm3626, %v3573
      %3639 = vst.msk [vmem:[%s620 + $0x30] sm:$0xf] %vm3626, %v3574
      %3640 = vst.msk [vmem:[%s620 + $0x34] sm:$0xf] %vm3626, %v3575
      %3641 = vst.msk [vmem:[%s620 + $0x38] sm:$0xf] %vm3626, %v3576
      %3642 = vst.msk [vmem:[%s620 + $0x3c] sm:$0xf] %vm3626, %v3577
      %3643 = vst.msk [vmem:[%s620 + $0x40] sm:$0xf] %vm3626, %v3578
      %3644 = vst.msk [vmem:[%s620 + $0x44] sm:$0xf] %vm3626, %v3579
      %3645 = vst.msk [vmem:[%s620 + $0x48] sm:$0xf] %vm3626, %v3580
      %3646 = vst.msk [vmem:[%s620 + $0x4c] sm:$0xf] %vm3626, %v3581
      %3647 = vst.msk [vmem:[%s620 + $0x50] sm:$0xf] %vm3626, %v3582
      %3648 = vst.msk [vmem:[%s620 + $0x54] sm:$0xf] %vm3626, %v3583
      %3649 = vst.msk [vmem:[%s620 + $0x58] sm:$0xf] %vm3626, %v3584
      %3650 = vst.msk [vmem:[%s620 + $0x5c] sm:$0xf] %vm3626, %v3585
      %3651 = vst.msk [vmem:[%s620 + $0x60] sm:$0xf] %vm3626, %v3586
      %3652 = vst.msk [vmem:[%s620 + $0x64] sm:$0xf] %vm3626, %v3587
      %3653 = vst.msk [vmem:[%s620 + $0x68] sm:$0xf] %vm3626, %v3588
      %3654 = vst.msk [vmem:[%s620 + $0x6c] sm:$0xf] %vm3626, %v3589
      %3655 = vst.msk [vmem:[%s620 + $0x70] sm:$0xf] %vm3626, %v3590
      %3656 = vst.msk [vmem:[%s620 + $0x74] sm:$0xf] %vm3626, %v3591
      %3657 = vst.msk [vmem:[%s620 + $0x78] sm:$0xf] %vm3626, %v3592
      %3658 = vst.msk [vmem:[%s620 + $0x7c] sm:$0xf] %vm3626, %v3593
      %v3659 = vpack.c.bf16 %v3306, %v3305
      %v3660 = vpack.c.bf16 %v3308, %v3307
      %v3661 = vpack.c.bf16 %v3310, %v3309
      %v3662 = vpack.c.bf16 %v3312, %v3311
      %v3663 = vpack.c.bf16 %v3314, %v3313
      %v3664 = vpack.c.bf16 %v3316, %v3315
      %v3665 = vpack.c.bf16 %v3318, %v3317
      %v3666 = vpack.c.bf16 %v3320, %v3319
      %v3667 = vpack.c.bf16 %v3322, %v3321
      %v3668 = vpack.c.bf16 %v3324, %v3323
      %v3669 = vpack.c.bf16 %v3326, %v3325
      %v3670 = vpack.c.bf16 %v3328, %v3327
      %v3671 = vpack.c.bf16 %v3330, %v3329
      %v3672 = vpack.c.bf16 %v3332, %v3331
      %v3673 = vpack.c.bf16 %v3334, %v3333
      %v3674 = vpack.c.bf16 %v3336, %v3335
      %v3691 = vunpack.c.l.b16 %v3659
      %v3692 = vunpack.c.h.b16 %v3659
      %v3693 = vunpack.c.l.b16 %v3660
      %v3694 = vunpack.c.h.b16 %v3660
      %v3695 = vunpack.c.l.b16 %v3661
      %v3696 = vunpack.c.h.b16 %v3661
      %v3697 = vunpack.c.l.b16 %v3662
      %v3698 = vunpack.c.h.b16 %v3662
      %v3699 = vunpack.c.l.b16 %v3663
      %v3700 = vunpack.c.h.b16 %v3663
      %v3701 = vunpack.c.l.b16 %v3664
      %v3702 = vunpack.c.h.b16 %v3664
      %v3703 = vunpack.c.l.b16 %v3665
      %v3704 = vunpack.c.h.b16 %v3665
      %v3705 = vunpack.c.l.b16 %v3666
      %v3706 = vunpack.c.h.b16 %v3666
      %v3707 = vunpack.c.l.b16 %v3667
      %v3708 = vunpack.c.h.b16 %v3667
      %v3709 = vunpack.c.l.b16 %v3668
      %v3710 = vunpack.c.h.b16 %v3668
      %v3711 = vunpack.c.l.b16 %v3669
      %v3712 = vunpack.c.h.b16 %v3669
      %v3713 = vunpack.c.l.b16 %v3670
      %v3714 = vunpack.c.h.b16 %v3670
      %v3715 = vunpack.c.l.b16 %v3671
      %v3716 = vunpack.c.h.b16 %v3671
      %v3717 = vunpack.c.l.b16 %v3672
      %v3718 = vunpack.c.h.b16 %v3672
      %v3719 = vunpack.c.l.b16 %v3673
      %v3720 = vunpack.c.h.b16 %v3673
      %v3721 = vunpack.c.l.b16 %v3674
      %v3722 = vunpack.c.h.b16 %v3674
      %v3723 = vpack.c.b16 %v3691, %v3691
      %v3724 = vpack.c.b16 %v3692, %v3692
      %v3725 = vpack.c.b16 %v3693, %v3693
      %v3726 = vpack.c.b16 %v3694, %v3694
      %v3727 = vpack.c.b16 %v3695, %v3695
      %v3728 = vpack.c.b16 %v3696, %v3696
      %v3729 = vpack.c.b16 %v3697, %v3697
      %v3730 = vpack.c.b16 %v3698, %v3698
      %v3731 = vpack.c.b16 %v3699, %v3699
      %v3732 = vpack.c.b16 %v3700, %v3700
      %v3733 = vpack.c.b16 %v3701, %v3701
      %v3734 = vpack.c.b16 %v3702, %v3702
      %v3735 = vpack.c.b16 %v3703, %v3703
      %v3736 = vpack.c.b16 %v3704, %v3704
      %v3737 = vpack.c.b16 %v3705, %v3705
      %v3738 = vpack.c.b16 %v3706, %v3706
      %v3739 = vpack.c.b16 %v3707, %v3707
      %v3740 = vpack.c.b16 %v3708, %v3708
      %v3741 = vpack.c.b16 %v3709, %v3709
      %v3742 = vpack.c.b16 %v3710, %v3710
      %v3743 = vpack.c.b16 %v3711, %v3711
      %v3744 = vpack.c.b16 %v3712, %v3712
      %v3745 = vpack.c.b16 %v3713, %v3713
      %v3746 = vpack.c.b16 %v3714, %v3714
      %v3747 = vpack.c.b16 %v3715, %v3715
      %v3748 = vpack.c.b16 %v3716, %v3716
      %v3749 = vpack.c.b16 %v3717, %v3717
      %v3750 = vpack.c.b16 %v3718, %v3718
      %v3751 = vpack.c.b16 %v3719, %v3719
      %v3752 = vpack.c.b16 %v3720, %v3720
      %v3753 = vpack.c.b16 %v3721, %v3721
      %v3754 = vpack.c.b16 %v3722, %v3722
      %3755 = vrot.lane.b32.xlu0 %v3723, 32
      %v3756 = vpop.permute.xlu0 %3755
      %3757 = vrot.lane.b32.xlu0 %v3724, 32
      %v3758 = vpop.permute.xlu0 %3757
      %3759 = vrot.lane.b32.xlu0 %v3725, 32
      %v3760 = vpop.permute.xlu0 %3759
      %3761 = vrot.lane.b32.xlu0 %v3726, 32
      %v3762 = vpop.permute.xlu0 %3761
      %3763 = vrot.lane.b32.xlu0 %v3727, 32
      %v3764 = vpop.permute.xlu0 %3763
      %3765 = vrot.lane.b32.xlu0 %v3728, 32
      %v3766 = vpop.permute.xlu0 %3765
      %3767 = vrot.lane.b32.xlu0 %v3729, 32
      %v3768 = vpop.permute.xlu0 %3767
      %3769 = vrot.lane.b32.xlu0 %v3730, 32
      %v3770 = vpop.permute.xlu0 %3769
      %3771 = vrot.lane.b32.xlu0 %v3731, 32
      %v3772 = vpop.permute.xlu0 %3771
      %3773 = vrot.lane.b32.xlu0 %v3732, 32
      %v3774 = vpop.permute.xlu0 %3773
      %3775 = vrot.lane.b32.xlu0 %v3733, 32
      %v3776 = vpop.permute.xlu0 %3775
      %3777 = vrot.lane.b32.xlu0 %v3734, 32
      %v3778 = vpop.permute.xlu0 %3777
      %3779 = vrot.lane.b32.xlu0 %v3735, 32
      %v3780 = vpop.permute.xlu0 %3779
      %3781 = vrot.lane.b32.xlu0 %v3736, 32
      %v3782 = vpop.permute.xlu0 %3781
      %3783 = vrot.lane.b32.xlu0 %v3737, 32
      %v3784 = vpop.permute.xlu0 %3783
      %3785 = vrot.lane.b32.xlu0 %v3738, 32
      %v3786 = vpop.permute.xlu0 %3785
      %3787 = vrot.lane.b32.xlu0 %v3739, 32
      %v3788 = vpop.permute.xlu0 %3787
      %3789 = vrot.lane.b32.xlu0 %v3740, 32
      %v3790 = vpop.permute.xlu0 %3789
      %3791 = vrot.lane.b32.xlu0 %v3741, 32
      %v3792 = vpop.permute.xlu0 %3791
      %3793 = vrot.lane.b32.xlu0 %v3742, 32
      %v3794 = vpop.permute.xlu0 %3793
      %3795 = vrot.lane.b32.xlu0 %v3743, 32
      %v3796 = vpop.permute.xlu0 %3795
      %3797 = vrot.lane.b32.xlu0 %v3744, 32
      %v3798 = vpop.permute.xlu0 %3797
      %3799 = vrot.lane.b32.xlu0 %v3745, 32
      %v3800 = vpop.permute.xlu0 %3799
      %3801 = vrot.lane.b32.xlu0 %v3746, 32
      %v3802 = vpop.permute.xlu0 %3801
      %3803 = vrot.lane.b32.xlu0 %v3747, 32
      %v3804 = vpop.permute.xlu0 %3803
      %3805 = vrot.lane.b32.xlu0 %v3748, 32
      %v3806 = vpop.permute.xlu0 %3805
      %3807 = vrot.lane.b32.xlu0 %v3749, 32
      %v3808 = vpop.permute.xlu0 %3807
      %3809 = vrot.lane.b32.xlu0 %v3750, 32
      %v3810 = vpop.permute.xlu0 %3809
      %3811 = vrot.lane.b32.xlu0 %v3751, 32
      %v3812 = vpop.permute.xlu0 %3811
      %3813 = vrot.lane.b32.xlu0 %v3752, 32
      %v3814 = vpop.permute.xlu0 %3813
      %3815 = vrot.lane.b32.xlu0 %v3753, 32
      %v3816 = vpop.permute.xlu0 %3815
      %3817 = vrot.lane.b32.xlu0 %v3754, 32
      %v3818 = vpop.permute.xlu0 %3817
      %vm3851 = vcmask 437632
      %3852 = vst.msk [vmem:[%s620] sm:$0xf] %vm3851, %v3756
      %3853 = vst.msk [vmem:[%s620 + $0x4] sm:$0xf] %vm3851, %v3758
      %3854 = vst.msk [vmem:[%s620 + $0x8] sm:$0xf] %vm3851, %v3760
      %3855 = vst.msk [vmem:[%s620 + $0xc] sm:$0xf] %vm3851, %v3762
      %3856 = vst.msk [vmem:[%s620 + $0x10] sm:$0xf] %vm3851, %v3764
      %3857 = vst.msk [vmem:[%s620 + $0x14] sm:$0xf] %vm3851, %v3766
      %3858 = vst.msk [vmem:[%s620 + $0x18] sm:$0xf] %vm3851, %v3768
      %3859 = vst.msk [vmem:[%s620 + $0x1c] sm:$0xf] %vm3851, %v3770
      %3860 = vst.msk [vmem:[%s620 + $0x20] sm:$0xf] %vm3851, %v3772
      %3861 = vst.msk [vmem:[%s620 + $0x24] sm:$0xf] %vm3851, %v3774
      %3862 = vst.msk [vmem:[%s620 + $0x28] sm:$0xf] %vm3851, %v3776
      %3863 = vst.msk [vmem:[%s620 + $0x2c] sm:$0xf] %vm3851, %v3778
      %3864 = vst.msk [vmem:[%s620 + $0x30] sm:$0xf] %vm3851, %v3780
      %3865 = vst.msk [vmem:[%s620 + $0x34] sm:$0xf] %vm3851, %v3782
      %3866 = vst.msk [vmem:[%s620 + $0x38] sm:$0xf] %vm3851, %v3784
      %3867 = vst.msk [vmem:[%s620 + $0x3c] sm:$0xf] %vm3851, %v3786
      %3868 = vst.msk [vmem:[%s620 + $0x40] sm:$0xf] %vm3851, %v3788
      %3869 = vst.msk [vmem:[%s620 + $0x44] sm:$0xf] %vm3851, %v3790
      %3870 = vst.msk [vmem:[%s620 + $0x48] sm:$0xf] %vm3851, %v3792
      %3871 = vst.msk [vmem:[%s620 + $0x4c] sm:$0xf] %vm3851, %v3794
      %3872 = vst.msk [vmem:[%s620 + $0x50] sm:$0xf] %vm3851, %v3796
      %3873 = vst.msk [vmem:[%s620 + $0x54] sm:$0xf] %vm3851, %v3798
      %3874 = vst.msk [vmem:[%s620 + $0x58] sm:$0xf] %vm3851, %v3800
      %3875 = vst.msk [vmem:[%s620 + $0x5c] sm:$0xf] %vm3851, %v3802
      %3876 = vst.msk [vmem:[%s620 + $0x60] sm:$0xf] %vm3851, %v3804
      %3877 = vst.msk [vmem:[%s620 + $0x64] sm:$0xf] %vm3851, %v3806
      %3878 = vst.msk [vmem:[%s620 + $0x68] sm:$0xf] %vm3851, %v3808
      %3879 = vst.msk [vmem:[%s620 + $0x6c] sm:$0xf] %vm3851, %v3810
      %3880 = vst.msk [vmem:[%s620 + $0x70] sm:$0xf] %vm3851, %v3812
      %3881 = vst.msk [vmem:[%s620 + $0x74] sm:$0xf] %vm3851, %v3814
      %3882 = vst.msk [vmem:[%s620 + $0x78] sm:$0xf] %vm3851, %v3816
      %3883 = vst.msk [vmem:[%s620 + $0x7c] sm:$0xf] %vm3851, %v3818
      %3884 = vrot.lane.b32.xlu0 %v3562, 80
      %v3885 = vpop.permute.xlu0 %3884
      %3886 = vrot.lane.b32.xlu0 %v3563, 80
      %v3887 = vpop.permute.xlu0 %3886
      %3888 = vrot.lane.b32.xlu0 %v3564, 80
      %v3889 = vpop.permute.xlu0 %3888
      %3890 = vrot.lane.b32.xlu0 %v3565, 80
      %v3891 = vpop.permute.xlu0 %3890
      %3892 = vrot.lane.b32.xlu0 %v3566, 80
      %v3893 = vpop.permute.xlu0 %3892
      %3894 = vrot.lane.b32.xlu0 %v3567, 80
      %v3895 = vpop.permute.xlu0 %3894
      %3896 = vrot.lane.b32.xlu0 %v3568, 80
      %v3897 = vpop.permute.xlu0 %3896
      %3898 = vrot.lane.b32.xlu0 %v3569, 80
      %v3899 = vpop.permute.xlu0 %3898
      %3900 = vrot.lane.b32.xlu0 %v3570, 80
      %v3901 = vpop.permute.xlu0 %3900
      %3902 = vrot.lane.b32.xlu0 %v3571, 80
      %v3903 = vpop.permute.xlu0 %3902
      %3904 = vrot.lane.b32.xlu0 %v3572, 80
      %v3905 = vpop.permute.xlu0 %3904
      %3906 = vrot.lane.b32.xlu0 %v3573, 80
      %v3907 = vpop.permute.xlu0 %3906
      %3908 = vrot.lane.b32.xlu0 %v3574, 80
      %v3909 = vpop.permute.xlu0 %3908
      %3910 = vrot.lane.b32.xlu0 %v3575, 80
      %v3911 = vpop.permute.xlu0 %3910
      %3912 = vrot.lane.b32.xlu0 %v3576, 80
      %v3913 = vpop.permute.xlu0 %3912
      %3914 = vrot.lane.b32.xlu0 %v3577, 80
      %v3915 = vpop.permute.xlu0 %3914
      %3916 = vrot.lane.b32.xlu0 %v3578, 80
      %v3917 = vpop.permute.xlu0 %3916
      %3918 = vrot.lane.b32.xlu0 %v3579, 80
      %v3919 = vpop.permute.xlu0 %3918
      %3920 = vrot.lane.b32.xlu0 %v3580, 80
      %v3921 = vpop.permute.xlu0 %3920
      %3922 = vrot.lane.b32.xlu0 %v3581, 80
      %v3923 = vpop.permute.xlu0 %3922
      %3924 = vrot.lane.b32.xlu0 %v3582, 80
      %v3925 = vpop.permute.xlu0 %3924
      %3926 = vrot.lane.b32.xlu0 %v3583, 80
      %v3927 = vpop.permute.xlu0 %3926
      %3928 = vrot.lane.b32.xlu0 %v3584, 80
      %v3929 = vpop.permute.xlu0 %3928
      %3930 = vrot.lane.b32.xlu0 %v3585, 80
      %v3931 = vpop.permute.xlu0 %3930
      %3932 = vrot.lane.b32.xlu0 %v3586, 80
      %v3933 = vpop.permute.xlu0 %3932
      %3934 = vrot.lane.b32.xlu0 %v3587, 80
      %v3935 = vpop.permute.xlu0 %3934
      %3936 = vrot.lane.b32.xlu0 %v3588, 80
      %v3937 = vpop.permute.xlu0 %3936
      %3938 = vrot.lane.b32.xlu0 %v3589, 80
      %v3939 = vpop.permute.xlu0 %3938
      %3940 = vrot.lane.b32.xlu0 %v3590, 80
      %v3941 = vpop.permute.xlu0 %3940
      %3942 = vrot.lane.b32.xlu0 %v3591, 80
      %v3943 = vpop.permute.xlu0 %3942
      %3944 = vrot.lane.b32.xlu0 %v3592, 80
      %v3945 = vpop.permute.xlu0 %3944
      %3946 = vrot.lane.b32.xlu0 %v3593, 80
      %v3947 = vpop.permute.xlu0 %3946
      %3980 = vst.msk [vmem:[%s630] sm:$0xf] %vm3626, %v3885
      %3981 = vst.msk [vmem:[%s630 + $0x4] sm:$0xf] %vm3626, %v3887
      %3982 = vst.msk [vmem:[%s630 + $0x8] sm:$0xf] %vm3626, %v3889
      %3983 = vst.msk [vmem:[%s630 + $0xc] sm:$0xf] %vm3626, %v3891
      %3984 = vst.msk [vmem:[%s630 + $0x10] sm:$0xf] %vm3626, %v3893
      %3985 = vst.msk [vmem:[%s630 + $0x14] sm:$0xf] %vm3626, %v3895
      %3986 = vst.msk [vmem:[%s630 + $0x18] sm:$0xf] %vm3626, %v3897
      %3987 = vst.msk [vmem:[%s630 + $0x1c] sm:$0xf] %vm3626, %v3899
      %3988 = vst.msk [vmem:[%s630 + $0x20] sm:$0xf] %vm3626, %v3901
      %3989 = vst.msk [vmem:[%s630 + $0x24] sm:$0xf] %vm3626, %v3903
      %3990 = vst.msk [vmem:[%s630 + $0x28] sm:$0xf] %vm3626, %v3905
      %3991 = vst.msk [vmem:[%s630 + $0x2c] sm:$0xf] %vm3626, %v3907
      %3992 = vst.msk [vmem:[%s630 + $0x30] sm:$0xf] %vm3626, %v3909
      %3993 = vst.msk [vmem:[%s630 + $0x34] sm:$0xf] %vm3626, %v3911
      %3994 = vst.msk [vmem:[%s630 + $0x38] sm:$0xf] %vm3626, %v3913
      %3995 = vst.msk [vmem:[%s630 + $0x3c] sm:$0xf] %vm3626, %v3915
      %3996 = vst.msk [vmem:[%s630 + $0x40] sm:$0xf] %vm3626, %v3917
      %3997 = vst.msk [vmem:[%s630 + $0x44] sm:$0xf] %vm3626, %v3919
      %3998 = vst.msk [vmem:[%s630 + $0x48] sm:$0xf] %vm3626, %v3921
      %3999 = vst.msk [vmem:[%s630 + $0x4c] sm:$0xf] %vm3626, %v3923
      %4000 = vst.msk [vmem:[%s630 + $0x50] sm:$0xf] %vm3626, %v3925
      %4001 = vst.msk [vmem:[%s630 + $0x54] sm:$0xf] %vm3626, %v3927
      %4002 = vst.msk [vmem:[%s630 + $0x58] sm:$0xf] %vm3626, %v3929
      %4003 = vst.msk [vmem:[%s630 + $0x5c] sm:$0xf] %vm3626, %v3931
      %4004 = vst.msk [vmem:[%s630 + $0x60] sm:$0xf] %vm3626, %v3933
      %4005 = vst.msk [vmem:[%s630 + $0x64] sm:$0xf] %vm3626, %v3935
      %4006 = vst.msk [vmem:[%s630 + $0x68] sm:$0xf] %vm3626, %v3937
      %4007 = vst.msk [vmem:[%s630 + $0x6c] sm:$0xf] %vm3626, %v3939
      %4008 = vst.msk [vmem:[%s630 + $0x70] sm:$0xf] %vm3626, %v3941
      %4009 = vst.msk [vmem:[%s630 + $0x74] sm:$0xf] %vm3626, %v3943
      %4010 = vst.msk [vmem:[%s630 + $0x78] sm:$0xf] %vm3626, %v3945
      %4011 = vst.msk [vmem:[%s630 + $0x7c] sm:$0xf] %vm3626, %v3947
      %s4012 = smul.u32 32, %s29
      %p4013 = scmp.lt.s32.totalorder %s28, 1
      %s4014 = scalar_select %p4013, %s28, 1
      %p4015 = scmp.lt.s32.totalorder %s4012, 31
      %s4016 = scalar_select %p4015, %s4012, 31
      %s4017 = smul.addr %s4014, 32
      %s4018 = sadd.s32 %s4016, %s4017
      %s4019 = smul.addr %s4018, 4
      %s4020 = scalar_lea.vmem %s10, %s4019
      %s4021 = smul.u32 32, %s29
      %p4022 = scmp.lt.s32.totalorder %s28, 1
      %s4023 = scalar_select %p4022, %s28, 1
      %p4024 = scmp.lt.s32.totalorder %s4021, 31
      %s4025 = scalar_select %p4024, %s4021, 31
      %s4026 = smul.addr %s4023, 32
      %s4027 = sadd.s32 %s4025, %s4026
      %s4028 = smul.addr %s4027, 4
      %s4029 = scalar_lea.vmem %s11, %s4028
      %s4030 = smul.u32 32, %s29
      %p4031 = scmp.lt.s32.totalorder %s28, 1
      %s4032 = scalar_select %p4031, %s28, 1
      %p4033 = scmp.lt.s32.totalorder %s4030, 31
      %s4034 = scalar_select %p4033, %s4030, 31
      %s4035 = smul.addr %s4032, 32
      %s4036 = sadd.s32 %s4034, %s4035
      %s4037 = smul.addr %s4036, 4
      %s4038 = scalar_lea.vmem %s12, %s4037
      // Predicated region
      $region61: #{tpu_custom_call.1} parent=59 // pred_check
        %p4039 = pneg %p303
      $region62: #{tpu_custom_call.1} parent=59 // pred_check_branch
        %4041 = sbr.rel (%p4039) target = $region64
      $region63: #{tpu_custom_call.1} parent=59 // pred_region
        %s4042 = smul.u32 32, %s29
      $region64: #{tpu_custom_call.1} parent=59 // pred_fallthru
        _
      // Predicated region
      $region65: #{tpu_custom_call.1} parent=59 // pred_check
        %p4043 = pneg %p331
      $region66: #{tpu_custom_call.1} parent=59 // pred_check_branch
        %4045 = sbr.rel (%p4043) target = $region68
      $region67: #{tpu_custom_call.1} parent=59 // pred_region
        %s4046 = smul.u32 32, %s29
      $region68: #{tpu_custom_call.1} parent=59 // pred_fallthru
        _
      // Predicated region
      $region69: #{tpu_custom_call.1} parent=59 // pred_check
        %p4047 = pneg %p359
      $region70: #{tpu_custom_call.1} parent=59 // pred_check_branch
        %4049 = sbr.rel (%p4047) target = $region72
      $region71: #{tpu_custom_call.1} parent=59 // pred_region
        %s4050 = smul.u32 32, %s29
      $region72: #{tpu_custom_call.1} parent=59 // pred_fallthru
        _
    $region60: #{tpu_custom_call.1} parent=5 // pred_fallthru
      _
    %p4051 = scmp.le.s32.totalorder 2, %s19
    // Predicated region
    $region73: #{tpu_custom_call.1} parent=5 // pred_check
      %p4052 = pneg %p4051
    $region74: #{tpu_custom_call.1} parent=5 // pred_check_branch
      %4054 = sbr.rel (%p4052) target = $region76
    $region75: #{tpu_custom_call.1} parent=5 // pred_region
      %s4055 = ssub.s32 %s19, 2
      // Predicated region
      $region77: #{tpu_custom_call.1} parent=75 // pred_check
        %p4056 = pneg %p309
      $region78: #{tpu_custom_call.1} parent=75 // pred_check_branch
        %4058 = sbr.rel (%p4056) target = $region80
      $region79: #{tpu_custom_call.1} parent=75 // pred_region
        %s4059 = smul.u32 32, %s31
        %p4060 = scmp.lt.s32.totalorder %s30, 1
        %s4061 = scalar_select %p4060, %s30, 1
        %p4062 = scmp.lt.s32.totalorder %s4059, 31
        %s4063 = scalar_select %p4062, %s4059, 31
        %s4064 = smul.addr %s4061, 32
        %s4065 = sadd.s32 %s4063, %s4064
        %s4066 = smul.addr %s4065, 4
        %s4067 = scalar_lea.vmem %s10, %s4066
      $region80: #{tpu_custom_call.1} parent=75 // pred_fallthru
        _
      // Predicated region
      $region81: #{tpu_custom_call.1} parent=75 // pred_check
        %p4068 = pneg %p337
      $region82: #{tpu_custom_call.1} parent=75 // pred_check_branch
        %4070 = sbr.rel (%p4068) target = $region84
      $region83: #{tpu_custom_call.1} parent=75 // pred_region
        %s4071 = smul.u32 32, %s31
        %p4072 = scmp.lt.s32.totalorder %s30, 1
        %s4073 = scalar_select %p4072, %s30, 1
        %p4074 = scmp.lt.s32.totalorder %s4071, 31
        %s4075 = scalar_select %p4074, %s4071, 31
        %s4076 = smul.addr %s4073, 32
        %s4077 = sadd.s32 %s4075, %s4076
        %s4078 = smul.addr %s4077, 4
        %s4079 = scalar_lea.vmem %s11, %s4078
      $region84: #{tpu_custom_call.1} parent=75 // pred_fallthru
        _
      // Predicated region
      $region85: #{tpu_custom_call.1} parent=75 // pred_check
        %p4080 = pneg %p365
      $region86: #{tpu_custom_call.1} parent=75 // pred_check_branch
        %4082 = sbr.rel (%p4080) target = $region88
      $region87: #{tpu_custom_call.1} parent=75 // pred_region
        %s4083 = smul.u32 32, %s31
        %p4084 = scmp.lt.s32.totalorder %s30, 1
        %s4085 = scalar_select %p4084, %s30, 1
        %p4086 = scmp.lt.s32.totalorder %s4083, 31
        %s4087 = scalar_select %p4086, %s4083, 31
        %s4088 = smul.addr %s4085, 32
        %s4089 = sadd.s32 %s4087, %s4088
        %s4090 = smul.addr %s4089, 4
        %s4091 = scalar_lea.vmem %s12, %s4090
      $region88: #{tpu_custom_call.1} parent=75 // pred_fallthru
        _
    $region76: #{tpu_custom_call.1} parent=5 // pred_fallthru
      _
  $region6: #{tpu_custom_call.1} parent=0 // loop_footer
    %s23 = sadd.s32 1, %s19
  $region7: #{tpu_custom_call.1} parent=0 // loop_footer_branch
    %18 = sbr.rel target = $region3
  $region8: #{tpu_custom_call.1} parent=0 // loop_exit
    _

</llo_original>
